<compile_context>
chip_gen: v7x
topology: tpu7x:2x2x1
jax: 0.10.0
libtpu: 0.0.40
codegen_flags: <defaults>
</compile_context>

<pallas_src>
import jax
import jax.numpy as jnp
from jax import lax
from jax.experimental import pallas as pl
from jax.experimental.pallas import tpu as pltpu


def _make_kernel(D, H, W, Cx, Ct, Cout, eps, shifts):
    S = D * H * W

    def kernel(x_ref, t_ref, wt_ref, bt_ref, gamma_ref, beta_ref, gproj_ref,
               mask_ref, ws_ref, bc_ref, o_ref, pad_ref):
        # ---- t_conv (1x1x1 Conv3d) + residual add (f32) ---------------------
        x = x_ref[0]                                       # (S, Cx)
        t = t_ref[0]                                       # (S, Ct)
        h = (x + jnp.dot(t, wt_ref[...], preferred_element_type=jnp.float32)
             + bt_ref[...])

        # ---- GroupNorm(8, Cx): fused stats, one group-projection matmul ----
        s1 = jnp.sum(h, axis=0, keepdims=True)             # (1, Cx)
        s2 = jnp.sum(h * h, axis=0, keepdims=True)         # (1, Cx)
        stats = jnp.concatenate([s1, s2], axis=0)          # (2, Cx)
        proj = jnp.dot(stats, gproj_ref[...],
                       preferred_element_type=jnp.float32)  # (2, Cx)
        mean_c = proj[0:1, :]
        var_c = proj[1:2, :] - mean_c * mean_c              # biased var (torch)
        inv_c = lax.rsqrt(var_c + eps)
        scale = gamma_ref[...] * inv_c
        shift = beta_ref[...] - mean_c * scale
        hn = h * scale + shift

        # ---- SiLU: x * sigmoid(x) == 0.5*x*(1 + tanh(x/2)) (one EUP op) ----
        a = 0.5 * hn * (1.0 + jnp.tanh(0.5 * hn))

        # ---- stage into flat scratch; tail never needs zeroing --------------
        pad_ref[0:S, :] = a

        # ---- one wide (S, 8*Cx) operand: shifted slab per 16-lane chunk -----
        slabs = []
        for (ad, ah, aw) in shifts:
            off = ad * H * W + ah * W + aw                  # static row offset
            slabs.append(pad_ref[off:off + S, :])           # (S, Cx) f32
        wide = jnp.concatenate(slabs, axis=1)               # (S, 8*Cx) f32
        # lane-aligned boundary mask (select, so garbage tail rows are safe)
        wide = jnp.where(mask_ref[...] != 0.0, wide, 0.0)

        # ---- ConvTranspose3d as a single K=128 bf16 MXU matmul --------------
        o_ref[0] = (jnp.dot(wide.astype(jnp.bfloat16), ws_ref[...],
                            preferred_element_type=jnp.float32)
                    + bc_ref[...])

    return kernel


def spatial_up_time_block(x, t, wt, bt, gamma, beta, wc, bc, eps=1e-5):
    """x:(N,D,H,W,Cx) t:(N,D,H,W,Ct); wt:(Cx,Ct) (torch t_conv.weight squeezed),
    wc:(Cx,Cout,3,3,3) (torch ConvTranspose3d.weight). Returns (N,2D,2H,2W,Cout)."""
    N, D, H, W, Cx = x.shape
    Ct = t.shape[-1]
    Cout = bc.shape[-1]
    S = D * H * W
    ngroups = 8
    gsize = Cx // ngroups
    n_per_group = gsize * S

    shifts = [(ad, ah, aw) for ad in (0, 1) for ah in (0, 1) for aw in (0, 1)]
    pad_rows = max(ad * H * W + ah * W + aw for ad, ah, aw in shifts)
    pad_rows = ((pad_rows + 7) // 8) * 8                    # 73 -> 80

    # ---- parameter plumbing (wrapper-side glue) -----------------------------
    wt_mat = jnp.transpose(wt, (1, 0)).astype(jnp.float32)             # (Ct, Cx)

    gidx = jnp.arange(Cx) // gsize
    gproj = (gidx[:, None] == gidx[None, :]).astype(jnp.float32) / n_per_group

    # wide boundary mask: per column chunk s=(ad,ah,aw), zero rows whose shifted
    # read would cross the D/H/W boundary (flattened row r = i*H*W + j*W + k).
    r = jnp.arange(S)
    md = ((r // (H * W)) < (D - 1)).astype(jnp.float32)
    mh = (((r // W) % H) < (H - 1)).astype(jnp.float32)
    mw = ((r % W) < (W - 1)).astype(jnp.float32)
    mask_cols = []
    for ad, ah, aw in shifts:
        m = jnp.ones((S,), jnp.float32)
        if ad:
            m = m * md
        if ah:
            m = m * mh
        if aw:
            m = m * mw
        mask_cols.append(jnp.broadcast_to(m[:, None], (S, Cx)))
    mask_wide = jnp.concatenate(mask_cols, axis=1)                     # (S, 8*Cx)

    # pack ConvTranspose taps: per input shift (ad,ah,aw) one (Cx, 8*Cout)
    # matrix (columns = 8 output parities), stacked into one (8*Cx, 8*Cout).
    # per dim: output parity r=0 uses kernel tap k=1 (shift a=0 only);
    #          parity r=1 uses k=2 (a=0) and k=0 (a=1).
    def tap(rp, a):
        if rp == 0:
            return 1 if a == 0 else None
        return 2 if a == 0 else 0

    zero_blk = jnp.zeros((Cx, Cout), wc.dtype)
    packed = []
    for ad, ah, aw in shifts:
        cols = []
        for rd in (0, 1):
            for rh in (0, 1):
                for rw in (0, 1):
                    kd, kh, kw = tap(rd, ad), tap(rh, ah), tap(rw, aw)
                    cols.append(zero_blk if None in (kd, kh, kw)
                                else wc[:, :, kd, kh, kw])
        packed.append(jnp.concatenate(cols, axis=1))                   # (Cx, 8*Cout)
    wshift = jnp.concatenate(packed, axis=0).astype(jnp.bfloat16)      # (8*Cx, 8*Cout)

    bc_packed = jnp.tile(bc.astype(jnp.float32), (8,)).reshape(1, 8 * Cout)

    kernel = _make_kernel(D, H, W, Cx, Ct, Cout, eps, shifts)
    out_packed = pl.pallas_call(
        kernel,
        out_shape=jax.ShapeDtypeStruct((N, S, 8 * Cout), jnp.float32),
        grid_spec=pltpu.PrefetchScalarGridSpec(
            num_scalar_prefetch=0,
            grid=(N,),
            in_specs=[
                pl.BlockSpec((1, S, Cx), lambda n: (n, 0, 0)),
                pl.BlockSpec((1, S, Ct), lambda n: (n, 0, 0)),
                pl.BlockSpec((Ct, Cx), lambda n: (0, 0)),
                pl.BlockSpec((1, Cx), lambda n: (0, 0)),
                pl.BlockSpec((1, Cx), lambda n: (0, 0)),
                pl.BlockSpec((1, Cx), lambda n: (0, 0)),
                pl.BlockSpec((Cx, Cx), lambda n: (0, 0)),
                pl.BlockSpec((S, 8 * Cx), lambda n: (0, 0)),
                pl.BlockSpec((8 * Cx, 8 * Cout), lambda n: (0, 0)),
                pl.BlockSpec((1, 8 * Cout), lambda n: (0, 0)),
            ],
            out_specs=pl.BlockSpec((1, S, 8 * Cout), lambda n: (n, 0, 0)),
            scratch_shapes=[pltpu.VMEM((S + pad_rows, Cx), jnp.float32)],
        ),
        compiler_params=pltpu.CompilerParams(
            dimension_semantics=("parallel",)),
    )(
        x.reshape(N, S, Cx).astype(jnp.float32),
        t.reshape(N, S, Ct).astype(jnp.float32),
        wt_mat,
        bt.reshape(1, Cx).astype(jnp.float32),
        gamma.reshape(1, Cx).astype(jnp.float32),
        beta.reshape(1, Cx).astype(jnp.float32),
        gproj,
        mask_wide,
        wshift,
        bc_packed,
    )

    # parity interleave -> (N, 2D, 2H, 2W, Cout)   (layout glue only)
    o = out_packed.reshape(N, D, H, W, 2, 2, 2, Cout)
    o = jnp.transpose(o, (0, 1, 4, 2, 5, 3, 6, 7))
    return o.reshape(N, 2 * D, 2 * H, 2 * W, Cout)


def reference(x, t, wt, bt, gamma, beta, wc, bc, eps=1e-5):
    """Pure-JAX reference of the PyTorch forward (channels-last)."""
    y = jnp.einsum('ndhwc,oc->ndhwo', t, wt, precision=lax.Precision.HIGHEST) + bt
    h = x + y
    N, D, H, W, C = h.shape
    hg = h.reshape(N, D, H, W, 8, C // 8)
    mean = hg.mean(axis=(1, 2, 3, 5), keepdims=True)
    var = hg.var(axis=(1, 2, 3, 5), keepdims=True)
    hn = (hg - mean) * lax.rsqrt(var + eps)
    hn = hn.reshape(N, D, H, W, C) * gamma + beta
    a = jax.nn.silu(hn)
    # ConvTranspose3d == lhs-dilated cross-correlation with spatially flipped kernel
    rhs = jnp.transpose(jnp.flip(wc, axis=(2, 3, 4)), (2, 3, 4, 0, 1))  # (3,3,3,Cin,Cout)
    out = lax.conv_general_dilated(
        a, rhs, window_strides=(1, 1, 1),
        padding=[(1, 2), (1, 2), (1, 2)], lhs_dilation=(2, 2, 2),
        dimension_numbers=('NDHWC', 'DHWIO', 'NDHWC'),
        precision=lax.Precision.HIGHEST)
    return out + bc


if __name__ == "__main__":
    key = jax.random.PRNGKey(0)
    N, D, H, W = 2, 8, 8, 8
    Cx, Ct, Cout = 16, 8, 8      # x_in_dim=16 (GroupNorm(8) => multiple of 8), t_in_dim=8, out_dim=8
    ks = jax.random.split(key, 8)

    x = jax.random.normal(ks[0], (N, D, H, W, Cx), jnp.float32)
    t = jax.random.normal(ks[1], (N, D, H, W, Ct), jnp.float32)
    # deterministic synthetic parameters (module __init__ shapes):
    wt = 0.3 * jax.random.normal(ks[2], (Cx, Ct), jnp.float32)             # t_conv.weight[:,:,0,0,0]
    bt = 0.1 * jax.random.normal(ks[3], (Cx,), jnp.float32)                # t_conv.bias
    gamma = 1.0 + 0.1 * jax.random.normal(ks[4], (Cx,), jnp.float32)       # norm.weight
    beta = 0.1 * jax.random.normal(ks[5], (Cx,), jnp.float32)              # norm.bias
    wc = 0.2 * jax.random.normal(ks[6], (Cx, Cout, 3, 3, 3), jnp.float32)  # conv.weight (Cin,Cout,3,3,3)
    bc = 0.1 * jax.random.normal(ks[7], (Cout,), jnp.float32)              # conv.bias

    out = spatial_up_time_block(x, t, wt, bt, gamma, beta, wc, bc)
    out = jax.block_until_ready(out)

    ref = reference(x, t, wt, bt, gamma, beta, wc, bc)
    assert out.shape == (N, 2 * D, 2 * H, 2 * W, Cout), out.shape
    max_err = float(jnp.max(jnp.abs(out - ref)))
    # bf16 MXU operands in the transposed-conv matmul -> bf16-level tolerance.
    if not bool(jnp.allclose(out, ref, atol=3e-2, rtol=3e-2)):
        raise AssertionError(f"kernel/reference mismatch, max abs err = {max_err}")
    print("KERNEL_OK")
</pallas_src>

<mosaic_0001>
module attributes {stable_mosaic.version = 11 : i64} {
  func.func @kernel(%arg0: i32, %arg1: memref<1x512x16xf32, #tpu.memory_space<vmem>>, %arg2: memref<1x512x8xf32, #tpu.memory_space<vmem>>, %arg3: memref<8x16xf32, #tpu.memory_space<vmem>>, %arg4: memref<1x16xf32, #tpu.memory_space<vmem>>, %arg5: memref<1x16xf32, #tpu.memory_space<vmem>>, %arg6: memref<1x16xf32, #tpu.memory_space<vmem>>, %arg7: memref<16x16xf32, #tpu.memory_space<vmem>>, %arg8: memref<512x128xf32, #tpu.memory_space<vmem>>, %arg9: memref<128x64xbf16, #tpu.memory_space<vmem>>, %arg10: memref<1x64xf32, #tpu.memory_space<vmem>>, %arg11: memref<1x512x64xf32, #tpu.memory_space<vmem>>, %arg12: memref<592x16xf32, #tpu.memory_space<vmem>>) attributes {dimension_semantics = [#tpu.dimension_semantics<parallel>], iteration_bounds = array<i64: 2>, scalar_prefetch = 0 : i64, scratch_operands = 1 : i64, tpu.core_type = #tpu.core_type<tc>, window_params = [{transform_indices = @transform_0, window_bounds = array<i64: 1, 512, 16>}, {transform_indices = @transform_1, window_bounds = array<i64: 1, 512, 8>}, {pipeline_mode = #tpu.pipeline_mode<synchronous>, transform_indices = @transform_2, window_bounds = array<i64: 8, 16>}, {pipeline_mode = #tpu.pipeline_mode<synchronous>, transform_indices = @transform_3, window_bounds = array<i64: 1, 16>}, {pipeline_mode = #tpu.pipeline_mode<synchronous>, transform_indices = @transform_4, window_bounds = array<i64: 1, 16>}, {pipeline_mode = #tpu.pipeline_mode<synchronous>, transform_indices = @transform_5, window_bounds = array<i64: 1, 16>}, {pipeline_mode = #tpu.pipeline_mode<synchronous>, transform_indices = @transform_6, window_bounds = array<i64: 16, 16>}, {pipeline_mode = #tpu.pipeline_mode<synchronous>, transform_indices = @transform_7, window_bounds = array<i64: 512, 128>}, {pipeline_mode = #tpu.pipeline_mode<synchronous>, transform_indices = @transform_8, window_bounds = array<i64: 128, 64>}, {pipeline_mode = #tpu.pipeline_mode<synchronous>, transform_indices = @transform_9, window_bounds = array<i64: 1, 64>}, {transform_indices = @transform_10, window_bounds = array<i64: 1, 512, 64>}]} {
    %c0 = arith.constant 0 : index
    %c0_0 = arith.constant 0 : index
    %c0_1 = arith.constant 0 : index
    %0 = vector.load %arg1[%c0, %c0_0, %c0_1] : memref<1x512x16xf32, #tpu.memory_space<vmem>>, vector<1x512x16xf32>
    %1 = vector.shape_cast %0 : vector<1x512x16xf32> to vector<512x16xf32>
    %c0_2 = arith.constant 0 : index
    %c0_3 = arith.constant 0 : index
    %c0_4 = arith.constant 0 : index
    %2 = vector.load %arg2[%c0_2, %c0_3, %c0_4] : memref<1x512x8xf32, #tpu.memory_space<vmem>>, vector<1x512x8xf32>
    %3 = vector.shape_cast %2 : vector<1x512x8xf32> to vector<512x8xf32>
    %c0_5 = arith.constant 0 : index
    %c0_6 = arith.constant 0 : index
    %4 = vector.load %arg3[%c0_5, %c0_6] : memref<8x16xf32, #tpu.memory_space<vmem>>, vector<8x16xf32>
    %cst = arith.constant dense<0.000000e+00> : vector<512x16xf32>
    %5 = tpu.matmul %3, %4, %cst {dimension_numbers = #tpu.dot_dimension_numbers<[1], [0], [0], [1], [0, 0, 1, 1], [], []>} : vector<512x8xf32>, vector<8x16xf32>, vector<512x16xf32> -> vector<512x16xf32>
    %6 = arith.addf %1, %5 : vector<512x16xf32>
    %c0_7 = arith.constant 0 : index
    %c0_8 = arith.constant 0 : index
    %7 = vector.load %arg4[%c0_7, %c0_8] : memref<1x16xf32, #tpu.memory_space<vmem>>, vector<1x16xf32>
    %8 = vector.broadcast %7 : vector<1x16xf32> to vector<512x16xf32>
    %9 = arith.addf %6, %8 : vector<512x16xf32>
    %cst_9 = arith.constant dense<0.000000e+00> : vector<16xf32>
    %10 = vector.multi_reduction <add>, %9, %cst_9 [0] : vector<512x16xf32> to vector<16xf32>
    %11 = vector.shape_cast %10 : vector<16xf32> to vector<1x16xf32>
    %12 = arith.mulf %9, %9 : vector<512x16xf32>
    %cst_10 = arith.constant dense<0.000000e+00> : vector<16xf32>
    %13 = vector.multi_reduction <add>, %12, %cst_10 [0] : vector<512x16xf32> to vector<16xf32>
    %14 = vector.shape_cast %13 : vector<16xf32> to vector<1x16xf32>
    %15 = tpu.concatenate %11, %14 in 0 : vector<1x16xf32>, vector<1x16xf32> -> vector<2x16xf32>
    %c0_11 = arith.constant 0 : index
    %c0_12 = arith.constant 0 : index
    %16 = vector.load %arg7[%c0_11, %c0_12] : memref<16x16xf32, #tpu.memory_space<vmem>>, vector<16x16xf32>
    %cst_13 = arith.constant dense<0.000000e+00> : vector<2x16xf32>
    %17 = tpu.matmul %15, %16, %cst_13 {dimension_numbers = #tpu.dot_dimension_numbers<[1], [0], [0], [1], [0, 0, 1, 1], [], []>} : vector<2x16xf32>, vector<16x16xf32>, vector<2x16xf32> -> vector<2x16xf32>
    %18 = vector.extract_strided_slice %17 {offsets = [0, 0], sizes = [1, 16], strides = [1, 1]} : vector<2x16xf32> to vector<1x16xf32>
    %19 = vector.extract_strided_slice %17 {offsets = [1, 0], sizes = [1, 16], strides = [1, 1]} : vector<2x16xf32> to vector<1x16xf32>
    %20 = arith.mulf %18, %18 : vector<1x16xf32>
    %21 = arith.subf %19, %20 : vector<1x16xf32>
    %cst_14 = arith.constant 9.99999974E-6 : f32
    %22 = vector.broadcast %cst_14 : f32 to vector<1x16xf32>
    %23 = arith.addf %21, %22 : vector<1x16xf32>
    %24 = math.rsqrt %23 : vector<1x16xf32>
    %c0_15 = arith.constant 0 : index
    %c0_16 = arith.constant 0 : index
    %25 = vector.load %arg5[%c0_15, %c0_16] : memref<1x16xf32, #tpu.memory_space<vmem>>, vector<1x16xf32>
    %26 = arith.mulf %25, %24 : vector<1x16xf32>
    %c0_17 = arith.constant 0 : index
    %c0_18 = arith.constant 0 : index
    %27 = vector.load %arg6[%c0_17, %c0_18] : memref<1x16xf32, #tpu.memory_space<vmem>>, vector<1x16xf32>
    %28 = arith.mulf %18, %26 : vector<1x16xf32>
    %29 = arith.subf %27, %28 : vector<1x16xf32>
    %30 = vector.broadcast %26 : vector<1x16xf32> to vector<512x16xf32>
    %31 = arith.mulf %9, %30 : vector<512x16xf32>
    %32 = vector.broadcast %29 : vector<1x16xf32> to vector<512x16xf32>
    %33 = arith.addf %31, %32 : vector<512x16xf32>
    %cst_19 = arith.constant 5.000000e-01 : f32
    %34 = vector.broadcast %cst_19 : f32 to vector<512x16xf32>
    %35 = arith.mulf %34, %33 : vector<512x16xf32>
    %cst_20 = arith.constant 5.000000e-01 : f32
    %36 = vector.broadcast %cst_20 : f32 to vector<512x16xf32>
    %37 = arith.mulf %36, %33 : vector<512x16xf32>
    %38 = math.tanh %37 : vector<512x16xf32>
    %cst_21 = arith.constant 1.000000e+00 : f32
    %39 = vector.broadcast %cst_21 : f32 to vector<512x16xf32>
    %40 = arith.addf %39, %38 : vector<512x16xf32>
    %41 = arith.mulf %35, %40 : vector<512x16xf32>
    %c0_22 = arith.constant 0 : index
    %c0_23 = arith.constant 0 : index
    %42 = vector.load %arg12[%c0_22, %c0_23] : memref<592x16xf32, #tpu.memory_space<vmem>>, vector<512x16xf32>
    tpu.vector_store %arg12[%c0_22, %c0_23], %41 {strides = array<i32>} : memref<592x16xf32, #tpu.memory_space<vmem>>, vector<512x16xf32>,
    %c0_24 = arith.constant 0 : index
    %c0_25 = arith.constant 0 : index
    %43 = vector.load %arg12[%c0_24, %c0_25] : memref<592x16xf32, #tpu.memory_space<vmem>>, vector<512x16xf32>
    %c1 = arith.constant 1 : index
    %c0_26 = arith.constant 0 : index
    %44 = vector.load %arg12[%c1, %c0_26] : memref<592x16xf32, #tpu.memory_space<vmem>>, vector<512x16xf32>
    %c8 = arith.constant 8 : index
    %c0_27 = arith.constant 0 : index
    %45 = vector.load %arg12[%c8, %c0_27] : memref<592x16xf32, #tpu.memory_space<vmem>>, vector<512x16xf32>
    %c9 = arith.constant 9 : index
    %c0_28 = arith.constant 0 : index
    %46 = vector.load %arg12[%c9, %c0_28] : memref<592x16xf32, #tpu.memory_space<vmem>>, vector<512x16xf32>
    %c64 = arith.constant 64 : index
    %c0_29 = arith.constant 0 : index
    %47 = vector.load %arg12[%c64, %c0_29] : memref<592x16xf32, #tpu.memory_space<vmem>>, vector<512x16xf32>
    %c65 = arith.constant 65 : index
    %c0_30 = arith.constant 0 : index
    %48 = vector.load %arg12[%c65, %c0_30] : memref<592x16xf32, #tpu.memory_space<vmem>>, vector<512x16xf32>
    %c72 = arith.constant 72 : index
    %c0_31 = arith.constant 0 : index
    %49 = vector.load %arg12[%c72, %c0_31] : memref<592x16xf32, #tpu.memory_space<vmem>>, vector<512x16xf32>
    %c73 = arith.constant 73 : index
    %c0_32 = arith.constant 0 : index
    %50 = vector.load %arg12[%c73, %c0_32] : memref<592x16xf32, #tpu.memory_space<vmem>>, vector<512x16xf32>
    %51 = tpu.concatenate %43, %44, %45, %46, %47, %48, %49, %50 in 1 : vector<512x16xf32>, vector<512x16xf32>, vector<512x16xf32>, vector<512x16xf32>, vector<512x16xf32>, vector<512x16xf32>, vector<512x16xf32>, vector<512x16xf32> -> vector<512x128xf32>
    %c0_33 = arith.constant 0 : index
    %c0_34 = arith.constant 0 : index
    %52 = vector.load %arg8[%c0_33, %c0_34] : memref<512x128xf32, #tpu.memory_space<vmem>>, vector<512x128xf32>
    %cst_35 = arith.constant 0.000000e+00 : f32
    %53 = vector.broadcast %cst_35 : f32 to vector<512x128xf32>
    %54 = arith.cmpf one, %52, %53 : vector<512x128xf32>
    %cst_36 = arith.constant 0.000000e+00 : f32
    %55 = vector.broadcast %cst_36 : f32 to vector<512x128xf32>
    %56 = arith.select %54, %51, %55 : vector<512x128xi1>, vector<512x128xf32>
    %57 = arith.truncf %56 : vector<512x128xf32> to vector<512x128xbf16>
    %c0_37 = arith.constant 0 : index
    %c0_38 = arith.constant 0 : index
    %58 = vector.load %arg9[%c0_37, %c0_38] : memref<128x64xbf16, #tpu.memory_space<vmem>>, vector<128x64xbf16>
    %cst_39 = arith.constant dense<0.000000e+00> : vector<512x64xf32>
    %59 = tpu.matmul %57, %58, %cst_39 {dimension_numbers = #tpu.dot_dimension_numbers<[1], [0], [0], [1], [0, 0, 1, 1], [], []>} : vector<512x128xbf16>, vector<128x64xbf16>, vector<512x64xf32> -> vector<512x64xf32>
    %c0_40 = arith.constant 0 : index
    %c0_41 = arith.constant 0 : index
    %60 = vector.load %arg10[%c0_40, %c0_41] : memref<1x64xf32, #tpu.memory_space<vmem>>, vector<1x64xf32>
    %61 = vector.broadcast %60 : vector<1x64xf32> to vector<512x64xf32>
    %62 = arith.addf %59, %61 : vector<512x64xf32>
    %c0_42 = arith.constant 0 : index
    %c0_43 = arith.constant 0 : index
    %c0_44 = arith.constant 0 : index
    %63 = vector.load %arg11[%c0_42, %c0_43, %c0_44] : memref<1x512x64xf32, #tpu.memory_space<vmem>>, vector<1x512x64xf32>
    %64 = vector.shape_cast %63 : vector<1x512x64xf32> to vector<512x64xf32>
    %65 = vector.shape_cast %62 : vector<512x64xf32> to vector<1x512x64xf32>
    tpu.vector_store %arg11[%c0_42, %c0_43, %c0_44], %65 {strides = array<i32>} : memref<1x512x64xf32, #tpu.memory_space<vmem>>, vector<1x512x64xf32>,
    return
  }
  func.func @transform_0(%arg0: i32) -> (i32, i32, i32) {
    %c0_i32 = arith.constant 0 : i32
    %c0_i32_0 = arith.constant 0 : i32
    %c0_i32_1 = arith.constant 0 : i32
    return %arg0, %c0_i32, %c0_i32_0 : i32, i32, i32
  }
  func.func @transform_1(%arg0: i32) -> (i32, i32, i32) {
    %c0_i32 = arith.constant 0 : i32
    %c0_i32_0 = arith.constant 0 : i32
    %c0_i32_1 = arith.constant 0 : i32
    return %arg0, %c0_i32, %c0_i32_0 : i32, i32, i32
  }
  func.func @transform_2(%arg0: i32) -> (i32, i32) {
    %c0_i32 = arith.constant 0 : i32
    %c0_i32_0 = arith.constant 0 : i32
    %c0_i32_1 = arith.constant 0 : i32
    return %c0_i32, %c0_i32_0 : i32, i32
  }
  func.func @transform_3(%arg0: i32) -> (i32, i32) {
    %c0_i32 = arith.constant 0 : i32
    %c0_i32_0 = arith.constant 0 : i32
    %c0_i32_1 = arith.constant 0 : i32
    return %c0_i32, %c0_i32_0 : i32, i32
  }
  func.func @transform_4(%arg0: i32) -> (i32, i32) {
    %c0_i32 = arith.constant 0 : i32
    %c0_i32_0 = arith.constant 0 : i32
    %c0_i32_1 = arith.constant 0 : i32
    return %c0_i32, %c0_i32_0 : i32, i32
  }
  func.func @transform_5(%arg0: i32) -> (i32, i32) {
    %c0_i32 = arith.constant 0 : i32
    %c0_i32_0 = arith.constant 0 : i32
    %c0_i32_1 = arith.constant 0 : i32
    return %c0_i32, %c0_i32_0 : i32, i32
  }
  func.func @transform_6(%arg0: i32) -> (i32, i32) {
    %c0_i32 = arith.constant 0 : i32
    %c0_i32_0 = arith.constant 0 : i32
    %c0_i32_1 = arith.constant 0 : i32
    return %c0_i32, %c0_i32_0 : i32, i32
  }
  func.func @transform_7(%arg0: i32) -> (i32, i32) {
    %c0_i32 = arith.constant 0 : i32
    %c0_i32_0 = arith.constant 0 : i32
    %c0_i32_1 = arith.constant 0 : i32
    return %c0_i32, %c0_i32_0 : i32, i32
  }
  func.func @transform_8(%arg0: i32) -> (i32, i32) {
    %c0_i32 = arith.constant 0 : i32
    %c0_i32_0 = arith.constant 0 : i32
    %c0_i32_1 = arith.constant 0 : i32
    return %c0_i32, %c0_i32_0 : i32, i32
  }
  func.func @transform_9(%arg0: i32) -> (i32, i32) {
    %c0_i32 = arith.constant 0 : i32
    %c0_i32_0 = arith.constant 0 : i32
    %c0_i32_1 = arith.constant 0 : i32
    return %c0_i32, %c0_i32_0 : i32, i32
  }
  func.func @transform_10(%arg0: i32) -> (i32, i32, i32) {
    %c0_i32 = arith.constant 0 : i32
    %c0_i32_0 = arith.constant 0 : i32
    %c0_i32_1 = arith.constant 0 : i32
    return %arg0, %c0_i32, %c0_i32_0 : i32, i32, i32
  }
}

</mosaic_0001>

<llo_original>
// kernel: tpu_custom_call.1
$region0: #{tpu_custom_call.1}
  #allocation0 [shape = 'u32[]', space=smem, size = 0x4, offset = 0x4, fixed_abs, tag = 'smem constant byte address 0x4 - core index']
  #allocation1 [shape = 'u32[144,128]{1,0:T(1,128)}', space=vmem, size = 0x12000, scoped, tag = 'internal scratch']
  #allocation2 [shape = 'f32[592,16]{1,0:T(8,128)}', space=vmem, size = 0x4a000, scoped, tag = 'scratch operand']
  %s0 = inlined_call_operand.vmem [shape: f32[2,512,16], index: 0, kind: input, shape index: {}]
  %s1 = inlined_call_operand.vmem [shape: f32[2,512,8], index: 1, kind: input, shape index: {}]
  %s2 = inlined_call_operand.vmem [shape: f32[8,16], index: 2, kind: input, shape index: {}]
  %s3 = inlined_call_operand.vmem [shape: f32[1,16], index: 3, kind: input, shape index: {}]
  %s4 = inlined_call_operand.vmem [shape: f32[1,16], index: 4, kind: input, shape index: {}]
  %s5 = inlined_call_operand.vmem [shape: f32[1,16], index: 5, kind: input, shape index: {}]
  %s6 = inlined_call_operand.vmem [shape: f32[16,16], index: 6, kind: input, shape index: {}]
  %s7 = inlined_call_operand.vmem [shape: f32[512,128], index: 7, kind: input, shape index: {}]
  %s8 = inlined_call_operand.vmem [shape: bf16[128,64], index: 8, kind: input, shape index: {}]
  %s9 = inlined_call_operand.vmem [shape: f32[1,64], index: 9, kind: input, shape index: {}]
  %s10 = inlined_call_operand.vmem [shape: f32[2,512,64], index: 10, kind: output, shape index: {}]
  %s11 = sld [smem:[#allocation0]]
  $region73: #{tpu_custom_call.1} parent=0
    _
  %s13 = ssub.s32 1, %s11
  %s14 = scalar_select 0, %s13, %s11
  loop: start=0, step=1, limit=4
  $region2: #{tpu_custom_call.1} parent=0 // loop_pre_header
    _
  $region3: #{tpu_custom_call.1} parent=0 // loop_header
    %s16 = sphi 0, %s20
    %p17 = scmp.ge.s32.totalorder %s16, 4
    %s26 = sphi 0, %s28
    %s29 = sphi 0, %s26
    %s30 = sphi 0, %s29
    %s46 = sphi 0, %s30
    %s52 = sphi 0, %s54
    %s55 = sphi 0, %s52
    %s56 = sphi 0, %s55
    %s72 = sphi 0, %s56
    %s76 = sphi 0, %s76
    %s78 = sphi 0, %s76
    %s79 = sphi 0, %s78
    %s93 = sphi 0, %s79
    %s97 = sphi 0, %s97
    %s99 = sphi 0, %s97
    %s100 = sphi 0, %s99
    %s114 = sphi 0, %s100
    %s118 = sphi 0, %s118
    %s120 = sphi 0, %s118
    %s121 = sphi 0, %s120
    %s135 = sphi 0, %s121
    %s139 = sphi 0, %s139
    %s141 = sphi 0, %s139
    %s142 = sphi 0, %s141
    %s156 = sphi 0, %s142
    %s160 = sphi 0, %s160
    %s162 = sphi 0, %s160
    %s163 = sphi 0, %s162
    %s177 = sphi 0, %s163
    %s181 = sphi 0, %s181
    %s183 = sphi 0, %s181
    %s184 = sphi 0, %s183
    %s198 = sphi 0, %s184
    %s202 = sphi 0, %s202
    %s204 = sphi 0, %s202
    %s205 = sphi 0, %s204
    %s219 = sphi 0, %s205
    %s223 = sphi 0, %s223
    %s225 = sphi 0, %s223
    %s226 = sphi 0, %s225
    %s240 = sphi 0, %s226
    %s246 = sphi 0, %s248
    %s249 = sphi 0, %s246
    %s250 = sphi 0, %s249
    %s266 = sphi 0, %s250
  $region4: #{tpu_custom_call.1} parent=0 // loop_header_branch
    %19 = sbr.rel (%p17) target = $region8
  $region5: #{tpu_custom_call.1} parent=0 // loop_body
    %s21 = ssub.s32 %s16, 1
    %s22 = ssub.s32 %s16, 2
    %s23 = sadd.s32 %s16, 1
    %s24 = ssub.s32 %s16, %s23
    %p25 = scmp.eq.s32.totalorder %s24, 0
    %s27 = sadd.s32 %s26, 1
    %s28 = scalar_select %p25, %s26, %s27
    %p31 = pneg %p25
    %p32 = scmp.eq.s32.totalorder %s16, 1
    %p33 = por %p31, %p32
    %p34 = scmp.ne.s32.totalorder %s26, %s29
    %p35 = scmp.eq.s32.totalorder %s16, 0
    %p36 = por %p34, %p35
    %p37 = scmp.ne.s32.totalorder %s26, %s29
    %p38 = scmp.eq.s32.totalorder %s21, 1
    %p39 = por %p37, %p38
    %p40 = scmp.ne.s32.totalorder %s29, %s30
    %p41 = scmp.eq.s32.totalorder %s21, 0
    %p42 = por %p40, %p41
    %p43 = scmp.ne.s32.totalorder %s29, %s30
    %p44 = scmp.eq.s32.totalorder %s22, 1
    %p45 = por %p43, %p44
    %p47 = scmp.ne.s32.totalorder %s30, %s46
    %p48 = scmp.eq.s32.totalorder %s22, 0
    %p49 = por %p47, %p48
    %s50 = ssub.s32 %s16, %s23
    %p51 = scmp.eq.s32.totalorder %s50, 0
    %s53 = sadd.s32 %s52, 1
    %s54 = scalar_select %p51, %s52, %s53
    %p57 = pneg %p51
    %p58 = scmp.eq.s32.totalorder %s16, 1
    %p59 = por %p57, %p58
    %p60 = scmp.ne.s32.totalorder %s52, %s55
    %p61 = scmp.eq.s32.totalorder %s16, 0
    %p62 = por %p60, %p61
    %p63 = scmp.ne.s32.totalorder %s52, %s55
    %p64 = scmp.eq.s32.totalorder %s21, 1
    %p65 = por %p63, %p64
    %p66 = scmp.ne.s32.totalorder %s55, %s56
    %p67 = scmp.eq.s32.totalorder %s21, 0
    %p68 = por %p66, %p67
    %p69 = scmp.ne.s32.totalorder %s55, %s56
    %p70 = scmp.eq.s32.totalorder %s22, 1
    %p71 = por %p69, %p70
    %p73 = scmp.ne.s32.totalorder %s56, %s72
    %p74 = scmp.eq.s32.totalorder %s22, 0
    %p75 = por %p73, %p74
    %s77 = sadd.s32 %s76, 1
    %p80 = scmp.eq.s32.totalorder %s16, 1
    %p81 = scmp.ne.s32.totalorder %s76, %s78
    %p82 = scmp.eq.s32.totalorder %s16, 0
    %p83 = por %p81, %p82
    %p84 = scmp.ne.s32.totalorder %s76, %s78
    %p85 = scmp.eq.s32.totalorder %s21, 1
    %p86 = por %p84, %p85
    %p87 = scmp.ne.s32.totalorder %s78, %s79
    %p88 = scmp.eq.s32.totalorder %s21, 0
    %p89 = por %p87, %p88
    %p90 = scmp.ne.s32.totalorder %s78, %s79
    %p91 = scmp.eq.s32.totalorder %s22, 1
    %p92 = por %p90, %p91
    %p94 = scmp.ne.s32.totalorder %s79, %s93
    %p95 = scmp.eq.s32.totalorder %s22, 0
    %p96 = por %p94, %p95
    %s98 = sadd.s32 %s97, 1
    %p101 = scmp.eq.s32.totalorder %s16, 1
    %p102 = scmp.ne.s32.totalorder %s97, %s99
    %p103 = scmp.eq.s32.totalorder %s16, 0
    %p104 = por %p102, %p103
    %p105 = scmp.ne.s32.totalorder %s97, %s99
    %p106 = scmp.eq.s32.totalorder %s21, 1
    %p107 = por %p105, %p106
    %p108 = scmp.ne.s32.totalorder %s99, %s100
    %p109 = scmp.eq.s32.totalorder %s21, 0
    %p110 = por %p108, %p109
    %p111 = scmp.ne.s32.totalorder %s99, %s100
    %p112 = scmp.eq.s32.totalorder %s22, 1
    %p113 = por %p111, %p112
    %p115 = scmp.ne.s32.totalorder %s100, %s114
    %p116 = scmp.eq.s32.totalorder %s22, 0
    %p117 = por %p115, %p116
    %s119 = sadd.s32 %s118, 1
    %p122 = scmp.eq.s32.totalorder %s16, 1
    %p123 = scmp.ne.s32.totalorder %s118, %s120
    %p124 = scmp.eq.s32.totalorder %s16, 0
    %p125 = por %p123, %p124
    %p126 = scmp.ne.s32.totalorder %s118, %s120
    %p127 = scmp.eq.s32.totalorder %s21, 1
    %p128 = por %p126, %p127
    %p129 = scmp.ne.s32.totalorder %s120, %s121
    %p130 = scmp.eq.s32.totalorder %s21, 0
    %p131 = por %p129, %p130
    %p132 = scmp.ne.s32.totalorder %s120, %s121
    %p133 = scmp.eq.s32.totalorder %s22, 1
    %p134 = por %p132, %p133
    %p136 = scmp.ne.s32.totalorder %s121, %s135
    %p137 = scmp.eq.s32.totalorder %s22, 0
    %p138 = por %p136, %p137
    %s140 = sadd.s32 %s139, 1
    %p143 = scmp.eq.s32.totalorder %s16, 1
    %p144 = scmp.ne.s32.totalorder %s139, %s141
    %p145 = scmp.eq.s32.totalorder %s16, 0
    %p146 = por %p144, %p145
    %p147 = scmp.ne.s32.totalorder %s139, %s141
    %p148 = scmp.eq.s32.totalorder %s21, 1
    %p149 = por %p147, %p148
    %p150 = scmp.ne.s32.totalorder %s141, %s142
    %p151 = scmp.eq.s32.totalorder %s21, 0
    %p152 = por %p150, %p151
    %p153 = scmp.ne.s32.totalorder %s141, %s142
    %p154 = scmp.eq.s32.totalorder %s22, 1
    %p155 = por %p153, %p154
    %p157 = scmp.ne.s32.totalorder %s142, %s156
    %p158 = scmp.eq.s32.totalorder %s22, 0
    %p159 = por %p157, %p158
    %s161 = sadd.s32 %s160, 1
    %p164 = scmp.eq.s32.totalorder %s16, 1
    %p165 = scmp.ne.s32.totalorder %s160, %s162
    %p166 = scmp.eq.s32.totalorder %s16, 0
    %p167 = por %p165, %p166
    %p168 = scmp.ne.s32.totalorder %s160, %s162
    %p169 = scmp.eq.s32.totalorder %s21, 1
    %p170 = por %p168, %p169
    %p171 = scmp.ne.s32.totalorder %s162, %s163
    %p172 = scmp.eq.s32.totalorder %s21, 0
    %p173 = por %p171, %p172
    %p174 = scmp.ne.s32.totalorder %s162, %s163
    %p175 = scmp.eq.s32.totalorder %s22, 1
    %p176 = por %p174, %p175
    %p178 = scmp.ne.s32.totalorder %s163, %s177
    %p179 = scmp.eq.s32.totalorder %s22, 0
    %p180 = por %p178, %p179
    %s182 = sadd.s32 %s181, 1
    %p185 = scmp.eq.s32.totalorder %s16, 1
    %p186 = scmp.ne.s32.totalorder %s181, %s183
    %p187 = scmp.eq.s32.totalorder %s16, 0
    %p188 = por %p186, %p187
    %p189 = scmp.ne.s32.totalorder %s181, %s183
    %p190 = scmp.eq.s32.totalorder %s21, 1
    %p191 = por %p189, %p190
    %p192 = scmp.ne.s32.totalorder %s183, %s184
    %p193 = scmp.eq.s32.totalorder %s21, 0
    %p194 = por %p192, %p193
    %p195 = scmp.ne.s32.totalorder %s183, %s184
    %p196 = scmp.eq.s32.totalorder %s22, 1
    %p197 = por %p195, %p196
    %p199 = scmp.ne.s32.totalorder %s184, %s198
    %p200 = scmp.eq.s32.totalorder %s22, 0
    %p201 = por %p199, %p200
    %s203 = sadd.s32 %s202, 1
    %p206 = scmp.eq.s32.totalorder %s16, 1
    %p207 = scmp.ne.s32.totalorder %s202, %s204
    %p208 = scmp.eq.s32.totalorder %s16, 0
    %p209 = por %p207, %p208
    %p210 = scmp.ne.s32.totalorder %s202, %s204
    %p211 = scmp.eq.s32.totalorder %s21, 1
    %p212 = por %p210, %p211
    %p213 = scmp.ne.s32.totalorder %s204, %s205
    %p214 = scmp.eq.s32.totalorder %s21, 0
    %p215 = por %p213, %p214
    %p216 = scmp.ne.s32.totalorder %s204, %s205
    %p217 = scmp.eq.s32.totalorder %s22, 1
    %p218 = por %p216, %p217
    %p220 = scmp.ne.s32.totalorder %s205, %s219
    %p221 = scmp.eq.s32.totalorder %s22, 0
    %p222 = por %p220, %p221
    %s224 = sadd.s32 %s223, 1
    %p227 = scmp.eq.s32.totalorder %s16, 1
    %p228 = scmp.ne.s32.totalorder %s223, %s225
    %p229 = scmp.eq.s32.totalorder %s16, 0
    %p230 = por %p228, %p229
    %p231 = scmp.ne.s32.totalorder %s223, %s225
    %p232 = scmp.eq.s32.totalorder %s21, 1
    %p233 = por %p231, %p232
    %p234 = scmp.ne.s32.totalorder %s225, %s226
    %p235 = scmp.eq.s32.totalorder %s21, 0
    %p236 = por %p234, %p235
    %p237 = scmp.ne.s32.totalorder %s225, %s226
    %p238 = scmp.eq.s32.totalorder %s22, 1
    %p239 = por %p237, %p238
    %p241 = scmp.ne.s32.totalorder %s226, %s240
    %p242 = scmp.eq.s32.totalorder %s22, 0
    %p243 = por %p241, %p242
    %s244 = ssub.s32 %s16, %s23
    %p245 = scmp.eq.s32.totalorder %s244, 0
    %s247 = sadd.s32 %s246, 1
    %s248 = scalar_select %p245, %s246, %s247
    %p251 = pneg %p245
    %p252 = scmp.eq.s32.totalorder %s16, 1
    %p253 = por %p251, %p252
    %p254 = scmp.ne.s32.totalorder %s246, %s249
    %p255 = scmp.eq.s32.totalorder %s16, 0
    %p256 = por %p254, %p255
    %p257 = scmp.ne.s32.totalorder %s246, %s249
    %p258 = scmp.eq.s32.totalorder %s21, 1
    %p259 = por %p257, %p258
    %p260 = scmp.ne.s32.totalorder %s249, %s250
    %p261 = scmp.eq.s32.totalorder %s21, 0
    %p262 = por %p260, %p261
    %p263 = scmp.ne.s32.totalorder %s249, %s250
    %p264 = scmp.eq.s32.totalorder %s22, 1
    %p265 = por %p263, %p264
    %p267 = scmp.ne.s32.totalorder %s250, %s266
    %p268 = scmp.eq.s32.totalorder %s22, 0
    %p269 = por %p267, %p268
    %p270 = scmp.le.s32.totalorder 1, %s16
    %p271 = scmp.lt.s32.totalorder %s16, 3
    %p272 = pnand %p270, %p271
    %p273 = pneg %p272
    // Predicated region
    $region9: #{tpu_custom_call.1} parent=5 // pred_check
      _
    $region10: #{tpu_custom_call.1} parent=5 // pred_check_branch
      %275 = sbr.rel (%p272) target = $region12
    $region11: #{tpu_custom_call.1} parent=5 // pred_region
      %s276 = ssub.s32 %s16, 1
      // Predicated region
      $region13: #{tpu_custom_call.1} parent=11 // pred_check
        %p277 = pneg %p89
      $region14: #{tpu_custom_call.1} parent=11 // pred_check_branch
        %279 = sbr.rel (%p277) target = $region16
      $region15: #{tpu_custom_call.1} parent=11 // pred_region
        _
      $region16: #{tpu_custom_call.1} parent=11 // pred_fallthru
        _
      // Predicated region
      $region17: #{tpu_custom_call.1} parent=11 // pred_check
        %p280 = pneg %p110
      $region18: #{tpu_custom_call.1} parent=11 // pred_check_branch
        %282 = sbr.rel (%p280) target = $region20
      $region19: #{tpu_custom_call.1} parent=11 // pred_region
        _
      $region20: #{tpu_custom_call.1} parent=11 // pred_fallthru
        _
      // Predicated region
      $region21: #{tpu_custom_call.1} parent=11 // pred_check
        %p283 = pneg %p131
      $region22: #{tpu_custom_call.1} parent=11 // pred_check_branch
        %285 = sbr.rel (%p283) target = $region24
      $region23: #{tpu_custom_call.1} parent=11 // pred_region
        _
      $region24: #{tpu_custom_call.1} parent=11 // pred_fallthru
        _
      // Predicated region
      $region25: #{tpu_custom_call.1} parent=11 // pred_check
        %p286 = pneg %p152
      $region26: #{tpu_custom_call.1} parent=11 // pred_check_branch
        %288 = sbr.rel (%p286) target = $region28
      $region27: #{tpu_custom_call.1} parent=11 // pred_region
        _
      $region28: #{tpu_custom_call.1} parent=11 // pred_fallthru
        _
      // Predicated region
      $region29: #{tpu_custom_call.1} parent=11 // pred_check
        %p289 = pneg %p173
      $region30: #{tpu_custom_call.1} parent=11 // pred_check_branch
        %291 = sbr.rel (%p289) target = $region32
      $region31: #{tpu_custom_call.1} parent=11 // pred_region
        _
      $region32: #{tpu_custom_call.1} parent=11 // pred_fallthru
        _
      // Predicated region
      $region33: #{tpu_custom_call.1} parent=11 // pred_check
        %p292 = pneg %p194
      $region34: #{tpu_custom_call.1} parent=11 // pred_check_branch
        %294 = sbr.rel (%p292) target = $region36
      $region35: #{tpu_custom_call.1} parent=11 // pred_region
        _
      $region36: #{tpu_custom_call.1} parent=11 // pred_fallthru
        _
      // Predicated region
      $region37: #{tpu_custom_call.1} parent=11 // pred_check
        %p295 = pneg %p215
      $region38: #{tpu_custom_call.1} parent=11 // pred_check_branch
        %297 = sbr.rel (%p295) target = $region40
      $region39: #{tpu_custom_call.1} parent=11 // pred_region
        _
      $region40: #{tpu_custom_call.1} parent=11 // pred_fallthru
        _
      // Predicated region
      $region41: #{tpu_custom_call.1} parent=11 // pred_check
        %p298 = pneg %p236
      $region42: #{tpu_custom_call.1} parent=11 // pred_check_branch
        %300 = sbr.rel (%p298) target = $region44
      $region43: #{tpu_custom_call.1} parent=11 // pred_region
        _
      $region44: #{tpu_custom_call.1} parent=11 // pred_fallthru
        _
    $region12: #{tpu_custom_call.1} parent=5 // pred_fallthru
      _
    %p301 = scmp.lt.s32.totalorder %s16, 2
    // Predicated region
    $region45: #{tpu_custom_call.1} parent=5 // pred_check
      %p302 = pneg %p301
    $region46: #{tpu_custom_call.1} parent=5 // pred_check_branch
      %304 = sbr.rel (%p302) target = $region48
    $region47: #{tpu_custom_call.1} parent=5 // pred_region
      // Predicated region
      $region49: #{tpu_custom_call.1} parent=47 // pred_check
        %p305 = pneg %p36
      $region50: #{tpu_custom_call.1} parent=47 // pred_check_branch
        %307 = sbr.rel (%p305) target = $region52
      $region51: #{tpu_custom_call.1} parent=47 // pred_region
        %p308 = scmp.lt.s32.totalorder %s16, 1
        %s309 = scalar_select %p308, %s16, 1
        %s310 = smul.addr %s309, 64
        %s311 = smul.addr %s310, 8
        %s312 = scalar_lea.vmem %s0, %s311
      $region52: #{tpu_custom_call.1} parent=47 // pred_fallthru
        _
      // Predicated region
      $region53: #{tpu_custom_call.1} parent=47 // pred_check
        %p313 = pneg %p62
      $region54: #{tpu_custom_call.1} parent=47 // pred_check_branch
        %315 = sbr.rel (%p313) target = $region56
      $region55: #{tpu_custom_call.1} parent=47 // pred_region
        %p316 = scmp.lt.s32.totalorder %s16, 1
        %s317 = scalar_select %p316, %s16, 1
        %s318 = smul.addr %s317, 64
        %s319 = smul.addr %s318, 8
        %s320 = scalar_lea.vmem %s1, %s319
      $region56: #{tpu_custom_call.1} parent=47 // pred_fallthru
        _
    $region48: #{tpu_custom_call.1} parent=5 // pred_fallthru
      _
    %p321 = scmp.le.s32.totalorder 1, %s16
    %p322 = scmp.lt.s32.totalorder %s16, 3
    %p323 = pnand %p321, %p322
    %p324 = pneg %p323
    // Predicated region
    $region57: #{tpu_custom_call.1} parent=5 // pred_check
      _
    $region58: #{tpu_custom_call.1} parent=5 // pred_check_branch
      %326 = sbr.rel (%p323) target = $region60
    $region59: #{tpu_custom_call.1} parent=5 // pred_region
      %s327 = ssub.s32 %s16, 1
      %p328 = scmp.lt.s32.totalorder %s21, 1
      %s329 = scalar_select %p328, %s21, 1
      %s330 = smul.addr %s329, 64
      %s331 = smul.addr %s330, 8
      %s332 = scalar_lea.vmem %s0, %s331
      %p333 = pneg %p42
      %p334 = pneg %p39
      %p335 = scmp.lt.s32.totalorder %s21, 1
      %s336 = scalar_select %p335, %s21, 1
      %s337 = smul.addr %s336, 64
      %s338 = smul.addr %s337, 8
      %s339 = scalar_lea.vmem %s1, %s338
      %p340 = pneg %p68
      %p341 = pneg %p65
      %p342 = pneg %p89
      %p343 = pneg %p86
      %p344 = pneg %p110
      %p345 = pneg %p107
      %p346 = pneg %p131
      %p347 = pneg %p128
      %p348 = pneg %p152
      %p349 = pneg %p149
      %p350 = pneg %p173
      %p351 = pneg %p170
      %p352 = pneg %p194
      %p353 = pneg %p191
      %p354 = pneg %p215
      %p355 = pneg %p212
      %p356 = pneg %p236
      %p357 = pneg %p233
      %p358 = pneg %p262
      %p359 = pneg %p259
      %p360 = scmp.lt.s32.totalorder %s21, 1
      %s361 = scalar_select %p360, %s21, 1
      %s362 = smul.addr %s361, 64
      %s363 = smul.addr %s362, 8
      %s364 = scalar_lea.vmem %s10, %s363
      %p365 = scmp.lt.s32.totalorder %s21, 1
      %s366 = scalar_select %p365, %s21, 1
      %s367 = smul.addr %s366, 64
      %s368 = smul.addr %s367, 8
      %s369 = scalar_lea.vmem %s0, %s368
      %p370 = scmp.lt.s32.totalorder %s21, 1
      %s371 = scalar_select %p370, %s21, 1
      %s372 = smul.addr %s371, 64
      %s373 = smul.addr %s372, 8
      %s374 = scalar_lea.vmem %s1, %s373
      %p375 = scmp.lt.s32.totalorder %s21, 1
      %s376 = scalar_select %p375, %s21, 1
      %s377 = smul.addr %s376, 64
      %s378 = smul.addr %s377, 8
      %s379 = scalar_lea.vmem %s10, %s378
      %v381 = vld [vmem:[%s369] sm:$0xff]
      %v382 = vld [vmem:[%s369 + $0x8] sm:$0xff]
      %v383 = vld [vmem:[%s369 + $0x10] sm:$0xff]
      %v384 = vld [vmem:[%s369 + $0x18] sm:$0xff]
      %v385 = vld [vmem:[%s369 + $0x20] sm:$0xff]
      %v386 = vld [vmem:[%s369 + $0x28] sm:$0xff]
      %v387 = vld [vmem:[%s369 + $0x30] sm:$0xff]
      %v388 = vld [vmem:[%s369 + $0x38] sm:$0xff]
      %v389 = vld [vmem:[%s369 + $0x40] sm:$0xff]
      %v390 = vld [vmem:[%s369 + $0x48] sm:$0xff]
      %v391 = vld [vmem:[%s369 + $0x50] sm:$0xff]
      %v392 = vld [vmem:[%s369 + $0x58] sm:$0xff]
      %v393 = vld [vmem:[%s369 + $0x60] sm:$0xff]
      %v394 = vld [vmem:[%s369 + $0x68] sm:$0xff]
      %v395 = vld [vmem:[%s369 + $0x70] sm:$0xff]
      %v396 = vld [vmem:[%s369 + $0x78] sm:$0xff]
      %v397 = vld [vmem:[%s369 + $0x80] sm:$0xff]
      %v398 = vld [vmem:[%s369 + $0x88] sm:$0xff]
      %v399 = vld [vmem:[%s369 + $0x90] sm:$0xff]
      %v400 = vld [vmem:[%s369 + $0x98] sm:$0xff]
      %v401 = vld [vmem:[%s369 + $0xa0] sm:$0xff]
      %v402 = vld [vmem:[%s369 + $0xa8] sm:$0xff]
      %v403 = vld [vmem:[%s369 + $0xb0] sm:$0xff]
      %v404 = vld [vmem:[%s369 + $0xb8] sm:$0xff]
      %v405 = vld [vmem:[%s369 + $0xc0] sm:$0xff]
      %v406 = vld [vmem:[%s369 + $0xc8] sm:$0xff]
      %v407 = vld [vmem:[%s369 + $0xd0] sm:$0xff]
      %v408 = vld [vmem:[%s369 + $0xd8] sm:$0xff]
      %v409 = vld [vmem:[%s369 + $0xe0] sm:$0xff]
      %v410 = vld [vmem:[%s369 + $0xe8] sm:$0xff]
      %v411 = vld [vmem:[%s369 + $0xf0] sm:$0xff]
      %v412 = vld [vmem:[%s369 + $0xf8] sm:$0xff]
      %v413 = vld [vmem:[%s369 + $0x100] sm:$0xff]
      %v414 = vld [vmem:[%s369 + $0x108] sm:$0xff]
      %v415 = vld [vmem:[%s369 + $0x110] sm:$0xff]
      %v416 = vld [vmem:[%s369 + $0x118] sm:$0xff]
      %v417 = vld [vmem:[%s369 + $0x120] sm:$0xff]
      %v418 = vld [vmem:[%s369 + $0x128] sm:$0xff]
      %v419 = vld [vmem:[%s369 + $0x130] sm:$0xff]
      %v420 = vld [vmem:[%s369 + $0x138] sm:$0xff]
      %v421 = vld [vmem:[%s369 + $0x140] sm:$0xff]
      %v422 = vld [vmem:[%s369 + $0x148] sm:$0xff]
      %v423 = vld [vmem:[%s369 + $0x150] sm:$0xff]
      %v424 = vld [vmem:[%s369 + $0x158] sm:$0xff]
      %v425 = vld [vmem:[%s369 + $0x160] sm:$0xff]
      %v426 = vld [vmem:[%s369 + $0x168] sm:$0xff]
      %v427 = vld [vmem:[%s369 + $0x170] sm:$0xff]
      %v428 = vld [vmem:[%s369 + $0x178] sm:$0xff]
      %v429 = vld [vmem:[%s369 + $0x180] sm:$0xff]
      %v430 = vld [vmem:[%s369 + $0x188] sm:$0xff]
      %v431 = vld [vmem:[%s369 + $0x190] sm:$0xff]
      %v432 = vld [vmem:[%s369 + $0x198] sm:$0xff]
      %v433 = vld [vmem:[%s369 + $0x1a0] sm:$0xff]
      %v434 = vld [vmem:[%s369 + $0x1a8] sm:$0xff]
      %v435 = vld [vmem:[%s369 + $0x1b0] sm:$0xff]
      %v436 = vld [vmem:[%s369 + $0x1b8] sm:$0xff]
      %v437 = vld [vmem:[%s369 + $0x1c0] sm:$0xff]
      %v438 = vld [vmem:[%s369 + $0x1c8] sm:$0xff]
      %v439 = vld [vmem:[%s369 + $0x1d0] sm:$0xff]
      %v440 = vld [vmem:[%s369 + $0x1d8] sm:$0xff]
      %v441 = vld [vmem:[%s369 + $0x1e0] sm:$0xff]
      %v442 = vld [vmem:[%s369 + $0x1e8] sm:$0xff]
      %v443 = vld [vmem:[%s369 + $0x1f0] sm:$0xff]
      %v444 = vld [vmem:[%s369 + $0x1f8] sm:$0xff]
      %v445 = vld [vmem:[%s374] sm:$0xff]
      %v446 = vld [vmem:[%s374 + $0x8] sm:$0xff]
      %v447 = vld [vmem:[%s374 + $0x10] sm:$0xff]
      %v448 = vld [vmem:[%s374 + $0x18] sm:$0xff]
      %v449 = vld [vmem:[%s374 + $0x20] sm:$0xff]
      %v450 = vld [vmem:[%s374 + $0x28] sm:$0xff]
      %v451 = vld [vmem:[%s374 + $0x30] sm:$0xff]
      %v452 = vld [vmem:[%s374 + $0x38] sm:$0xff]
      %v453 = vld [vmem:[%s374 + $0x40] sm:$0xff]
      %v454 = vld [vmem:[%s374 + $0x48] sm:$0xff]
      %v455 = vld [vmem:[%s374 + $0x50] sm:$0xff]
      %v456 = vld [vmem:[%s374 + $0x58] sm:$0xff]
      %v457 = vld [vmem:[%s374 + $0x60] sm:$0xff]
      %v458 = vld [vmem:[%s374 + $0x68] sm:$0xff]
      %v459 = vld [vmem:[%s374 + $0x70] sm:$0xff]
      %v460 = vld [vmem:[%s374 + $0x78] sm:$0xff]
      %v461 = vld [vmem:[%s374 + $0x80] sm:$0xff]
      %v462 = vld [vmem:[%s374 + $0x88] sm:$0xff]
      %v463 = vld [vmem:[%s374 + $0x90] sm:$0xff]
      %v464 = vld [vmem:[%s374 + $0x98] sm:$0xff]
      %v465 = vld [vmem:[%s374 + $0xa0] sm:$0xff]
      %v466 = vld [vmem:[%s374 + $0xa8] sm:$0xff]
      %v467 = vld [vmem:[%s374 + $0xb0] sm:$0xff]
      %v468 = vld [vmem:[%s374 + $0xb8] sm:$0xff]
      %v469 = vld [vmem:[%s374 + $0xc0] sm:$0xff]
      %v470 = vld [vmem:[%s374 + $0xc8] sm:$0xff]
      %v471 = vld [vmem:[%s374 + $0xd0] sm:$0xff]
      %v472 = vld [vmem:[%s374 + $0xd8] sm:$0xff]
      %v473 = vld [vmem:[%s374 + $0xe0] sm:$0xff]
      %v474 = vld [vmem:[%s374 + $0xe8] sm:$0xff]
      %v475 = vld [vmem:[%s374 + $0xf0] sm:$0xff]
      %v476 = vld [vmem:[%s374 + $0xf8] sm:$0xff]
      %v477 = vld [vmem:[%s374 + $0x100] sm:$0xff]
      %v478 = vld [vmem:[%s374 + $0x108] sm:$0xff]
      %v479 = vld [vmem:[%s374 + $0x110] sm:$0xff]
      %v480 = vld [vmem:[%s374 + $0x118] sm:$0xff]
      %v481 = vld [vmem:[%s374 + $0x120] sm:$0xff]
      %v482 = vld [vmem:[%s374 + $0x128] sm:$0xff]
      %v483 = vld [vmem:[%s374 + $0x130] sm:$0xff]
      %v484 = vld [vmem:[%s374 + $0x138] sm:$0xff]
      %v485 = vld [vmem:[%s374 + $0x140] sm:$0xff]
      %v486 = vld [vmem:[%s374 + $0x148] sm:$0xff]
      %v487 = vld [vmem:[%s374 + $0x150] sm:$0xff]
      %v488 = vld [vmem:[%s374 + $0x158] sm:$0xff]
      %v489 = vld [vmem:[%s374 + $0x160] sm:$0xff]
      %v490 = vld [vmem:[%s374 + $0x168] sm:$0xff]
      %v491 = vld [vmem:[%s374 + $0x170] sm:$0xff]
      %v492 = vld [vmem:[%s374 + $0x178] sm:$0xff]
      %v493 = vld [vmem:[%s374 + $0x180] sm:$0xff]
      %v494 = vld [vmem:[%s374 + $0x188] sm:$0xff]
      %v495 = vld [vmem:[%s374 + $0x190] sm:$0xff]
      %v496 = vld [vmem:[%s374 + $0x198] sm:$0xff]
      %v497 = vld [vmem:[%s374 + $0x1a0] sm:$0xff]
      %v498 = vld [vmem:[%s374 + $0x1a8] sm:$0xff]
      %v499 = vld [vmem:[%s374 + $0x1b0] sm:$0xff]
      %v500 = vld [vmem:[%s374 + $0x1b8] sm:$0xff]
      %v501 = vld [vmem:[%s374 + $0x1c0] sm:$0xff]
      %v502 = vld [vmem:[%s374 + $0x1c8] sm:$0xff]
      %v503 = vld [vmem:[%s374 + $0x1d0] sm:$0xff]
      %v504 = vld [vmem:[%s374 + $0x1d8] sm:$0xff]
      %v505 = vld [vmem:[%s374 + $0x1e0] sm:$0xff]
      %v506 = vld [vmem:[%s374 + $0x1e8] sm:$0xff]
      %v507 = vld [vmem:[%s374 + $0x1f0] sm:$0xff]
      %v508 = vld [vmem:[%s374 + $0x1f8] sm:$0xff]
      %v509 = vld [vmem:[%s2] sm:$0xff]
      %vm510 = vcmask 64512
      %v512 = vsel %vm510, %v445, 0
      %v515 = vsel %vm510, %v446, 0
      %v518 = vsel %vm510, %v447, 0
      %v521 = vsel %vm510, %v448, 0
      %v524 = vsel %vm510, %v449, 0
      %v527 = vsel %vm510, %v450, 0
      %v530 = vsel %vm510, %v451, 0
      %v533 = vsel %vm510, %v452, 0
      %v536 = vsel %vm510, %v453, 0
      %v539 = vsel %vm510, %v454, 0
      %v542 = vsel %vm510, %v455, 0
      %v545 = vsel %vm510, %v456, 0
      %v548 = vsel %vm510, %v457, 0
      %v551 = vsel %vm510, %v458, 0
      %v554 = vsel %vm510, %v459, 0
      %v557 = vsel %vm510, %v460, 0
      %v560 = vsel %vm510, %v461, 0
      %v563 = vsel %vm510, %v462, 0
      %v566 = vsel %vm510, %v463, 0
      %v569 = vsel %vm510, %v464, 0
      %v572 = vsel %vm510, %v465, 0
      %v575 = vsel %vm510, %v466, 0
      %v578 = vsel %vm510, %v467, 0
      %v581 = vsel %vm510, %v468, 0
      %v584 = vsel %vm510, %v469, 0
      %v587 = vsel %vm510, %v470, 0
      %v590 = vsel %vm510, %v471, 0
      %v593 = vsel %vm510, %v472, 0
      %v596 = vsel %vm510, %v473, 0
      %v599 = vsel %vm510, %v474, 0
      %v602 = vsel %vm510, %v475, 0
      %v605 = vsel %vm510, %v476, 0
      %v608 = vsel %vm510, %v477, 0
      %v611 = vsel %vm510, %v478, 0
      %v614 = vsel %vm510, %v479, 0
      %v617 = vsel %vm510, %v480, 0
      %v620 = vsel %vm510, %v481, 0
      %v623 = vsel %vm510, %v482, 0
      %v626 = vsel %vm510, %v483, 0
      %v629 = vsel %vm510, %v484, 0
      %v632 = vsel %vm510, %v485, 0
      %v635 = vsel %vm510, %v486, 0
      %v638 = vsel %vm510, %v487, 0
      %v641 = vsel %vm510, %v488, 0
      %v644 = vsel %vm510, %v489, 0
      %v647 = vsel %vm510, %v490, 0
      %v650 = vsel %vm510, %v491, 0
      %v653 = vsel %vm510, %v492, 0
      %v656 = vsel %vm510, %v493, 0
      %v659 = vsel %vm510, %v494, 0
      %v662 = vsel %vm510, %v495, 0
      %v665 = vsel %vm510, %v496, 0
      %v668 = vsel %vm510, %v497, 0
      %v671 = vsel %vm510, %v498, 0
      %v674 = vsel %vm510, %v499, 0
      %v677 = vsel %vm510, %v500, 0
      %v680 = vsel %vm510, %v501, 0
      %v683 = vsel %vm510, %v502, 0
      %v686 = vsel %vm510, %v503, 0
      %v689 = vsel %vm510, %v504, 0
      %v692 = vsel %vm510, %v505, 0
      %v695 = vsel %vm510, %v506, 0
      %v698 = vsel %vm510, %v507, 0
      %v701 = vsel %vm510, %v508, 0
      %703 = vmatprep.subr.mxu0 0.0
      %704 = vmatpush1.msra.mxu0 %v509
      %705 = vmatprep.subr.mxu0 0.0
      %706 = vmatpush1.msra.mxu0 0.0
      %707 = vmatprep.subr.mxu0 0.0
      %708 = vmatpush1.msra.mxu0 0.0
      %709 = vmatprep.subr.mxu0 0.0
      %710 = vmatpush1.msra.mxu0 0.0
      %711 = vmatprep.subr.mxu0 0.0
      %712 = vmatpush1.msra.mxu0 0.0
      %713 = vmatprep.subr.mxu0 0.0
      %714 = vmatpush1.msra.mxu0 0.0
      %715 = vmatprep.subr.mxu0 0.0
      %716 = vmatpush1.msra.mxu0 0.0
      %717 = vmatprep.subr.mxu0 0.0
      %718 = vmatpush1.msra.mxu0 0.0
      %719 = vmatprep.subr.mxu0 0.0
      %720 = vmatpush1.msra.mxu0 0.0
      %721 = vmatprep.subr.mxu0 0.0
      %722 = vmatpush1.msra.mxu0 0.0
      %723 = vmatprep.subr.mxu0 0.0
      %724 = vmatpush1.msra.mxu0 0.0
      %725 = vmatprep.subr.mxu0 0.0
      %726 = vmatpush1.msra.mxu0 0.0
      %727 = vmatprep.subr.mxu0 0.0
      %728 = vmatpush1.msra.mxu0 0.0
      %729 = vmatprep.subr.mxu0 0.0
      %730 = vmatpush1.msra.mxu0 0.0
      %731 = vmatprep.subr.mxu0 0.0
      %732 = vmatpush1.msra.mxu0 0.0
      %733 = vmatprep.subr.mxu0 0.0
      %734 = vmatpush1.msra.mxu0 0.0
      %735 = vmatprep.subr.mxu0 0.0
      %736 = vmatpush1.msra.mxu0 0.0
      %737 = vmatprep.subr.mxu0 0.0
      %738 = vmatpush1.msra.mxu0 0.0
      %739 = vmatprep.subr.mxu0 0.0
      %740 = vmatpush1.msra.mxu0 0.0
      %741 = vmatprep.subr.mxu0 0.0
      %742 = vmatpush1.msra.mxu0 0.0
      %743 = vmatprep.subr.mxu0 0.0
      %744 = vmatpush1.msra.mxu0 0.0
      %745 = vmatprep.subr.mxu0 0.0
      %746 = vmatpush1.msra.mxu0 0.0
      %747 = vmatprep.subr.mxu0 0.0
      %748 = vmatpush1.msra.mxu0 0.0
      %749 = vmatprep.subr.mxu0 0.0
      %750 = vmatpush1.msra.mxu0 0.0
      %751 = vmatprep.subr.mxu0 0.0
      %752 = vmatpush1.msra.mxu0 0.0
      %753 = vmatprep.subr.mxu0 0.0
      %754 = vmatpush1.msra.mxu0 0.0
      %755 = vmatprep.subr.mxu0 0.0
      %756 = vmatpush1.msra.mxu0 0.0
      %757 = vmatprep.subr.mxu0 0.0
      %758 = vmatpush1.msra.mxu0 0.0
      %759 = vmatprep.subr.mxu0 0.0
      %760 = vmatpush1.msra.mxu0 0.0
      %761 = vmatprep.subr.mxu0 0.0
      %762 = vmatpush1.msra.mxu0 0.0
      %763 = vmatprep.subr.mxu0 0.0
      %764 = vmatpush1.msra.mxu0 0.0
      %765 = vmatprep.subr.mxu0 0.0
      %766 = vmatpush1.msra.mxu0 0.0
      %767 = vmatprep.mubr.f32.mxu0 0.0
      %768 = vmatmul.mubr.f32.gmra.mrb[0].mxu0 %v512
      %v769 = vpop.f32.mrb[0].mxu0
      %v770 = vadd.f32 0.0, %v769
      %v771 = vpop.f32.mrb[0].mxu0
      %772 = vmatprep.mubr.f32.mxu0 0.0
      %773 = vmatmul.mubr.f32.gmra.mrb[0].mxu0 %v515
      %v774 = vpop.f32.mrb[0].mxu0
      %v775 = vadd.f32 0.0, %v774
      %v776 = vpop.f32.mrb[0].mxu0
      %777 = vmatprep.mubr.f32.mxu0 0.0
      %778 = vmatmul.mubr.f32.gmra.mrb[0].mxu0 %v518
      %v779 = vpop.f32.mrb[0].mxu0
      %v780 = vadd.f32 0.0, %v779
      %v781 = vpop.f32.mrb[0].mxu0
      %782 = vmatprep.mubr.f32.mxu0 0.0
      %783 = vmatmul.mubr.f32.gmra.mrb[0].mxu0 %v521
      %v784 = vpop.f32.mrb[0].mxu0
      %v785 = vadd.f32 0.0, %v784
      %v786 = vpop.f32.mrb[0].mxu0
      %787 = vmatprep.mubr.f32.mxu0 0.0
      %788 = vmatmul.mubr.f32.gmra.mrb[0].mxu0 %v524
      %v789 = vpop.f32.mrb[0].mxu0
      %v790 = vadd.f32 0.0, %v789
      %v791 = vpop.f32.mrb[0].mxu0
      %792 = vmatprep.mubr.f32.mxu0 0.0
      %793 = vmatmul.mubr.f32.gmra.mrb[0].mxu0 %v527
      %v794 = vpop.f32.mrb[0].mxu0
      %v795 = vadd.f32 0.0, %v794
      %v796 = vpop.f32.mrb[0].mxu0
      %797 = vmatprep.mubr.f32.mxu0 0.0
      %798 = vmatmul.mubr.f32.gmra.mrb[0].mxu0 %v530
      %v799 = vpop.f32.mrb[0].mxu0
      %v800 = vadd.f32 0.0, %v799
      %v801 = vpop.f32.mrb[0].mxu0
      %802 = vmatprep.mubr.f32.mxu0 0.0
      %803 = vmatmul.mubr.f32.gmra.mrb[0].mxu0 %v533
      %v804 = vpop.f32.mrb[0].mxu0
      %v805 = vadd.f32 0.0, %v804
      %v806 = vpop.f32.mrb[0].mxu0
      %807 = vmatprep.mubr.f32.mxu0 0.0
      %808 = vmatmul.mubr.f32.gmra.mrb[0].mxu0 %v536
      %v809 = vpop.f32.mrb[0].mxu0
      %v810 = vadd.f32 0.0, %v809
      %v811 = vpop.f32.mrb[0].mxu0
      %812 = vmatprep.mubr.f32.mxu0 0.0
      %813 = vmatmul.mubr.f32.gmra.mrb[0].mxu0 %v539
      %v814 = vpop.f32.mrb[0].mxu0
      %v815 = vadd.f32 0.0, %v814
      %v816 = vpop.f32.mrb[0].mxu0
      %817 = vmatprep.mubr.f32.mxu0 0.0
      %818 = vmatmul.mubr.f32.gmra.mrb[0].mxu0 %v542
      %v819 = vpop.f32.mrb[0].mxu0
      %v820 = vadd.f32 0.0, %v819
      %v821 = vpop.f32.mrb[0].mxu0
      %822 = vmatprep.mubr.f32.mxu0 0.0
      %823 = vmatmul.mubr.f32.gmra.mrb[0].mxu0 %v545
      %v824 = vpop.f32.mrb[0].mxu0
      %v825 = vadd.f32 0.0, %v824
      %v826 = vpop.f32.mrb[0].mxu0
      %827 = vmatprep.mubr.f32.mxu0 0.0
      %828 = vmatmul.mubr.f32.gmra.mrb[0].mxu0 %v548
      %v829 = vpop.f32.mrb[0].mxu0
      %v830 = vadd.f32 0.0, %v829
      %v831 = vpop.f32.mrb[0].mxu0
      %832 = vmatprep.mubr.f32.mxu0 0.0
      %833 = vmatmul.mubr.f32.gmra.mrb[0].mxu0 %v551
      %v834 = vpop.f32.mrb[0].mxu0
      %v835 = vadd.f32 0.0, %v834
      %v836 = vpop.f32.mrb[0].mxu0
      %837 = vmatprep.mubr.f32.mxu0 0.0
      %838 = vmatmul.mubr.f32.gmra.mrb[0].mxu0 %v554
      %v839 = vpop.f32.mrb[0].mxu0
      %v840 = vadd.f32 0.0, %v839
      %v841 = vpop.f32.mrb[0].mxu0
      %842 = vmatprep.mubr.f32.mxu0 0.0
      %843 = vmatmul.mubr.f32.gmra.mrb[0].mxu0 %v557
      %v844 = vpop.f32.mrb[0].mxu0
      %v845 = vadd.f32 0.0, %v844
      %v846 = vpop.f32.mrb[0].mxu0
      %847 = vmatprep.mubr.f32.mxu0 0.0
      %848 = vmatmul.mubr.f32.gmra.mrb[0].mxu0 %v560
      %v849 = vpop.f32.mrb[0].mxu0
      %v850 = vadd.f32 0.0, %v849
      %v851 = vpop.f32.mrb[0].mxu0
      %852 = vmatprep.mubr.f32.mxu0 0.0
      %853 = vmatmul.mubr.f32.gmra.mrb[0].mxu0 %v563
      %v854 = vpop.f32.mrb[0].mxu0
      %v855 = vadd.f32 0.0, %v854
      %v856 = vpop.f32.mrb[0].mxu0
      %857 = vmatprep.mubr.f32.mxu0 0.0
      %858 = vmatmul.mubr.f32.gmra.mrb[0].mxu0 %v566
      %v859 = vpop.f32.mrb[0].mxu0
      %v860 = vadd.f32 0.0, %v859
      %v861 = vpop.f32.mrb[0].mxu0
      %862 = vmatprep.mubr.f32.mxu0 0.0
      %863 = vmatmul.mubr.f32.gmra.mrb[0].mxu0 %v569
      %v864 = vpop.f32.mrb[0].mxu0
      %v865 = vadd.f32 0.0, %v864
      %v866 = vpop.f32.mrb[0].mxu0
      %867 = vmatprep.mubr.f32.mxu0 0.0
      %868 = vmatmul.mubr.f32.gmra.mrb[0].mxu0 %v572
      %v869 = vpop.f32.mrb[0].mxu0
      %v870 = vadd.f32 0.0, %v869
      %v871 = vpop.f32.mrb[0].mxu0
      %872 = vmatprep.mubr.f32.mxu0 0.0
      %873 = vmatmul.mubr.f32.gmra.mrb[0].mxu0 %v575
      %v874 = vpop.f32.mrb[0].mxu0
      %v875 = vadd.f32 0.0, %v874
      %v876 = vpop.f32.mrb[0].mxu0
      %877 = vmatprep.mubr.f32.mxu0 0.0
      %878 = vmatmul.mubr.f32.gmra.mrb[0].mxu0 %v578
      %v879 = vpop.f32.mrb[0].mxu0
      %v880 = vadd.f32 0.0, %v879
      %v881 = vpop.f32.mrb[0].mxu0
      %882 = vmatprep.mubr.f32.mxu0 0.0
      %883 = vmatmul.mubr.f32.gmra.mrb[0].mxu0 %v581
      %v884 = vpop.f32.mrb[0].mxu0
      %v885 = vadd.f32 0.0, %v884
      %v886 = vpop.f32.mrb[0].mxu0
      %887 = vmatprep.mubr.f32.mxu0 0.0
      %888 = vmatmul.mubr.f32.gmra.mrb[0].mxu0 %v584
      %v889 = vpop.f32.mrb[0].mxu0
      %v890 = vadd.f32 0.0, %v889
      %v891 = vpop.f32.mrb[0].mxu0
      %892 = vmatprep.mubr.f32.mxu0 0.0
      %893 = vmatmul.mubr.f32.gmra.mrb[0].mxu0 %v587
      %v894 = vpop.f32.mrb[0].mxu0
      %v895 = vadd.f32 0.0, %v894
      %v896 = vpop.f32.mrb[0].mxu0
      %897 = vmatprep.mubr.f32.mxu0 0.0
      %898 = vmatmul.mubr.f32.gmra.mrb[0].mxu0 %v590
      %v899 = vpop.f32.mrb[0].mxu0
      %v900 = vadd.f32 0.0, %v899
      %v901 = vpop.f32.mrb[0].mxu0
      %902 = vmatprep.mubr.f32.mxu0 0.0
      %903 = vmatmul.mubr.f32.gmra.mrb[0].mxu0 %v593
      %v904 = vpop.f32.mrb[0].mxu0
      %v905 = vadd.f32 0.0, %v904
      %v906 = vpop.f32.mrb[0].mxu0
      %907 = vmatprep.mubr.f32.mxu0 0.0
      %908 = vmatmul.mubr.f32.gmra.mrb[0].mxu0 %v596
      %v909 = vpop.f32.mrb[0].mxu0
      %v910 = vadd.f32 0.0, %v909
      %v911 = vpop.f32.mrb[0].mxu0
      %912 = vmatprep.mubr.f32.mxu0 0.0
      %913 = vmatmul.mubr.f32.gmra.mrb[0].mxu0 %v599
      %v914 = vpop.f32.mrb[0].mxu0
      %v915 = vadd.f32 0.0, %v914
      %v916 = vpop.f32.mrb[0].mxu0
      %917 = vmatprep.mubr.f32.mxu0 0.0
      %918 = vmatmul.mubr.f32.gmra.mrb[0].mxu0 %v602
      %v919 = vpop.f32.mrb[0].mxu0
      %v920 = vadd.f32 0.0, %v919
      %v921 = vpop.f32.mrb[0].mxu0
      %922 = vmatprep.mubr.f32.mxu0 0.0
      %923 = vmatmul.mubr.f32.gmra.mrb[0].mxu0 %v605
      %v924 = vpop.f32.mrb[0].mxu0
      %v925 = vadd.f32 0.0, %v924
      %v926 = vpop.f32.mrb[0].mxu0
      %927 = vmatprep.mubr.f32.mxu0 0.0
      %928 = vmatmul.mubr.f32.gmra.mrb[0].mxu0 %v608
      %v929 = vpop.f32.mrb[0].mxu0
      %v930 = vadd.f32 0.0, %v929
      %v931 = vpop.f32.mrb[0].mxu0
      %932 = vmatprep.mubr.f32.mxu0 0.0
      %933 = vmatmul.mubr.f32.gmra.mrb[0].mxu0 %v611
      %v934 = vpop.f32.mrb[0].mxu0
      %v935 = vadd.f32 0.0, %v934
      %v936 = vpop.f32.mrb[0].mxu0
      %937 = vmatprep.mubr.f32.mxu0 0.0
      %938 = vmatmul.mubr.f32.gmra.mrb[0].mxu0 %v614
      %v939 = vpop.f32.mrb[0].mxu0
      %v940 = vadd.f32 0.0, %v939
      %v941 = vpop.f32.mrb[0].mxu0
      %942 = vmatprep.mubr.f32.mxu0 0.0
      %943 = vmatmul.mubr.f32.gmra.mrb[0].mxu0 %v617
      %v944 = vpop.f32.mrb[0].mxu0
      %v945 = vadd.f32 0.0, %v944
      %v946 = vpop.f32.mrb[0].mxu0
      %947 = vmatprep.mubr.f32.mxu0 0.0
      %948 = vmatmul.mubr.f32.gmra.mrb[0].mxu0 %v620
      %v949 = vpop.f32.mrb[0].mxu0
      %v950 = vadd.f32 0.0, %v949
      %v951 = vpop.f32.mrb[0].mxu0
      %952 = vmatprep.mubr.f32.mxu0 0.0
      %953 = vmatmul.mubr.f32.gmra.mrb[0].mxu0 %v623
      %v954 = vpop.f32.mrb[0].mxu0
      %v955 = vadd.f32 0.0, %v954
      %v956 = vpop.f32.mrb[0].mxu0
      %957 = vmatprep.mubr.f32.mxu0 0.0
      %958 = vmatmul.mubr.f32.gmra.mrb[0].mxu0 %v626
      %v959 = vpop.f32.mrb[0].mxu0
      %v960 = vadd.f32 0.0, %v959
      %v961 = vpop.f32.mrb[0].mxu0
      %962 = vmatprep.mubr.f32.mxu0 0.0
      %963 = vmatmul.mubr.f32.gmra.mrb[0].mxu0 %v629
      %v964 = vpop.f32.mrb[0].mxu0
      %v965 = vadd.f32 0.0, %v964
      %v966 = vpop.f32.mrb[0].mxu0
      %967 = vmatprep.mubr.f32.mxu0 0.0
      %968 = vmatmul.mubr.f32.gmra.mrb[0].mxu0 %v632
      %v969 = vpop.f32.mrb[0].mxu0
      %v970 = vadd.f32 0.0, %v969
      %v971 = vpop.f32.mrb[0].mxu0
      %972 = vmatprep.mubr.f32.mxu0 0.0
      %973 = vmatmul.mubr.f32.gmra.mrb[0].mxu0 %v635
      %v974 = vpop.f32.mrb[0].mxu0
      %v975 = vadd.f32 0.0, %v974
      %v976 = vpop.f32.mrb[0].mxu0
      %977 = vmatprep.mubr.f32.mxu0 0.0
      %978 = vmatmul.mubr.f32.gmra.mrb[0].mxu0 %v638
      %v979 = vpop.f32.mrb[0].mxu0
      %v980 = vadd.f32 0.0, %v979
      %v981 = vpop.f32.mrb[0].mxu0
      %982 = vmatprep.mubr.f32.mxu0 0.0
      %983 = vmatmul.mubr.f32.gmra.mrb[0].mxu0 %v641
      %v984 = vpop.f32.mrb[0].mxu0
      %v985 = vadd.f32 0.0, %v984
      %v986 = vpop.f32.mrb[0].mxu0
      %987 = vmatprep.mubr.f32.mxu0 0.0
      %988 = vmatmul.mubr.f32.gmra.mrb[0].mxu0 %v644
      %v989 = vpop.f32.mrb[0].mxu0
      %v990 = vadd.f32 0.0, %v989
      %v991 = vpop.f32.mrb[0].mxu0
      %992 = vmatprep.mubr.f32.mxu0 0.0
      %993 = vmatmul.mubr.f32.gmra.mrb[0].mxu0 %v647
      %v994 = vpop.f32.mrb[0].mxu0
      %v995 = vadd.f32 0.0, %v994
      %v996 = vpop.f32.mrb[0].mxu0
      %997 = vmatprep.mubr.f32.mxu0 0.0
      %998 = vmatmul.mubr.f32.gmra.mrb[0].mxu0 %v650
      %v999 = vpop.f32.mrb[0].mxu0
      %v1000 = vadd.f32 0.0, %v999
      %v1001 = vpop.f32.mrb[0].mxu0
      %1002 = vmatprep.mubr.f32.mxu0 0.0
      %1003 = vmatmul.mubr.f32.gmra.mrb[0].mxu0 %v653
      %v1004 = vpop.f32.mrb[0].mxu0
      %v1005 = vadd.f32 0.0, %v1004
      %v1006 = vpop.f32.mrb[0].mxu0
      %1007 = vmatprep.mubr.f32.mxu0 0.0
      %1008 = vmatmul.mubr.f32.gmra.mrb[0].mxu0 %v656
      %v1009 = vpop.f32.mrb[0].mxu0
      %v1010 = vadd.f32 0.0, %v1009
      %v1011 = vpop.f32.mrb[0].mxu0
      %1012 = vmatprep.mubr.f32.mxu0 0.0
      %1013 = vmatmul.mubr.f32.gmra.mrb[0].mxu0 %v659
      %v1014 = vpop.f32.mrb[0].mxu0
      %v1015 = vadd.f32 0.0, %v1014
      %v1016 = vpop.f32.mrb[0].mxu0
      %1017 = vmatprep.mubr.f32.mxu0 0.0
      %1018 = vmatmul.mubr.f32.gmra.mrb[0].mxu0 %v662
      %v1019 = vpop.f32.mrb[0].mxu0
      %v1020 = vadd.f32 0.0, %v1019
      %v1021 = vpop.f32.mrb[0].mxu0
      %1022 = vmatprep.mubr.f32.mxu0 0.0
      %1023 = vmatmul.mubr.f32.gmra.mrb[0].mxu0 %v665
      %v1024 = vpop.f32.mrb[0].mxu0
      %v1025 = vadd.f32 0.0, %v1024
      %v1026 = vpop.f32.mrb[0].mxu0
      %1027 = vmatprep.mubr.f32.mxu0 0.0
      %1028 = vmatmul.mubr.f32.gmra.mrb[0].mxu0 %v668
      %v1029 = vpop.f32.mrb[0].mxu0
      %v1030 = vadd.f32 0.0, %v1029
      %v1031 = vpop.f32.mrb[0].mxu0
      %1032 = vmatprep.mubr.f32.mxu0 0.0
      %1033 = vmatmul.mubr.f32.gmra.mrb[0].mxu0 %v671
      %v1034 = vpop.f32.mrb[0].mxu0
      %v1035 = vadd.f32 0.0, %v1034
      %v1036 = vpop.f32.mrb[0].mxu0
      %1037 = vmatprep.mubr.f32.mxu0 0.0
      %1038 = vmatmul.mubr.f32.gmra.mrb[0].mxu0 %v674
      %v1039 = vpop.f32.mrb[0].mxu0
      %v1040 = vadd.f32 0.0, %v1039
      %v1041 = vpop.f32.mrb[0].mxu0
      %1042 = vmatprep.mubr.f32.mxu0 0.0
      %1043 = vmatmul.mubr.f32.gmra.mrb[0].mxu0 %v677
      %v1044 = vpop.f32.mrb[0].mxu0
      %v1045 = vadd.f32 0.0, %v1044
      %v1046 = vpop.f32.mrb[0].mxu0
      %1047 = vmatprep.mubr.f32.mxu0 0.0
      %1048 = vmatmul.mubr.f32.gmra.mrb[0].mxu0 %v680
      %v1049 = vpop.f32.mrb[0].mxu0
      %v1050 = vadd.f32 0.0, %v1049
      %v1051 = vpop.f32.mrb[0].mxu0
      %1052 = vmatprep.mubr.f32.mxu0 0.0
      %1053 = vmatmul.mubr.f32.gmra.mrb[0].mxu0 %v683
      %v1054 = vpop.f32.mrb[0].mxu0
      %v1055 = vadd.f32 0.0, %v1054
      %v1056 = vpop.f32.mrb[0].mxu0
      %1057 = vmatprep.mubr.f32.mxu0 0.0
      %1058 = vmatmul.mubr.f32.gmra.mrb[0].mxu0 %v686
      %v1059 = vpop.f32.mrb[0].mxu0
      %v1060 = vadd.f32 0.0, %v1059
      %v1061 = vpop.f32.mrb[0].mxu0
      %1062 = vmatprep.mubr.f32.mxu0 0.0
      %1063 = vmatmul.mubr.f32.gmra.mrb[0].mxu0 %v689
      %v1064 = vpop.f32.mrb[0].mxu0
      %v1065 = vadd.f32 0.0, %v1064
      %v1066 = vpop.f32.mrb[0].mxu0
      %1067 = vmatprep.mubr.f32.mxu0 0.0
      %1068 = vmatmul.mubr.f32.gmra.mrb[0].mxu0 %v692
      %v1069 = vpop.f32.mrb[0].mxu0
      %v1070 = vadd.f32 0.0, %v1069
      %v1071 = vpop.f32.mrb[0].mxu0
      %1072 = vmatprep.mubr.f32.mxu0 0.0
      %1073 = vmatmul.mubr.f32.gmra.mrb[0].mxu0 %v695
      %v1074 = vpop.f32.mrb[0].mxu0
      %v1075 = vadd.f32 0.0, %v1074
      %v1076 = vpop.f32.mrb[0].mxu0
      %1077 = vmatprep.mubr.f32.mxu0 0.0
      %1078 = vmatmul.mubr.f32.gmra.mrb[0].mxu0 %v698
      %v1079 = vpop.f32.mrb[0].mxu0
      %v1080 = vadd.f32 0.0, %v1079
      %v1081 = vpop.f32.mrb[0].mxu0
      %1082 = vmatprep.mubr.f32.mxu0 0.0
      %1083 = vmatmul.mubr.f32.gmra.mrb[0].mxu0 %v701
      %v1084 = vpop.f32.mrb[0].mxu0
      %v1085 = vadd.f32 0.0, %v1084
      %v1086 = vpop.f32.mrb[0].mxu0
      %1087 = vdwg.mxu0
      %v1088 = vadd.f32 %v381, %v770
      %v1089 = vadd.f32 %v382, %v775
      %v1090 = vadd.f32 %v383, %v780
      %v1091 = vadd.f32 %v384, %v785
      %v1092 = vadd.f32 %v385, %v790
      %v1093 = vadd.f32 %v386, %v795
      %v1094 = vadd.f32 %v387, %v800
      %v1095 = vadd.f32 %v388, %v805
      %v1096 = vadd.f32 %v389, %v810
      %v1097 = vadd.f32 %v390, %v815
      %v1098 = vadd.f32 %v391, %v820
      %v1099 = vadd.f32 %v392, %v825
      %v1100 = vadd.f32 %v393, %v830
      %v1101 = vadd.f32 %v394, %v835
      %v1102 = vadd.f32 %v395, %v840
      %v1103 = vadd.f32 %v396, %v845
      %v1104 = vadd.f32 %v397, %v850
      %v1105 = vadd.f32 %v398, %v855
      %v1106 = vadd.f32 %v399, %v860
      %v1107 = vadd.f32 %v400, %v865
      %v1108 = vadd.f32 %v401, %v870
      %v1109 = vadd.f32 %v402, %v875
      %v1110 = vadd.f32 %v403, %v880
      %v1111 = vadd.f32 %v404, %v885
      %v1112 = vadd.f32 %v405, %v890
      %v1113 = vadd.f32 %v406, %v895
      %v1114 = vadd.f32 %v407, %v900
      %v1115 = vadd.f32 %v408, %v905
      %v1116 = vadd.f32 %v409, %v910
      %v1117 = vadd.f32 %v410, %v915
      %v1118 = vadd.f32 %v411, %v920
      %v1119 = vadd.f32 %v412, %v925
      %v1120 = vadd.f32 %v413, %v930
      %v1121 = vadd.f32 %v414, %v935
      %v1122 = vadd.f32 %v415, %v940
      %v1123 = vadd.f32 %v416, %v945
      %v1124 = vadd.f32 %v417, %v950
      %v1125 = vadd.f32 %v418, %v955
      %v1126 = vadd.f32 %v419, %v960
      %v1127 = vadd.f32 %v420, %v965
      %v1128 = vadd.f32 %v421, %v970
      %v1129 = vadd.f32 %v422, %v975
      %v1130 = vadd.f32 %v423, %v980
      %v1131 = vadd.f32 %v424, %v985
      %v1132 = vadd.f32 %v425, %v990
      %v1133 = vadd.f32 %v426, %v995
      %v1134 = vadd.f32 %v427, %v1000
      %v1135 = vadd.f32 %v428, %v1005
      %v1136 = vadd.f32 %v429, %v1010
      %v1137 = vadd.f32 %v430, %v1015
      %v1138 = vadd.f32 %v431, %v1020
      %v1139 = vadd.f32 %v432, %v1025
      %v1140 = vadd.f32 %v433, %v1030
      %v1141 = vadd.f32 %v434, %v1035
      %v1142 = vadd.f32 %v435, %v1040
      %v1143 = vadd.f32 %v436, %v1045
      %v1144 = vadd.f32 %v437, %v1050
      %v1145 = vadd.f32 %v438, %v1055
      %v1146 = vadd.f32 %v439, %v1060
      %v1147 = vadd.f32 %v440, %v1065
      %v1148 = vadd.f32 %v441, %v1070
      %v1149 = vadd.f32 %v442, %v1075
      %v1150 = vadd.f32 %v443, %v1080
      %v1151 = vadd.f32 %v444, %v1085
      %v1152 = vld [vmem:[%s3] sm:$0x1]
      %v1154 = vlaneseq
      %v1155 = vshrl.u32 %v1154, 7
      %v1156 = vsub.s32 0, %v1155
      %v1157 = vrot.slane %v1152, %v1156
      %v1159 = vadd.f32 %v1088, %v1157
      %v1160 = vadd.f32 %v1089, %v1157
      %v1161 = vadd.f32 %v1090, %v1157
      %v1162 = vadd.f32 %v1091, %v1157
      %v1163 = vadd.f32 %v1092, %v1157
      %v1164 = vadd.f32 %v1093, %v1157
      %v1165 = vadd.f32 %v1094, %v1157
      %v1166 = vadd.f32 %v1095, %v1157
      %v1167 = vadd.f32 %v1096, %v1157
      %v1168 = vadd.f32 %v1097, %v1157
      %v1169 = vadd.f32 %v1098, %v1157
      %v1170 = vadd.f32 %v1099, %v1157
      %v1171 = vadd.f32 %v1100, %v1157
      %v1172 = vadd.f32 %v1101, %v1157
      %v1173 = vadd.f32 %v1102, %v1157
      %v1174 = vadd.f32 %v1103, %v1157
      %v1175 = vadd.f32 %v1104, %v1157
      %v1176 = vadd.f32 %v1105, %v1157
      %v1177 = vadd.f32 %v1106, %v1157
      %v1178 = vadd.f32 %v1107, %v1157
      %v1179 = vadd.f32 %v1108, %v1157
      %v1180 = vadd.f32 %v1109, %v1157
      %v1181 = vadd.f32 %v1110, %v1157
      %v1182 = vadd.f32 %v1111, %v1157
      %v1183 = vadd.f32 %v1112, %v1157
      %v1184 = vadd.f32 %v1113, %v1157
      %v1185 = vadd.f32 %v1114, %v1157
      %v1186 = vadd.f32 %v1115, %v1157
      %v1187 = vadd.f32 %v1116, %v1157
      %v1188 = vadd.f32 %v1117, %v1157
      %v1189 = vadd.f32 %v1118, %v1157
      %v1190 = vadd.f32 %v1119, %v1157
      %v1191 = vadd.f32 %v1120, %v1157
      %v1192 = vadd.f32 %v1121, %v1157
      %v1193 = vadd.f32 %v1122, %v1157
      %v1194 = vadd.f32 %v1123, %v1157
      %v1195 = vadd.f32 %v1124, %v1157
      %v1196 = vadd.f32 %v1125, %v1157
      %v1197 = vadd.f32 %v1126, %v1157
      %v1198 = vadd.f32 %v1127, %v1157
      %v1199 = vadd.f32 %v1128, %v1157
      %v1200 = vadd.f32 %v1129, %v1157
      %v1201 = vadd.f32 %v1130, %v1157
      %v1202 = vadd.f32 %v1131, %v1157
      %v1203 = vadd.f32 %v1132, %v1157
      %v1204 = vadd.f32 %v1133, %v1157
      %v1205 = vadd.f32 %v1134, %v1157
      %v1206 = vadd.f32 %v1135, %v1157
      %v1207 = vadd.f32 %v1136, %v1157
      %v1208 = vadd.f32 %v1137, %v1157
      %v1209 = vadd.f32 %v1138, %v1157
      %v1210 = vadd.f32 %v1139, %v1157
      %v1211 = vadd.f32 %v1140, %v1157
      %v1212 = vadd.f32 %v1141, %v1157
      %v1213 = vadd.f32 %v1142, %v1157
      %v1214 = vadd.f32 %v1143, %v1157
      %v1215 = vadd.f32 %v1144, %v1157
      %v1216 = vadd.f32 %v1145, %v1157
      %v1217 = vadd.f32 %v1146, %v1157
      %v1218 = vadd.f32 %v1147, %v1157
      %v1219 = vadd.f32 %v1148, %v1157
      %v1220 = vadd.f32 %v1149, %v1157
      %v1221 = vadd.f32 %v1150, %v1157
      %v1222 = vadd.f32 %v1151, %v1157
      %vm1223 = vcmask 130048
      %v1224 = vsel %vm1223, %v1159, 0.0
      %v1225 = vsel %vm1223, %v1160, 0.0
      %v1226 = vadd.f32 %v1224, %v1225
      %v1227 = vsel %vm1223, %v1161, 0.0
      %v1228 = vadd.f32 %v1226, %v1227
      %v1229 = vsel %vm1223, %v1162, 0.0
      %v1230 = vadd.f32 %v1228, %v1229
      %v1231 = vsel %vm1223, %v1163, 0.0
      %v1232 = vadd.f32 %v1230, %v1231
      %v1233 = vsel %vm1223, %v1164, 0.0
      %v1234 = vadd.f32 %v1232, %v1233
      %v1235 = vsel %vm1223, %v1165, 0.0
      %v1236 = vadd.f32 %v1234, %v1235
      %v1237 = vsel %vm1223, %v1166, 0.0
      %v1238 = vadd.f32 %v1236, %v1237
      %v1239 = vsel %vm1223, %v1167, 0.0
      %v1240 = vadd.f32 %v1238, %v1239
      %v1241 = vsel %vm1223, %v1168, 0.0
      %v1242 = vadd.f32 %v1240, %v1241
      %v1243 = vsel %vm1223, %v1169, 0.0
      %v1244 = vadd.f32 %v1242, %v1243
      %v1245 = vsel %vm1223, %v1170, 0.0
      %v1246 = vadd.f32 %v1244, %v1245
      %v1247 = vsel %vm1223, %v1171, 0.0
      %v1248 = vadd.f32 %v1246, %v1247
      %v1249 = vsel %vm1223, %v1172, 0.0
      %v1250 = vadd.f32 %v1248, %v1249
      %v1251 = vsel %vm1223, %v1173, 0.0
      %v1252 = vadd.f32 %v1250, %v1251
      %v1253 = vsel %vm1223, %v1174, 0.0
      %v1254 = vadd.f32 %v1252, %v1253
      %v1255 = vsel %vm1223, %v1175, 0.0
      %v1256 = vadd.f32 %v1254, %v1255
      %v1257 = vsel %vm1223, %v1176, 0.0
      %v1258 = vadd.f32 %v1256, %v1257
      %v1259 = vsel %vm1223, %v1177, 0.0
      %v1260 = vadd.f32 %v1258, %v1259
      %v1261 = vsel %vm1223, %v1178, 0.0
      %v1262 = vadd.f32 %v1260, %v1261
      %v1263 = vsel %vm1223, %v1179, 0.0
      %v1264 = vadd.f32 %v1262, %v1263
      %v1265 = vsel %vm1223, %v1180, 0.0
      %v1266 = vadd.f32 %v1264, %v1265
      %v1267 = vsel %vm1223, %v1181, 0.0
      %v1268 = vadd.f32 %v1266, %v1267
      %v1269 = vsel %vm1223, %v1182, 0.0
      %v1270 = vadd.f32 %v1268, %v1269
      %v1271 = vsel %vm1223, %v1183, 0.0
      %v1272 = vadd.f32 %v1270, %v1271
      %v1273 = vsel %vm1223, %v1184, 0.0
      %v1274 = vadd.f32 %v1272, %v1273
      %v1275 = vsel %vm1223, %v1185, 0.0
      %v1276 = vadd.f32 %v1274, %v1275
      %v1277 = vsel %vm1223, %v1186, 0.0
      %v1278 = vadd.f32 %v1276, %v1277
      %v1279 = vsel %vm1223, %v1187, 0.0
      %v1280 = vadd.f32 %v1278, %v1279
      %v1281 = vsel %vm1223, %v1188, 0.0
      %v1282 = vadd.f32 %v1280, %v1281
      %v1283 = vsel %vm1223, %v1189, 0.0
      %v1284 = vadd.f32 %v1282, %v1283
      %v1285 = vsel %vm1223, %v1190, 0.0
      %v1286 = vadd.f32 %v1284, %v1285
      %v1287 = vsel %vm1223, %v1191, 0.0
      %v1288 = vadd.f32 %v1286, %v1287
      %v1289 = vsel %vm1223, %v1192, 0.0
      %v1290 = vadd.f32 %v1288, %v1289
      %v1291 = vsel %vm1223, %v1193, 0.0
      %v1292 = vadd.f32 %v1290, %v1291
      %v1293 = vsel %vm1223, %v1194, 0.0
      %v1294 = vadd.f32 %v1292, %v1293
      %v1295 = vsel %vm1223, %v1195, 0.0
      %v1296 = vadd.f32 %v1294, %v1295
      %v1297 = vsel %vm1223, %v1196, 0.0
      %v1298 = vadd.f32 %v1296, %v1297
      %v1299 = vsel %vm1223, %v1197, 0.0
      %v1300 = vadd.f32 %v1298, %v1299
      %v1301 = vsel %vm1223, %v1198, 0.0
      %v1302 = vadd.f32 %v1300, %v1301
      %v1303 = vsel %vm1223, %v1199, 0.0
      %v1304 = vadd.f32 %v1302, %v1303
      %v1305 = vsel %vm1223, %v1200, 0.0
      %v1306 = vadd.f32 %v1304, %v1305
      %v1307 = vsel %vm1223, %v1201, 0.0
      %v1308 = vadd.f32 %v1306, %v1307
      %v1309 = vsel %vm1223, %v1202, 0.0
      %v1310 = vadd.f32 %v1308, %v1309
      %v1311 = vsel %vm1223, %v1203, 0.0
      %v1312 = vadd.f32 %v1310, %v1311
      %v1313 = vsel %vm1223, %v1204, 0.0
      %v1314 = vadd.f32 %v1312, %v1313
      %v1315 = vsel %vm1223, %v1205, 0.0
      %v1316 = vadd.f32 %v1314, %v1315
      %v1317 = vsel %vm1223, %v1206, 0.0
      %v1318 = vadd.f32 %v1316, %v1317
      %v1319 = vsel %vm1223, %v1207, 0.0
      %v1320 = vadd.f32 %v1318, %v1319
      %v1321 = vsel %vm1223, %v1208, 0.0
      %v1322 = vadd.f32 %v1320, %v1321
      %v1323 = vsel %vm1223, %v1209, 0.0
      %v1324 = vadd.f32 %v1322, %v1323
      %v1325 = vsel %vm1223, %v1210, 0.0
      %v1326 = vadd.f32 %v1324, %v1325
      %v1327 = vsel %vm1223, %v1211, 0.0
      %v1328 = vadd.f32 %v1326, %v1327
      %v1329 = vsel %vm1223, %v1212, 0.0
      %v1330 = vadd.f32 %v1328, %v1329
      %v1331 = vsel %vm1223, %v1213, 0.0
      %v1332 = vadd.f32 %v1330, %v1331
      %v1333 = vsel %vm1223, %v1214, 0.0
      %v1334 = vadd.f32 %v1332, %v1333
      %v1335 = vsel %vm1223, %v1215, 0.0
      %v1336 = vadd.f32 %v1334, %v1335
      %v1337 = vsel %vm1223, %v1216, 0.0
      %v1338 = vadd.f32 %v1336, %v1337
      %v1339 = vsel %vm1223, %v1217, 0.0
      %v1340 = vadd.f32 %v1338, %v1339
      %v1341 = vsel %vm1223, %v1218, 0.0
      %v1342 = vadd.f32 %v1340, %v1341
      %v1343 = vsel %vm1223, %v1219, 0.0
      %v1344 = vadd.f32 %v1342, %v1343
      %v1345 = vsel %vm1223, %v1220, 0.0
      %v1346 = vadd.f32 %v1344, %v1345
      %v1347 = vsel %vm1223, %v1221, 0.0
      %v1348 = vadd.f32 %v1346, %v1347
      %v1349 = vsel %vm1223, %v1222, 0.0
      %v1350 = vadd.f32 %v1348, %v1349
      %v1351 = vrot.slane %v1350, 4
      %v1352 = vadd.f32 %v1350, %v1351
      %v1353 = vrot.slane %v1352, 2
      %v1354 = vadd.f32 %v1352, %v1353
      %v1355 = vrot.slane %v1354, 1
      %v1356 = vadd.f32 %v1354, %v1355
      %v1357 = vmul.f32 %v1159, %v1159
      %v1358 = vmul.f32 %v1160, %v1160
      %v1359 = vmul.f32 %v1161, %v1161
      %v1360 = vmul.f32 %v1162, %v1162
      %v1361 = vmul.f32 %v1163, %v1163
      %v1362 = vmul.f32 %v1164, %v1164
      %v1363 = vmul.f32 %v1165, %v1165
      %v1364 = vmul.f32 %v1166, %v1166
      %v1365 = vmul.f32 %v1167, %v1167
      %v1366 = vmul.f32 %v1168, %v1168
      %v1367 = vmul.f32 %v1169, %v1169
      %v1368 = vmul.f32 %v1170, %v1170
      %v1369 = vmul.f32 %v1171, %v1171
      %v1370 = vmul.f32 %v1172, %v1172
      %v1371 = vmul.f32 %v1173, %v1173
      %v1372 = vmul.f32 %v1174, %v1174
      %v1373 = vmul.f32 %v1175, %v1175
      %v1374 = vmul.f32 %v1176, %v1176
      %v1375 = vmul.f32 %v1177, %v1177
      %v1376 = vmul.f32 %v1178, %v1178
      %v1377 = vmul.f32 %v1179, %v1179
      %v1378 = vmul.f32 %v1180, %v1180
      %v1379 = vmul.f32 %v1181, %v1181
      %v1380 = vmul.f32 %v1182, %v1182
      %v1381 = vmul.f32 %v1183, %v1183
      %v1382 = vmul.f32 %v1184, %v1184
      %v1383 = vmul.f32 %v1185, %v1185
      %v1384 = vmul.f32 %v1186, %v1186
      %v1385 = vmul.f32 %v1187, %v1187
      %v1386 = vmul.f32 %v1188, %v1188
      %v1387 = vmul.f32 %v1189, %v1189
      %v1388 = vmul.f32 %v1190, %v1190
      %v1389 = vmul.f32 %v1191, %v1191
      %v1390 = vmul.f32 %v1192, %v1192
      %v1391 = vmul.f32 %v1193, %v1193
      %v1392 = vmul.f32 %v1194, %v1194
      %v1393 = vmul.f32 %v1195, %v1195
      %v1394 = vmul.f32 %v1196, %v1196
      %v1395 = vmul.f32 %v1197, %v1197
      %v1396 = vmul.f32 %v1198, %v1198
      %v1397 = vmul.f32 %v1199, %v1199
      %v1398 = vmul.f32 %v1200, %v1200
      %v1399 = vmul.f32 %v1201, %v1201
      %v1400 = vmul.f32 %v1202, %v1202
      %v1401 = vmul.f32 %v1203, %v1203
      %v1402 = vmul.f32 %v1204, %v1204
      %v1403 = vmul.f32 %v1205, %v1205
      %v1404 = vmul.f32 %v1206, %v1206
      %v1405 = vmul.f32 %v1207, %v1207
      %v1406 = vmul.f32 %v1208, %v1208
      %v1407 = vmul.f32 %v1209, %v1209
      %v1408 = vmul.f32 %v1210, %v1210
      %v1409 = vmul.f32 %v1211, %v1211
      %v1410 = vmul.f32 %v1212, %v1212
      %v1411 = vmul.f32 %v1213, %v1213
      %v1412 = vmul.f32 %v1214, %v1214
      %v1413 = vmul.f32 %v1215, %v1215
      %v1414 = vmul.f32 %v1216, %v1216
      %v1415 = vmul.f32 %v1217, %v1217
      %v1416 = vmul.f32 %v1218, %v1218
      %v1417 = vmul.f32 %v1219, %v1219
      %v1418 = vmul.f32 %v1220, %v1220
      %v1419 = vmul.f32 %v1221, %v1221
      %v1420 = vmul.f32 %v1222, %v1222
      %v1421 = vsel %vm1223, %v1357, 0.0
      %v1422 = vsel %vm1223, %v1358, 0.0
      %v1423 = vadd.f32 %v1421, %v1422
      %v1424 = vsel %vm1223, %v1359, 0.0
      %v1425 = vadd.f32 %v1423, %v1424
      %v1426 = vsel %vm1223, %v1360, 0.0
      %v1427 = vadd.f32 %v1425, %v1426
      %v1428 = vsel %vm1223, %v1361, 0.0
      %v1429 = vadd.f32 %v1427, %v1428
      %v1430 = vsel %vm1223, %v1362, 0.0
      %v1431 = vadd.f32 %v1429, %v1430
      %v1432 = vsel %vm1223, %v1363, 0.0
      %v1433 = vadd.f32 %v1431, %v1432
      %v1434 = vsel %vm1223, %v1364, 0.0
      %v1435 = vadd.f32 %v1433, %v1434
      %v1436 = vsel %vm1223, %v1365, 0.0
      %v1437 = vadd.f32 %v1435, %v1436
      %v1438 = vsel %vm1223, %v1366, 0.0
      %v1439 = vadd.f32 %v1437, %v1438
      %v1440 = vsel %vm1223, %v1367, 0.0
      %v1441 = vadd.f32 %v1439, %v1440
      %v1442 = vsel %vm1223, %v1368, 0.0
      %v1443 = vadd.f32 %v1441, %v1442
      %v1444 = vsel %vm1223, %v1369, 0.0
      %v1445 = vadd.f32 %v1443, %v1444
      %v1446 = vsel %vm1223, %v1370, 0.0
      %v1447 = vadd.f32 %v1445, %v1446
      %v1448 = vsel %vm1223, %v1371, 0.0
      %v1449 = vadd.f32 %v1447, %v1448
      %v1450 = vsel %vm1223, %v1372, 0.0
      %v1451 = vadd.f32 %v1449, %v1450
      %v1452 = vsel %vm1223, %v1373, 0.0
      %v1453 = vadd.f32 %v1451, %v1452
      %v1454 = vsel %vm1223, %v1374, 0.0
      %v1455 = vadd.f32 %v1453, %v1454
      %v1456 = vsel %vm1223, %v1375, 0.0
      %v1457 = vadd.f32 %v1455, %v1456
      %v1458 = vsel %vm1223, %v1376, 0.0
      %v1459 = vadd.f32 %v1457, %v1458
      %v1460 = vsel %vm1223, %v1377, 0.0
      %v1461 = vadd.f32 %v1459, %v1460
      %v1462 = vsel %vm1223, %v1378, 0.0
      %v1463 = vadd.f32 %v1461, %v1462
      %v1464 = vsel %vm1223, %v1379, 0.0
      %v1465 = vadd.f32 %v1463, %v1464
      %v1466 = vsel %vm1223, %v1380, 0.0
      %v1467 = vadd.f32 %v1465, %v1466
      %v1468 = vsel %vm1223, %v1381, 0.0
      %v1469 = vadd.f32 %v1467, %v1468
      %v1470 = vsel %vm1223, %v1382, 0.0
      %v1471 = vadd.f32 %v1469, %v1470
      %v1472 = vsel %vm1223, %v1383, 0.0
      %v1473 = vadd.f32 %v1471, %v1472
      %v1474 = vsel %vm1223, %v1384, 0.0
      %v1475 = vadd.f32 %v1473, %v1474
      %v1476 = vsel %vm1223, %v1385, 0.0
      %v1477 = vadd.f32 %v1475, %v1476
      %v1478 = vsel %vm1223, %v1386, 0.0
      %v1479 = vadd.f32 %v1477, %v1478
      %v1480 = vsel %vm1223, %v1387, 0.0
      %v1481 = vadd.f32 %v1479, %v1480
      %v1482 = vsel %vm1223, %v1388, 0.0
      %v1483 = vadd.f32 %v1481, %v1482
      %v1484 = vsel %vm1223, %v1389, 0.0
      %v1485 = vadd.f32 %v1483, %v1484
      %v1486 = vsel %vm1223, %v1390, 0.0
      %v1487 = vadd.f32 %v1485, %v1486
      %v1488 = vsel %vm1223, %v1391, 0.0
      %v1489 = vadd.f32 %v1487, %v1488
      %v1490 = vsel %vm1223, %v1392, 0.0
      %v1491 = vadd.f32 %v1489, %v1490
      %v1492 = vsel %vm1223, %v1393, 0.0
      %v1493 = vadd.f32 %v1491, %v1492
      %v1494 = vsel %vm1223, %v1394, 0.0
      %v1495 = vadd.f32 %v1493, %v1494
      %v1496 = vsel %vm1223, %v1395, 0.0
      %v1497 = vadd.f32 %v1495, %v1496
      %v1498 = vsel %vm1223, %v1396, 0.0
      %v1499 = vadd.f32 %v1497, %v1498
      %v1500 = vsel %vm1223, %v1397, 0.0
      %v1501 = vadd.f32 %v1499, %v1500
      %v1502 = vsel %vm1223, %v1398, 0.0
      %v1503 = vadd.f32 %v1501, %v1502
      %v1504 = vsel %vm1223, %v1399, 0.0
      %v1505 = vadd.f32 %v1503, %v1504
      %v1506 = vsel %vm1223, %v1400, 0.0
      %v1507 = vadd.f32 %v1505, %v1506
      %v1508 = vsel %vm1223, %v1401, 0.0
      %v1509 = vadd.f32 %v1507, %v1508
      %v1510 = vsel %vm1223, %v1402, 0.0
      %v1511 = vadd.f32 %v1509, %v1510
      %v1512 = vsel %vm1223, %v1403, 0.0
      %v1513 = vadd.f32 %v1511, %v1512
      %v1514 = vsel %vm1223, %v1404, 0.0
      %v1515 = vadd.f32 %v1513, %v1514
      %v1516 = vsel %vm1223, %v1405, 0.0
      %v1517 = vadd.f32 %v1515, %v1516
      %v1518 = vsel %vm1223, %v1406, 0.0
      %v1519 = vadd.f32 %v1517, %v1518
      %v1520 = vsel %vm1223, %v1407, 0.0
      %v1521 = vadd.f32 %v1519, %v1520
      %v1522 = vsel %vm1223, %v1408, 0.0
      %v1523 = vadd.f32 %v1521, %v1522
      %v1524 = vsel %vm1223, %v1409, 0.0
      %v1525 = vadd.f32 %v1523, %v1524
      %v1526 = vsel %vm1223, %v1410, 0.0
      %v1527 = vadd.f32 %v1525, %v1526
      %v1528 = vsel %vm1223, %v1411, 0.0
      %v1529 = vadd.f32 %v1527, %v1528
      %v1530 = vsel %vm1223, %v1412, 0.0
      %v1531 = vadd.f32 %v1529, %v1530
      %v1532 = vsel %vm1223, %v1413, 0.0
      %v1533 = vadd.f32 %v1531, %v1532
      %v1534 = vsel %vm1223, %v1414, 0.0
      %v1535 = vadd.f32 %v1533, %v1534
      %v1536 = vsel %vm1223, %v1415, 0.0
      %v1537 = vadd.f32 %v1535, %v1536
      %v1538 = vsel %vm1223, %v1416, 0.0
      %v1539 = vadd.f32 %v1537, %v1538
      %v1540 = vsel %vm1223, %v1417, 0.0
      %v1541 = vadd.f32 %v1539, %v1540
      %v1542 = vsel %vm1223, %v1418, 0.0
      %v1543 = vadd.f32 %v1541, %v1542
      %v1544 = vsel %vm1223, %v1419, 0.0
      %v1545 = vadd.f32 %v1543, %v1544
      %v1546 = vsel %vm1223, %v1420, 0.0
      %v1547 = vadd.f32 %v1545, %v1546
      %v1548 = vrot.slane %v1547, 4
      %v1549 = vadd.f32 %v1547, %v1548
      %v1550 = vrot.slane %v1549, 2
      %v1551 = vadd.f32 %v1549, %v1550
      %v1552 = vrot.slane %v1551, 1
      %v1553 = vadd.f32 %v1551, %v1552
      %vm1554 = vcmask 1040384
      %v1555 = vsel %vm1554, %v1356, %v1553
      %v1556 = vld [vmem:[%s6] sm:$0xff]
      %v1557 = vld [vmem:[%s6 + $0x8] sm:$0xff]
      %v1559 = vsel %vm1223, %v1555, 0
      %1561 = vmatprep.subr.mxu0 0.0
      %1562 = vmatpush1.msra.mxu0 %v1556
      %1563 = vmatprep.subr.mxu0 0.0
      %1564 = vmatpush1.msra.mxu0 %v1557
      %1565 = vmatprep.subr.mxu0 0.0
      %1566 = vmatpush1.msra.mxu0 0.0
      %1567 = vmatprep.subr.mxu0 0.0
      %1568 = vmatpush1.msra.mxu0 0.0
      %1569 = vmatprep.subr.mxu0 0.0
      %1570 = vmatpush1.msra.mxu0 0.0
      %1571 = vmatprep.subr.mxu0 0.0
      %1572 = vmatpush1.msra.mxu0 0.0
      %1573 = vmatprep.subr.mxu0 0.0
      %1574 = vmatpush1.msra.mxu0 0.0
      %1575 = vmatprep.subr.mxu0 0.0
      %1576 = vmatpush1.msra.mxu0 0.0
      %1577 = vmatprep.subr.mxu0 0.0
      %1578 = vmatpush1.msra.mxu0 0.0
      %1579 = vmatprep.subr.mxu0 0.0
      %1580 = vmatpush1.msra.mxu0 0.0
      %1581 = vmatprep.subr.mxu0 0.0
      %1582 = vmatpush1.msra.mxu0 0.0
      %1583 = vmatprep.subr.mxu0 0.0
      %1584 = vmatpush1.msra.mxu0 0.0
      %1585 = vmatprep.subr.mxu0 0.0
      %1586 = vmatpush1.msra.mxu0 0.0
      %1587 = vmatprep.subr.mxu0 0.0
      %1588 = vmatpush1.msra.mxu0 0.0
      %1589 = vmatprep.subr.mxu0 0.0
      %1590 = vmatpush1.msra.mxu0 0.0
      %1591 = vmatprep.subr.mxu0 0.0
      %1592 = vmatpush1.msra.mxu0 0.0
      %1593 = vmatprep.subr.mxu0 0.0
      %1594 = vmatpush1.msra.mxu0 0.0
      %1595 = vmatprep.subr.mxu0 0.0
      %1596 = vmatpush1.msra.mxu0 0.0
      %1597 = vmatprep.subr.mxu0 0.0
      %1598 = vmatpush1.msra.mxu0 0.0
      %1599 = vmatprep.subr.mxu0 0.0
      %1600 = vmatpush1.msra.mxu0 0.0
      %1601 = vmatprep.subr.mxu0 0.0
      %1602 = vmatpush1.msra.mxu0 0.0
      %1603 = vmatprep.subr.mxu0 0.0
      %1604 = vmatpush1.msra.mxu0 0.0
      %1605 = vmatprep.subr.mxu0 0.0
      %1606 = vmatpush1.msra.mxu0 0.0
      %1607 = vmatprep.subr.mxu0 0.0
      %1608 = vmatpush1.msra.mxu0 0.0
      %1609 = vmatprep.subr.mxu0 0.0
      %1610 = vmatpush1.msra.mxu0 0.0
      %1611 = vmatprep.subr.mxu0 0.0
      %1612 = vmatpush1.msra.mxu0 0.0
      %1613 = vmatprep.subr.mxu0 0.0
      %1614 = vmatpush1.msra.mxu0 0.0
      %1615 = vmatprep.subr.mxu0 0.0
      %1616 = vmatpush1.msra.mxu0 0.0
      %1617 = vmatprep.subr.mxu0 0.0
      %1618 = vmatpush1.msra.mxu0 0.0
      %1619 = vmatprep.subr.mxu0 0.0
      %1620 = vmatpush1.msra.mxu0 0.0
      %1621 = vmatprep.subr.mxu0 0.0
      %1622 = vmatpush1.msra.mxu0 0.0
      %1623 = vmatprep.subr.mxu0 0.0
      %1624 = vmatpush1.msra.mxu0 0.0
      %1625 = vmatprep.mubr.f32.mxu0 0.0
      %1626 = vmatmul.mubr.f32.gmra.mrb[0].mxu0 %v1559
      %v1627 = vpop.f32.mrb[0].mxu0
      %v1628 = vadd.f32 0.0, %v1627
      %v1629 = vpop.f32.mrb[0].mxu0
      %1630 = vdwg.mxu0
      %v1631 = vmul.f32 %v1628, %v1628
      %v1633 = vrot.slane %v1631, 7
      %v1635 = vsub.f32 %v1628, %v1633
      %v1636 = vadd.f32 %v1635, 1e-05
      %v1637 = vrsqrt.pop %v1636
      %v1638 = vld [vmem:[%s4] sm:$0x1]
      %v1641 = vunpack.c.l.s4 1966171168
      %v1642 = vunpack.c.0.s8 %v1641
      %v1643 = vlaneseq
      %v1644 = vshrl.u32 %v1643, 7
      %v1645 = vsub.s32 %v1642, %v1644
      %v1646 = vrot.slane %v1637, %v1645
      %v1647 = vcombine.high %v1646, %v1646
      %v1649 = vunpack.c.l.s4 1966171168
      %v1650 = vunpack.c.0.s8 %v1649
      %v1651 = vlaneseq
      %v1652 = vshrl.u32 %v1651, 7
      %v1653 = vsub.s32 %v1650, %v1652
      %v1654 = vrot.slane %v1647, %v1653
      %v1656 = vmul.f32 %v1638, %v1654
      %v1657 = vld [vmem:[%s5] sm:$0x1]
      %v1658 = vmul.f32 %v1628, %v1656
      %v1659 = vsub.f32 %v1657, %v1658
      %v1661 = vlaneseq
      %v1662 = vshrl.u32 %v1661, 7
      %v1663 = vsub.s32 0, %v1662
      %v1664 = vrot.slane %v1656, %v1663
      %v1666 = vmul.f32 %v1159, %v1664
      %v1667 = vmul.f32 %v1160, %v1664
      %v1668 = vmul.f32 %v1161, %v1664
      %v1669 = vmul.f32 %v1162, %v1664
      %v1670 = vmul.f32 %v1163, %v1664
      %v1671 = vmul.f32 %v1164, %v1664
      %v1672 = vmul.f32 %v1165, %v1664
      %v1673 = vmul.f32 %v1166, %v1664
      %v1674 = vmul.f32 %v1167, %v1664
      %v1675 = vmul.f32 %v1168, %v1664
      %v1676 = vmul.f32 %v1169, %v1664
      %v1677 = vmul.f32 %v1170, %v1664
      %v1678 = vmul.f32 %v1171, %v1664
      %v1679 = vmul.f32 %v1172, %v1664
      %v1680 = vmul.f32 %v1173, %v1664
      %v1681 = vmul.f32 %v1174, %v1664
      %v1682 = vmul.f32 %v1175, %v1664
      %v1683 = vmul.f32 %v1176, %v1664
      %v1684 = vmul.f32 %v1177, %v1664
      %v1685 = vmul.f32 %v1178, %v1664
      %v1686 = vmul.f32 %v1179, %v1664
      %v1687 = vmul.f32 %v1180, %v1664
      %v1688 = vmul.f32 %v1181, %v1664
      %v1689 = vmul.f32 %v1182, %v1664
      %v1690 = vmul.f32 %v1183, %v1664
      %v1691 = vmul.f32 %v1184, %v1664
      %v1692 = vmul.f32 %v1185, %v1664
      %v1693 = vmul.f32 %v1186, %v1664
      %v1694 = vmul.f32 %v1187, %v1664
      %v1695 = vmul.f32 %v1188, %v1664
      %v1696 = vmul.f32 %v1189, %v1664
      %v1697 = vmul.f32 %v1190, %v1664
      %v1698 = vmul.f32 %v1191, %v1664
      %v1699 = vmul.f32 %v1192, %v1664
      %v1700 = vmul.f32 %v1193, %v1664
      %v1701 = vmul.f32 %v1194, %v1664
      %v1702 = vmul.f32 %v1195, %v1664
      %v1703 = vmul.f32 %v1196, %v1664
      %v1704 = vmul.f32 %v1197, %v1664
      %v1705 = vmul.f32 %v1198, %v1664
      %v1706 = vmul.f32 %v1199, %v1664
      %v1707 = vmul.f32 %v1200, %v1664
      %v1708 = vmul.f32 %v1201, %v1664
      %v1709 = vmul.f32 %v1202, %v1664
      %v1710 = vmul.f32 %v1203, %v1664
      %v1711 = vmul.f32 %v1204, %v1664
      %v1712 = vmul.f32 %v1205, %v1664
      %v1713 = vmul.f32 %v1206, %v1664
      %v1714 = vmul.f32 %v1207, %v1664
      %v1715 = vmul.f32 %v1208, %v1664
      %v1716 = vmul.f32 %v1209, %v1664
      %v1717 = vmul.f32 %v1210, %v1664
      %v1718 = vmul.f32 %v1211, %v1664
      %v1719 = vmul.f32 %v1212, %v1664
      %v1720 = vmul.f32 %v1213, %v1664
      %v1721 = vmul.f32 %v1214, %v1664
      %v1722 = vmul.f32 %v1215, %v1664
      %v1723 = vmul.f32 %v1216, %v1664
      %v1724 = vmul.f32 %v1217, %v1664
      %v1725 = vmul.f32 %v1218, %v1664
      %v1726 = vmul.f32 %v1219, %v1664
      %v1727 = vmul.f32 %v1220, %v1664
      %v1728 = vmul.f32 %v1221, %v1664
      %v1729 = vmul.f32 %v1222, %v1664
      %v1731 = vlaneseq
      %v1732 = vshrl.u32 %v1731, 7
      %v1733 = vsub.s32 0, %v1732
      %v1734 = vrot.slane %v1659, %v1733
      %v1736 = vadd.f32 %v1666, %v1734
      %v1737 = vadd.f32 %v1667, %v1734
      %v1738 = vadd.f32 %v1668, %v1734
      %v1739 = vadd.f32 %v1669, %v1734
      %v1740 = vadd.f32 %v1670, %v1734
      %v1741 = vadd.f32 %v1671, %v1734
      %v1742 = vadd.f32 %v1672, %v1734
      %v1743 = vadd.f32 %v1673, %v1734
      %v1744 = vadd.f32 %v1674, %v1734
      %v1745 = vadd.f32 %v1675, %v1734
      %v1746 = vadd.f32 %v1676, %v1734
      %v1747 = vadd.f32 %v1677, %v1734
      %v1748 = vadd.f32 %v1678, %v1734
      %v1749 = vadd.f32 %v1679, %v1734
      %v1750 = vadd.f32 %v1680, %v1734
      %v1751 = vadd.f32 %v1681, %v1734
      %v1752 = vadd.f32 %v1682, %v1734
      %v1753 = vadd.f32 %v1683, %v1734
      %v1754 = vadd.f32 %v1684, %v1734
      %v1755 = vadd.f32 %v1685, %v1734
      %v1756 = vadd.f32 %v1686, %v1734
      %v1757 = vadd.f32 %v1687, %v1734
      %v1758 = vadd.f32 %v1688, %v1734
      %v1759 = vadd.f32 %v1689, %v1734
      %v1760 = vadd.f32 %v1690, %v1734
      %v1761 = vadd.f32 %v1691, %v1734
      %v1762 = vadd.f32 %v1692, %v1734
      %v1763 = vadd.f32 %v1693, %v1734
      %v1764 = vadd.f32 %v1694, %v1734
      %v1765 = vadd.f32 %v1695, %v1734
      %v1766 = vadd.f32 %v1696, %v1734
      %v1767 = vadd.f32 %v1697, %v1734
      %v1768 = vadd.f32 %v1698, %v1734
      %v1769 = vadd.f32 %v1699, %v1734
      %v1770 = vadd.f32 %v1700, %v1734
      %v1771 = vadd.f32 %v1701, %v1734
      %v1772 = vadd.f32 %v1702, %v1734
      %v1773 = vadd.f32 %v1703, %v1734
      %v1774 = vadd.f32 %v1704, %v1734
      %v1775 = vadd.f32 %v1705, %v1734
      %v1776 = vadd.f32 %v1706, %v1734
      %v1777 = vadd.f32 %v1707, %v1734
      %v1778 = vadd.f32 %v1708, %v1734
      %v1779 = vadd.f32 %v1709, %v1734
      %v1780 = vadd.f32 %v1710, %v1734
      %v1781 = vadd.f32 %v1711, %v1734
      %v1782 = vadd.f32 %v1712, %v1734
      %v1783 = vadd.f32 %v1713, %v1734
      %v1784 = vadd.f32 %v1714, %v1734
      %v1785 = vadd.f32 %v1715, %v1734
      %v1786 = vadd.f32 %v1716, %v1734
      %v1787 = vadd.f32 %v1717, %v1734
      %v1788 = vadd.f32 %v1718, %v1734
      %v1789 = vadd.f32 %v1719, %v1734
      %v1790 = vadd.f32 %v1720, %v1734
      %v1791 = vadd.f32 %v1721, %v1734
      %v1792 = vadd.f32 %v1722, %v1734
      %v1793 = vadd.f32 %v1723, %v1734
      %v1794 = vadd.f32 %v1724, %v1734
      %v1795 = vadd.f32 %v1725, %v1734
      %v1796 = vadd.f32 %v1726, %v1734
      %v1797 = vadd.f32 %v1727, %v1734
      %v1798 = vadd.f32 %v1728, %v1734
      %v1799 = vadd.f32 %v1729, %v1734
      %v1800 = vmul.f32 %v1736, 0.5
      %v1801 = vmul.f32 %v1737, 0.5
      %v1802 = vmul.f32 %v1738, 0.5
      %v1803 = vmul.f32 %v1739, 0.5
      %v1804 = vmul.f32 %v1740, 0.5
      %v1805 = vmul.f32 %v1741, 0.5
      %v1806 = vmul.f32 %v1742, 0.5
      %v1807 = vmul.f32 %v1743, 0.5
      %v1808 = vmul.f32 %v1744, 0.5
      %v1809 = vmul.f32 %v1745, 0.5
      %v1810 = vmul.f32 %v1746, 0.5
      %v1811 = vmul.f32 %v1747, 0.5
      %v1812 = vmul.f32 %v1748, 0.5
      %v1813 = vmul.f32 %v1749, 0.5
      %v1814 = vmul.f32 %v1750, 0.5
      %v1815 = vmul.f32 %v1751, 0.5
      %v1816 = vmul.f32 %v1752, 0.5
      %v1817 = vmul.f32 %v1753, 0.5
      %v1818 = vmul.f32 %v1754, 0.5
      %v1819 = vmul.f32 %v1755, 0.5
      %v1820 = vmul.f32 %v1756, 0.5
      %v1821 = vmul.f32 %v1757, 0.5
      %v1822 = vmul.f32 %v1758, 0.5
      %v1823 = vmul.f32 %v1759, 0.5
      %v1824 = vmul.f32 %v1760, 0.5
      %v1825 = vmul.f32 %v1761, 0.5
      %v1826 = vmul.f32 %v1762, 0.5
      %v1827 = vmul.f32 %v1763, 0.5
      %v1828 = vmul.f32 %v1764, 0.5
      %v1829 = vmul.f32 %v1765, 0.5
      %v1830 = vmul.f32 %v1766, 0.5
      %v1831 = vmul.f32 %v1767, 0.5
      %v1832 = vmul.f32 %v1768, 0.5
      %v1833 = vmul.f32 %v1769, 0.5
      %v1834 = vmul.f32 %v1770, 0.5
      %v1835 = vmul.f32 %v1771, 0.5
      %v1836 = vmul.f32 %v1772, 0.5
      %v1837 = vmul.f32 %v1773, 0.5
      %v1838 = vmul.f32 %v1774, 0.5
      %v1839 = vmul.f32 %v1775, 0.5
      %v1840 = vmul.f32 %v1776, 0.5
      %v1841 = vmul.f32 %v1777, 0.5
      %v1842 = vmul.f32 %v1778, 0.5
      %v1843 = vmul.f32 %v1779, 0.5
      %v1844 = vmul.f32 %v1780, 0.5
      %v1845 = vmul.f32 %v1781, 0.5
      %v1846 = vmul.f32 %v1782, 0.5
      %v1847 = vmul.f32 %v1783, 0.5
      %v1848 = vmul.f32 %v1784, 0.5
      %v1849 = vmul.f32 %v1785, 0.5
      %v1850 = vmul.f32 %v1786, 0.5
      %v1851 = vmul.f32 %v1787, 0.5
      %v1852 = vmul.f32 %v1788, 0.5
      %v1853 = vmul.f32 %v1789, 0.5
      %v1854 = vmul.f32 %v1790, 0.5
      %v1855 = vmul.f32 %v1791, 0.5
      %v1856 = vmul.f32 %v1792, 0.5
      %v1857 = vmul.f32 %v1793, 0.5
      %v1858 = vmul.f32 %v1794, 0.5
      %v1859 = vmul.f32 %v1795, 0.5
      %v1860 = vmul.f32 %v1796, 0.5
      %v1861 = vmul.f32 %v1797, 0.5
      %v1862 = vmul.f32 %v1798, 0.5
      %v1863 = vmul.f32 %v1799, 0.5
      %v1864 = vtanh.pop %v1800
      %v1865 = vtanh.pop %v1801
      %v1866 = vtanh.pop %v1802
      %v1867 = vtanh.pop %v1803
      %v1868 = vtanh.pop %v1804
      %v1869 = vtanh.pop %v1805
      %v1870 = vtanh.pop %v1806
      %v1871 = vtanh.pop %v1807
      %v1872 = vtanh.pop %v1808
      %v1873 = vtanh.pop %v1809
      %v1874 = vtanh.pop %v1810
      %v1875 = vtanh.pop %v1811
      %v1876 = vtanh.pop %v1812
      %v1877 = vtanh.pop %v1813
      %v1878 = vtanh.pop %v1814
      %v1879 = vtanh.pop %v1815
      %v1880 = vtanh.pop %v1816
      %v1881 = vtanh.pop %v1817
      %v1882 = vtanh.pop %v1818
      %v1883 = vtanh.pop %v1819
      %v1884 = vtanh.pop %v1820
      %v1885 = vtanh.pop %v1821
      %v1886 = vtanh.pop %v1822
      %v1887 = vtanh.pop %v1823
      %v1888 = vtanh.pop %v1824
      %v1889 = vtanh.pop %v1825
      %v1890 = vtanh.pop %v1826
      %v1891 = vtanh.pop %v1827
      %v1892 = vtanh.pop %v1828
      %v1893 = vtanh.pop %v1829
      %v1894 = vtanh.pop %v1830
      %v1895 = vtanh.pop %v1831
      %v1896 = vtanh.pop %v1832
      %v1897 = vtanh.pop %v1833
      %v1898 = vtanh.pop %v1834
      %v1899 = vtanh.pop %v1835
      %v1900 = vtanh.pop %v1836
      %v1901 = vtanh.pop %v1837
      %v1902 = vtanh.pop %v1838
      %v1903 = vtanh.pop %v1839
      %v1904 = vtanh.pop %v1840
      %v1905 = vtanh.pop %v1841
      %v1906 = vtanh.pop %v1842
      %v1907 = vtanh.pop %v1843
      %v1908 = vtanh.pop %v1844
      %v1909 = vtanh.pop %v1845
      %v1910 = vtanh.pop %v1846
      %v1911 = vtanh.pop %v1847
      %v1912 = vtanh.pop %v1848
      %v1913 = vtanh.pop %v1849
      %v1914 = vtanh.pop %v1850
      %v1915 = vtanh.pop %v1851
      %v1916 = vtanh.pop %v1852
      %v1917 = vtanh.pop %v1853
      %v1918 = vtanh.pop %v1854
      %v1919 = vtanh.pop %v1855
      %v1920 = vtanh.pop %v1856
      %v1921 = vtanh.pop %v1857
      %v1922 = vtanh.pop %v1858
      %v1923 = vtanh.pop %v1859
      %v1924 = vtanh.pop %v1860
      %v1925 = vtanh.pop %v1861
      %v1926 = vtanh.pop %v1862
      %v1927 = vtanh.pop %v1863
      %v1928 = vadd.f32 %v1864, 1.0
      %v1929 = vadd.f32 %v1865, 1.0
      %v1930 = vadd.f32 %v1866, 1.0
      %v1931 = vadd.f32 %v1867, 1.0
      %v1932 = vadd.f32 %v1868, 1.0
      %v1933 = vadd.f32 %v1869, 1.0
      %v1934 = vadd.f32 %v1870, 1.0
      %v1935 = vadd.f32 %v1871, 1.0
      %v1936 = vadd.f32 %v1872, 1.0
      %v1937 = vadd.f32 %v1873, 1.0
      %v1938 = vadd.f32 %v1874, 1.0
      %v1939 = vadd.f32 %v1875, 1.0
      %v1940 = vadd.f32 %v1876, 1.0
      %v1941 = vadd.f32 %v1877, 1.0
      %v1942 = vadd.f32 %v1878, 1.0
      %v1943 = vadd.f32 %v1879, 1.0
      %v1944 = vadd.f32 %v1880, 1.0
      %v1945 = vadd.f32 %v1881, 1.0
      %v1946 = vadd.f32 %v1882, 1.0
      %v1947 = vadd.f32 %v1883, 1.0
      %v1948 = vadd.f32 %v1884, 1.0
      %v1949 = vadd.f32 %v1885, 1.0
      %v1950 = vadd.f32 %v1886, 1.0
      %v1951 = vadd.f32 %v1887, 1.0
      %v1952 = vadd.f32 %v1888, 1.0
      %v1953 = vadd.f32 %v1889, 1.0
      %v1954 = vadd.f32 %v1890, 1.0
      %v1955 = vadd.f32 %v1891, 1.0
      %v1956 = vadd.f32 %v1892, 1.0
      %v1957 = vadd.f32 %v1893, 1.0
      %v1958 = vadd.f32 %v1894, 1.0
      %v1959 = vadd.f32 %v1895, 1.0
      %v1960 = vadd.f32 %v1896, 1.0
      %v1961 = vadd.f32 %v1897, 1.0
      %v1962 = vadd.f32 %v1898, 1.0
      %v1963 = vadd.f32 %v1899, 1.0
      %v1964 = vadd.f32 %v1900, 1.0
      %v1965 = vadd.f32 %v1901, 1.0
      %v1966 = vadd.f32 %v1902, 1.0
      %v1967 = vadd.f32 %v1903, 1.0
      %v1968 = vadd.f32 %v1904, 1.0
      %v1969 = vadd.f32 %v1905, 1.0
      %v1970 = vadd.f32 %v1906, 1.0
      %v1971 = vadd.f32 %v1907, 1.0
      %v1972 = vadd.f32 %v1908, 1.0
      %v1973 = vadd.f32 %v1909, 1.0
      %v1974 = vadd.f32 %v1910, 1.0
      %v1975 = vadd.f32 %v1911, 1.0
      %v1976 = vadd.f32 %v1912, 1.0
      %v1977 = vadd.f32 %v1913, 1.0
      %v1978 = vadd.f32 %v1914, 1.0
      %v1979 = vadd.f32 %v1915, 1.0
      %v1980 = vadd.f32 %v1916, 1.0
      %v1981 = vadd.f32 %v1917, 1.0
      %v1982 = vadd.f32 %v1918, 1.0
      %v1983 = vadd.f32 %v1919, 1.0
      %v1984 = vadd.f32 %v1920, 1.0
      %v1985 = vadd.f32 %v1921, 1.0
      %v1986 = vadd.f32 %v1922, 1.0
      %v1987 = vadd.f32 %v1923, 1.0
      %v1988 = vadd.f32 %v1924, 1.0
      %v1989 = vadd.f32 %v1925, 1.0
      %v1990 = vadd.f32 %v1926, 1.0
      %v1991 = vadd.f32 %v1927, 1.0
      %v1992 = vmul.f32 %v1800, %v1928
      %v1993 = vmul.f32 %v1801, %v1929
      %v1994 = vmul.f32 %v1802, %v1930
      %v1995 = vmul.f32 %v1803, %v1931
      %v1996 = vmul.f32 %v1804, %v1932
      %v1997 = vmul.f32 %v1805, %v1933
      %v1998 = vmul.f32 %v1806, %v1934
      %v1999 = vmul.f32 %v1807, %v1935
      %v2000 = vmul.f32 %v1808, %v1936
      %v2001 = vmul.f32 %v1809, %v1937
      %v2002 = vmul.f32 %v1810, %v1938
      %v2003 = vmul.f32 %v1811, %v1939
      %v2004 = vmul.f32 %v1812, %v1940
      %v2005 = vmul.f32 %v1813, %v1941
      %v2006 = vmul.f32 %v1814, %v1942
      %v2007 = vmul.f32 %v1815, %v1943
      %v2008 = vmul.f32 %v1816, %v1944
      %v2009 = vmul.f32 %v1817, %v1945
      %v2010 = vmul.f32 %v1818, %v1946
      %v2011 = vmul.f32 %v1819, %v1947
      %v2012 = vmul.f32 %v1820, %v1948
      %v2013 = vmul.f32 %v1821, %v1949
      %v2014 = vmul.f32 %v1822, %v1950
      %v2015 = vmul.f32 %v1823, %v1951
      %v2016 = vmul.f32 %v1824, %v1952
      %v2017 = vmul.f32 %v1825, %v1953
      %v2018 = vmul.f32 %v1826, %v1954
      %v2019 = vmul.f32 %v1827, %v1955
      %v2020 = vmul.f32 %v1828, %v1956
      %v2021 = vmul.f32 %v1829, %v1957
      %v2022 = vmul.f32 %v1830, %v1958
      %v2023 = vmul.f32 %v1831, %v1959
      %v2024 = vmul.f32 %v1832, %v1960
      %v2025 = vmul.f32 %v1833, %v1961
      %v2026 = vmul.f32 %v1834, %v1962
      %v2027 = vmul.f32 %v1835, %v1963
      %v2028 = vmul.f32 %v1836, %v1964
      %v2029 = vmul.f32 %v1837, %v1965
      %v2030 = vmul.f32 %v1838, %v1966
      %v2031 = vmul.f32 %v1839, %v1967
      %v2032 = vmul.f32 %v1840, %v1968
      %v2033 = vmul.f32 %v1841, %v1969
      %v2034 = vmul.f32 %v1842, %v1970
      %v2035 = vmul.f32 %v1843, %v1971
      %v2036 = vmul.f32 %v1844, %v1972
      %v2037 = vmul.f32 %v1845, %v1973
      %v2038 = vmul.f32 %v1846, %v1974
      %v2039 = vmul.f32 %v1847, %v1975
      %v2040 = vmul.f32 %v1848, %v1976
      %v2041 = vmul.f32 %v1849, %v1977
      %v2042 = vmul.f32 %v1850, %v1978
      %v2043 = vmul.f32 %v1851, %v1979
      %v2044 = vmul.f32 %v1852, %v1980
      %v2045 = vmul.f32 %v1853, %v1981
      %v2046 = vmul.f32 %v1854, %v1982
      %v2047 = vmul.f32 %v1855, %v1983
      %v2048 = vmul.f32 %v1856, %v1984
      %v2049 = vmul.f32 %v1857, %v1985
      %v2050 = vmul.f32 %v1858, %v1986
      %v2051 = vmul.f32 %v1859, %v1987
      %v2052 = vmul.f32 %v1860, %v1988
      %v2053 = vmul.f32 %v1861, %v1989
      %v2054 = vmul.f32 %v1862, %v1990
      %v2055 = vmul.f32 %v1863, %v1991
      %2056 = vst.msk [vmem:[#allocation2] sm:$0xff] %vm1223, %v1992
      %2057 = vst.msk [vmem:[#allocation2 + $0x8] sm:$0xff] %vm1223, %v1993
      %2058 = vst.msk [vmem:[#allocation2 + $0x10] sm:$0xff] %vm1223, %v1994
      %2059 = vst.msk [vmem:[#allocation2 + $0x18] sm:$0xff] %vm1223, %v1995
      %2060 = vst.msk [vmem:[#allocation2 + $0x20] sm:$0xff] %vm1223, %v1996
      %2061 = vst.msk [vmem:[#allocation2 + $0x28] sm:$0xff] %vm1223, %v1997
      %2062 = vst.msk [vmem:[#allocation2 + $0x30] sm:$0xff] %vm1223, %v1998
      %2063 = vst.msk [vmem:[#allocation2 + $0x38] sm:$0xff] %vm1223, %v1999
      %2064 = vst.msk [vmem:[#allocation2 + $0x40] sm:$0xff] %vm1223, %v2000
      %2065 = vst.msk [vmem:[#allocation2 + $0x48] sm:$0xff] %vm1223, %v2001
      %2066 = vst.msk [vmem:[#allocation2 + $0x50] sm:$0xff] %vm1223, %v2002
      %2067 = vst.msk [vmem:[#allocation2 + $0x58] sm:$0xff] %vm1223, %v2003
      %2068 = vst.msk [vmem:[#allocation2 + $0x60] sm:$0xff] %vm1223, %v2004
      %2069 = vst.msk [vmem:[#allocation2 + $0x68] sm:$0xff] %vm1223, %v2005
      %2070 = vst.msk [vmem:[#allocation2 + $0x70] sm:$0xff] %vm1223, %v2006
      %2071 = vst.msk [vmem:[#allocation2 + $0x78] sm:$0xff] %vm1223, %v2007
      %2072 = vst.msk [vmem:[#allocation2 + $0x80] sm:$0xff] %vm1223, %v2008
      %2073 = vst.msk [vmem:[#allocation2 + $0x88] sm:$0xff] %vm1223, %v2009
      %2074 = vst.msk [vmem:[#allocation2 + $0x90] sm:$0xff] %vm1223, %v2010
      %2075 = vst.msk [vmem:[#allocation2 + $0x98] sm:$0xff] %vm1223, %v2011
      %2076 = vst.msk [vmem:[#allocation2 + $0xa0] sm:$0xff] %vm1223, %v2012
      %2077 = vst.msk [vmem:[#allocation2 + $0xa8] sm:$0xff] %vm1223, %v2013
      %2078 = vst.msk [vmem:[#allocation2 + $0xb0] sm:$0xff] %vm1223, %v2014
      %2079 = vst.msk [vmem:[#allocation2 + $0xb8] sm:$0xff] %vm1223, %v2015
      %2080 = vst.msk [vmem:[#allocation2 + $0xc0] sm:$0xff] %vm1223, %v2016
      %2081 = vst.msk [vmem:[#allocation2 + $0xc8] sm:$0xff] %vm1223, %v2017
      %2082 = vst.msk [vmem:[#allocation2 + $0xd0] sm:$0xff] %vm1223, %v2018
      %2083 = vst.msk [vmem:[#allocation2 + $0xd8] sm:$0xff] %vm1223, %v2019
      %2084 = vst.msk [vmem:[#allocation2 + $0xe0] sm:$0xff] %vm1223, %v2020
      %2085 = vst.msk [vmem:[#allocation2 + $0xe8] sm:$0xff] %vm1223, %v2021
      %2086 = vst.msk [vmem:[#allocation2 + $0xf0] sm:$0xff] %vm1223, %v2022
      %2087 = vst.msk [vmem:[#allocation2 + $0xf8] sm:$0xff] %vm1223, %v2023
      %2088 = vst.msk [vmem:[#allocation2 + $0x100] sm:$0xff] %vm1223, %v2024
      %2089 = vst.msk [vmem:[#allocation2 + $0x108] sm:$0xff] %vm1223, %v2025
      %2090 = vst.msk [vmem:[#allocation2 + $0x110] sm:$0xff] %vm1223, %v2026
      %2091 = vst.msk [vmem:[#allocation2 + $0x118] sm:$0xff] %vm1223, %v2027
      %2092 = vst.msk [vmem:[#allocation2 + $0x120] sm:$0xff] %vm1223, %v2028
      %2093 = vst.msk [vmem:[#allocation2 + $0x128] sm:$0xff] %vm1223, %v2029
      %2094 = vst.msk [vmem:[#allocation2 + $0x130] sm:$0xff] %vm1223, %v2030
      %2095 = vst.msk [vmem:[#allocation2 + $0x138] sm:$0xff] %vm1223, %v2031
      %2096 = vst.msk [vmem:[#allocation2 + $0x140] sm:$0xff] %vm1223, %v2032
      %2097 = vst.msk [vmem:[#allocation2 + $0x148] sm:$0xff] %vm1223, %v2033
      %2098 = vst.msk [vmem:[#allocation2 + $0x150] sm:$0xff] %vm1223, %v2034
      %2099 = vst.msk [vmem:[#allocation2 + $0x158] sm:$0xff] %vm1223, %v2035
      %2100 = vst.msk [vmem:[#allocation2 + $0x160] sm:$0xff] %vm1223, %v2036
      %2101 = vst.msk [vmem:[#allocation2 + $0x168] sm:$0xff] %vm1223, %v2037
      %2102 = vst.msk [vmem:[#allocation2 + $0x170] sm:$0xff] %vm1223, %v2038
      %2103 = vst.msk [vmem:[#allocation2 + $0x178] sm:$0xff] %vm1223, %v2039
      %2104 = vst.msk [vmem:[#allocation2 + $0x180] sm:$0xff] %vm1223, %v2040
      %2105 = vst.msk [vmem:[#allocation2 + $0x188] sm:$0xff] %vm1223, %v2041
      %2106 = vst.msk [vmem:[#allocation2 + $0x190] sm:$0xff] %vm1223, %v2042
      %2107 = vst.msk [vmem:[#allocation2 + $0x198] sm:$0xff] %vm1223, %v2043
      %2108 = vst.msk [vmem:[#allocation2 + $0x1a0] sm:$0xff] %vm1223, %v2044
      %2109 = vst.msk [vmem:[#allocation2 + $0x1a8] sm:$0xff] %vm1223, %v2045
      %2110 = vst.msk [vmem:[#allocation2 + $0x1b0] sm:$0xff] %vm1223, %v2046
      %2111 = vst.msk [vmem:[#allocation2 + $0x1b8] sm:$0xff] %vm1223, %v2047
      %2112 = vst.msk [vmem:[#allocation2 + $0x1c0] sm:$0xff] %vm1223, %v2048
      %2113 = vst.msk [vmem:[#allocation2 + $0x1c8] sm:$0xff] %vm1223, %v2049
      %2114 = vst.msk [vmem:[#allocation2 + $0x1d0] sm:$0xff] %vm1223, %v2050
      %2115 = vst.msk [vmem:[#allocation2 + $0x1d8] sm:$0xff] %vm1223, %v2051
      %2116 = vst.msk [vmem:[#allocation2 + $0x1e0] sm:$0xff] %vm1223, %v2052
      %2117 = vst.msk [vmem:[#allocation2 + $0x1e8] sm:$0xff] %vm1223, %v2053
      %2118 = vst.msk [vmem:[#allocation2 + $0x1f0] sm:$0xff] %vm1223, %v2054
      %2119 = vst.msk [vmem:[#allocation2 + $0x1f8] sm:$0xff] %vm1223, %v2055
      %v2120 = vld [vmem:[#allocation2] sm:$0xff]
      %v2121 = vld [vmem:[#allocation2 + $0x8] sm:$0xff]
      %v2122 = vld [vmem:[#allocation2 + $0x10] sm:$0xff]
      %v2123 = vld [vmem:[#allocation2 + $0x18] sm:$0xff]
      %v2124 = vld [vmem:[#allocation2 + $0x20] sm:$0xff]
      %v2125 = vld [vmem:[#allocation2 + $0x28] sm:$0xff]
      %v2126 = vld [vmem:[#allocation2 + $0x30] sm:$0xff]
      %v2127 = vld [vmem:[#allocation2 + $0x38] sm:$0xff]
      %v2128 = vld [vmem:[#allocation2 + $0x40] sm:$0xff]
      %v2129 = vld [vmem:[#allocation2 + $0x48] sm:$0xff]
      %v2130 = vld [vmem:[#allocation2 + $0x50] sm:$0xff]
      %v2131 = vld [vmem:[#allocation2 + $0x58] sm:$0xff]
      %v2132 = vld [vmem:[#allocation2 + $0x60] sm:$0xff]
      %v2133 = vld [vmem:[#allocation2 + $0x68] sm:$0xff]
      %v2134 = vld [vmem:[#allocation2 + $0x70] sm:$0xff]
      %v2135 = vld [vmem:[#allocation2 + $0x78] sm:$0xff]
      %v2136 = vld [vmem:[#allocation2 + $0x80] sm:$0xff]
      %v2137 = vld [vmem:[#allocation2 + $0x88] sm:$0xff]
      %v2138 = vld [vmem:[#allocation2 + $0x90] sm:$0xff]
      %v2139 = vld [vmem:[#allocation2 + $0x98] sm:$0xff]
      %v2140 = vld [vmem:[#allocation2 + $0xa0] sm:$0xff]
      %v2141 = vld [vmem:[#allocation2 + $0xa8] sm:$0xff]
      %v2142 = vld [vmem:[#allocation2 + $0xb0] sm:$0xff]
      %v2143 = vld [vmem:[#allocation2 + $0xb8] sm:$0xff]
      %v2144 = vld [vmem:[#allocation2 + $0xc0] sm:$0xff]
      %v2145 = vld [vmem:[#allocation2 + $0xc8] sm:$0xff]
      %v2146 = vld [vmem:[#allocation2 + $0xd0] sm:$0xff]
      %v2147 = vld [vmem:[#allocation2 + $0xd8] sm:$0xff]
      %v2148 = vld [vmem:[#allocation2 + $0xe0] sm:$0xff]
      %v2149 = vld [vmem:[#allocation2 + $0xe8] sm:$0xff]
      %v2150 = vld [vmem:[#allocation2 + $0xf0] sm:$0xff]
      %v2151 = vld [vmem:[#allocation2 + $0xf8] sm:$0xff]
      %v2152 = vld [vmem:[#allocation2 + $0x100] sm:$0xff]
      %v2153 = vld [vmem:[#allocation2 + $0x108] sm:$0xff]
      %v2154 = vld [vmem:[#allocation2 + $0x110] sm:$0xff]
      %v2155 = vld [vmem:[#allocation2 + $0x118] sm:$0xff]
      %v2156 = vld [vmem:[#allocation2 + $0x120] sm:$0xff]
      %v2157 = vld [vmem:[#allocation2 + $0x128] sm:$0xff]
      %v2158 = vld [vmem:[#allocation2 + $0x130] sm:$0xff]
      %v2159 = vld [vmem:[#allocation2 + $0x138] sm:$0xff]
      %v2160 = vld [vmem:[#allocation2 + $0x140] sm:$0xff]
      %v2161 = vld [vmem:[#allocation2 + $0x148] sm:$0xff]
      %v2162 = vld [vmem:[#allocation2 + $0x150] sm:$0xff]
      %v2163 = vld [vmem:[#allocation2 + $0x158] sm:$0xff]
      %v2164 = vld [vmem:[#allocation2 + $0x160] sm:$0xff]
      %v2165 = vld [vmem:[#allocation2 + $0x168] sm:$0xff]
      %v2166 = vld [vmem:[#allocation2 + $0x170] sm:$0xff]
      %v2167 = vld [vmem:[#allocation2 + $0x178] sm:$0xff]
      %v2168 = vld [vmem:[#allocation2 + $0x180] sm:$0xff]
      %v2169 = vld [vmem:[#allocation2 + $0x188] sm:$0xff]
      %v2170 = vld [vmem:[#allocation2 + $0x190] sm:$0xff]
      %v2171 = vld [vmem:[#allocation2 + $0x198] sm:$0xff]
      %v2172 = vld [vmem:[#allocation2 + $0x1a0] sm:$0xff]
      %v2173 = vld [vmem:[#allocation2 + $0x1a8] sm:$0xff]
      %v2174 = vld [vmem:[#allocation2 + $0x1b0] sm:$0xff]
      %v2175 = vld [vmem:[#allocation2 + $0x1b8] sm:$0xff]
      %v2176 = vld [vmem:[#allocation2 + $0x1c0] sm:$0xff]
      %v2177 = vld [vmem:[#allocation2 + $0x1c8] sm:$0xff]
      %v2178 = vld [vmem:[#allocation2 + $0x1d0] sm:$0xff]
      %v2179 = vld [vmem:[#allocation2 + $0x1d8] sm:$0xff]
      %v2180 = vld [vmem:[#allocation2 + $0x1e0] sm:$0xff]
      %v2181 = vld [vmem:[#allocation2 + $0x1e8] sm:$0xff]
      %v2182 = vld [vmem:[#allocation2 + $0x1f0] sm:$0xff]
      %v2183 = vld [vmem:[#allocation2 + $0x1f8] sm:$0xff]
      %v2184 = vld [vmem:[#allocation2 + $0x1] sm:$0xff]
      %v2185 = vld [vmem:[#allocation2 + $0x9] sm:$0xff]
      %v2186 = vld [vmem:[#allocation2 + $0x11] sm:$0xff]
      %v2187 = vld [vmem:[#allocation2 + $0x19] sm:$0xff]
      %v2188 = vld [vmem:[#allocation2 + $0x21] sm:$0xff]
      %v2189 = vld [vmem:[#allocation2 + $0x29] sm:$0xff]
      %v2190 = vld [vmem:[#allocation2 + $0x31] sm:$0xff]
      %v2191 = vld [vmem:[#allocation2 + $0x39] sm:$0xff]
      %v2192 = vld [vmem:[#allocation2 + $0x41] sm:$0xff]
      %v2193 = vld [vmem:[#allocation2 + $0x49] sm:$0xff]
      %v2194 = vld [vmem:[#allocation2 + $0x51] sm:$0xff]
      %v2195 = vld [vmem:[#allocation2 + $0x59] sm:$0xff]
      %v2196 = vld [vmem:[#allocation2 + $0x61] sm:$0xff]
      %v2197 = vld [vmem:[#allocation2 + $0x69] sm:$0xff]
      %v2198 = vld [vmem:[#allocation2 + $0x71] sm:$0xff]
      %v2199 = vld [vmem:[#allocation2 + $0x79] sm:$0xff]
      %v2200 = vld [vmem:[#allocation2 + $0x81] sm:$0xff]
      %v2201 = vld [vmem:[#allocation2 + $0x89] sm:$0xff]
      %v2202 = vld [vmem:[#allocation2 + $0x91] sm:$0xff]
      %v2203 = vld [vmem:[#allocation2 + $0x99] sm:$0xff]
      %v2204 = vld [vmem:[#allocation2 + $0xa1] sm:$0xff]
      %v2205 = vld [vmem:[#allocation2 + $0xa9] sm:$0xff]
      %v2206 = vld [vmem:[#allocation2 + $0xb1] sm:$0xff]
      %v2207 = vld [vmem:[#allocation2 + $0xb9] sm:$0xff]
      %v2208 = vld [vmem:[#allocation2 + $0xc1] sm:$0xff]
      %v2209 = vld [vmem:[#allocation2 + $0xc9] sm:$0xff]
      %v2210 = vld [vmem:[#allocation2 + $0xd1] sm:$0xff]
      %v2211 = vld [vmem:[#allocation2 + $0xd9] sm:$0xff]
      %v2212 = vld [vmem:[#allocation2 + $0xe1] sm:$0xff]
      %v2213 = vld [vmem:[#allocation2 + $0xe9] sm:$0xff]
      %v2214 = vld [vmem:[#allocation2 + $0xf1] sm:$0xff]
      %v2215 = vld [vmem:[#allocation2 + $0xf9] sm:$0xff]
      %v2216 = vld [vmem:[#allocation2 + $0x101] sm:$0xff]
      %v2217 = vld [vmem:[#allocation2 + $0x109] sm:$0xff]
      %v2218 = vld [vmem:[#allocation2 + $0x111] sm:$0xff]
      %v2219 = vld [vmem:[#allocation2 + $0x119] sm:$0xff]
      %v2220 = vld [vmem:[#allocation2 + $0x121] sm:$0xff]
      %v2221 = vld [vmem:[#allocation2 + $0x129] sm:$0xff]
      %v2222 = vld [vmem:[#allocation2 + $0x131] sm:$0xff]
      %v2223 = vld [vmem:[#allocation2 + $0x139] sm:$0xff]
      %v2224 = vld [vmem:[#allocation2 + $0x141] sm:$0xff]
      %v2225 = vld [vmem:[#allocation2 + $0x149] sm:$0xff]
      %v2226 = vld [vmem:[#allocation2 + $0x151] sm:$0xff]
      %v2227 = vld [vmem:[#allocation2 + $0x159] sm:$0xff]
      %v2228 = vld [vmem:[#allocation2 + $0x161] sm:$0xff]
      %v2229 = vld [vmem:[#allocation2 + $0x169] sm:$0xff]
      %v2230 = vld [vmem:[#allocation2 + $0x171] sm:$0xff]
      %v2231 = vld [vmem:[#allocation2 + $0x179] sm:$0xff]
      %v2232 = vld [vmem:[#allocation2 + $0x181] sm:$0xff]
      %v2233 = vld [vmem:[#allocation2 + $0x189] sm:$0xff]
      %v2234 = vld [vmem:[#allocation2 + $0x191] sm:$0xff]
      %v2235 = vld [vmem:[#allocation2 + $0x199] sm:$0xff]
      %v2236 = vld [vmem:[#allocation2 + $0x1a1] sm:$0xff]
      %v2237 = vld [vmem:[#allocation2 + $0x1a9] sm:$0xff]
      %v2238 = vld [vmem:[#allocation2 + $0x1b1] sm:$0xff]
      %v2239 = vld [vmem:[#allocation2 + $0x1b9] sm:$0xff]
      %v2240 = vld [vmem:[#allocation2 + $0x1c1] sm:$0xff]
      %v2241 = vld [vmem:[#allocation2 + $0x1c9] sm:$0xff]
      %v2242 = vld [vmem:[#allocation2 + $0x1d1] sm:$0xff]
      %v2243 = vld [vmem:[#allocation2 + $0x1d9] sm:$0xff]
      %v2244 = vld [vmem:[#allocation2 + $0x1e1] sm:$0xff]
      %v2245 = vld [vmem:[#allocation2 + $0x1e9] sm:$0xff]
      %v2246 = vld [vmem:[#allocation2 + $0x1f1] sm:$0xff]
      %v2247 = vld [vmem:[#allocation2 + $0x1f9] sm:$0xff]
      %v2248 = vld [vmem:[#allocation2 + $0x200] sm:$0xff]
      %v2249 = vld [vmem:[#allocation2 + $0x201] sm:$0xff]
      %v2250 = vld [vmem:[#allocation2 + $0x208] sm:$0xff]
      %v2251 = vld [vmem:[#allocation2 + $0x210] sm:$0xff]
      %v2252 = vld [vmem:[#allocation2 + $0x218] sm:$0xff]
      %v2253 = vld [vmem:[#allocation2 + $0x220] sm:$0xff]
      %v2254 = vld [vmem:[#allocation2 + $0x228] sm:$0xff]
      %v2255 = vld [vmem:[#allocation2 + $0x230] sm:$0xff]
      %v2256 = vld [vmem:[#allocation2 + $0x238] sm:$0xff]
      %v2257 = vld [vmem:[#allocation2 + $0x209] sm:$0xff]
      %v2258 = vld [vmem:[#allocation2 + $0x211] sm:$0xff]
      %v2259 = vld [vmem:[#allocation2 + $0x219] sm:$0xff]
      %v2260 = vld [vmem:[#allocation2 + $0x221] sm:$0xff]
      %v2261 = vld [vmem:[#allocation2 + $0x229] sm:$0xff]
      %v2262 = vld [vmem:[#allocation2 + $0x231] sm:$0xff]
      %v2263 = vld [vmem:[#allocation2 + $0x239] sm:$0xff]
      %v2264 = vld [vmem:[#allocation2 + $0x240] sm:$0xff]
      %v2265 = vld [vmem:[#allocation2 + $0x241] sm:$0xff]
      %2330 = vrot.lane.b32.xlu0 %v2184, 16
      %v2331 = vpop.permute.xlu0 %2330
      %2332 = vrot.lane.b32.xlu0 %v2185, 16
      %v2333 = vpop.permute.xlu0 %2332
      %2334 = vrot.lane.b32.xlu0 %v2186, 16
      %v2335 = vpop.permute.xlu0 %2334
      %2336 = vrot.lane.b32.xlu0 %v2187, 16
      %v2337 = vpop.permute.xlu0 %2336
      %2338 = vrot.lane.b32.xlu0 %v2188, 16
      %v2339 = vpop.permute.xlu0 %2338
      %2340 = vrot.lane.b32.xlu0 %v2189, 16
      %v2341 = vpop.permute.xlu0 %2340
      %2342 = vrot.lane.b32.xlu0 %v2190, 16
      %v2343 = vpop.permute.xlu0 %2342
      %2344 = vrot.lane.b32.xlu0 %v2191, 16
      %v2345 = vpop.permute.xlu0 %2344
      %2346 = vrot.lane.b32.xlu0 %v2192, 16
      %v2347 = vpop.permute.xlu0 %2346
      %2348 = vrot.lane.b32.xlu0 %v2193, 16
      %v2349 = vpop.permute.xlu0 %2348
      %2350 = vrot.lane.b32.xlu0 %v2194, 16
      %v2351 = vpop.permute.xlu0 %2350
      %2352 = vrot.lane.b32.xlu0 %v2195, 16
      %v2353 = vpop.permute.xlu0 %2352
      %2354 = vrot.lane.b32.xlu0 %v2196, 16
      %v2355 = vpop.permute.xlu0 %2354
      %2356 = vrot.lane.b32.xlu0 %v2197, 16
      %v2357 = vpop.permute.xlu0 %2356
      %2358 = vrot.lane.b32.xlu0 %v2198, 16
      %v2359 = vpop.permute.xlu0 %2358
      %2360 = vrot.lane.b32.xlu0 %v2199, 16
      %v2361 = vpop.permute.xlu0 %2360
      %2362 = vrot.lane.b32.xlu0 %v2200, 16
      %v2363 = vpop.permute.xlu0 %2362
      %2364 = vrot.lane.b32.xlu0 %v2201, 16
      %v2365 = vpop.permute.xlu0 %2364
      %2366 = vrot.lane.b32.xlu0 %v2202, 16
      %v2367 = vpop.permute.xlu0 %2366
      %2368 = vrot.lane.b32.xlu0 %v2203, 16
      %v2369 = vpop.permute.xlu0 %2368
      %2370 = vrot.lane.b32.xlu0 %v2204, 16
      %v2371 = vpop.permute.xlu0 %2370
      %2372 = vrot.lane.b32.xlu0 %v2205, 16
      %v2373 = vpop.permute.xlu0 %2372
      %2374 = vrot.lane.b32.xlu0 %v2206, 16
      %v2375 = vpop.permute.xlu0 %2374
      %2376 = vrot.lane.b32.xlu0 %v2207, 16
      %v2377 = vpop.permute.xlu0 %2376
      %2378 = vrot.lane.b32.xlu0 %v2208, 16
      %v2379 = vpop.permute.xlu0 %2378
      %2380 = vrot.lane.b32.xlu0 %v2209, 16
      %v2381 = vpop.permute.xlu0 %2380
      %2382 = vrot.lane.b32.xlu0 %v2210, 16
      %v2383 = vpop.permute.xlu0 %2382
      %2384 = vrot.lane.b32.xlu0 %v2211, 16
      %v2385 = vpop.permute.xlu0 %2384
      %2386 = vrot.lane.b32.xlu0 %v2212, 16
      %v2387 = vpop.permute.xlu0 %2386
      %2388 = vrot.lane.b32.xlu0 %v2213, 16
      %v2389 = vpop.permute.xlu0 %2388
      %2390 = vrot.lane.b32.xlu0 %v2214, 16
      %v2391 = vpop.permute.xlu0 %2390
      %2392 = vrot.lane.b32.xlu0 %v2215, 16
      %v2393 = vpop.permute.xlu0 %2392
      %2394 = vrot.lane.b32.xlu0 %v2216, 16
      %v2395 = vpop.permute.xlu0 %2394
      %2396 = vrot.lane.b32.xlu0 %v2217, 16
      %v2397 = vpop.permute.xlu0 %2396
      %2398 = vrot.lane.b32.xlu0 %v2218, 16
      %v2399 = vpop.permute.xlu0 %2398
      %2400 = vrot.lane.b32.xlu0 %v2219, 16
      %v2401 = vpop.permute.xlu0 %2400
      %2402 = vrot.lane.b32.xlu0 %v2220, 16
      %v2403 = vpop.permute.xlu0 %2402
      %2404 = vrot.lane.b32.xlu0 %v2221, 16
      %v2405 = vpop.permute.xlu0 %2404
      %2406 = vrot.lane.b32.xlu0 %v2222, 16
      %v2407 = vpop.permute.xlu0 %2406
      %2408 = vrot.lane.b32.xlu0 %v2223, 16
      %v2409 = vpop.permute.xlu0 %2408
      %2410 = vrot.lane.b32.xlu0 %v2224, 16
      %v2411 = vpop.permute.xlu0 %2410
      %2412 = vrot.lane.b32.xlu0 %v2225, 16
      %v2413 = vpop.permute.xlu0 %2412
      %2414 = vrot.lane.b32.xlu0 %v2226, 16
      %v2415 = vpop.permute.xlu0 %2414
      %2416 = vrot.lane.b32.xlu0 %v2227, 16
      %v2417 = vpop.permute.xlu0 %2416
      %2418 = vrot.lane.b32.xlu0 %v2228, 16
      %v2419 = vpop.permute.xlu0 %2418
      %2420 = vrot.lane.b32.xlu0 %v2229, 16
      %v2421 = vpop.permute.xlu0 %2420
      %2422 = vrot.lane.b32.xlu0 %v2230, 16
      %v2423 = vpop.permute.xlu0 %2422
      %2424 = vrot.lane.b32.xlu0 %v2231, 16
      %v2425 = vpop.permute.xlu0 %2424
      %2426 = vrot.lane.b32.xlu0 %v2232, 16
      %v2427 = vpop.permute.xlu0 %2426
      %2428 = vrot.lane.b32.xlu0 %v2233, 16
      %v2429 = vpop.permute.xlu0 %2428
      %2430 = vrot.lane.b32.xlu0 %v2234, 16
      %v2431 = vpop.permute.xlu0 %2430
      %2432 = vrot.lane.b32.xlu0 %v2235, 16
      %v2433 = vpop.permute.xlu0 %2432
      %2434 = vrot.lane.b32.xlu0 %v2236, 16
      %v2435 = vpop.permute.xlu0 %2434
      %2436 = vrot.lane.b32.xlu0 %v2237, 16
      %v2437 = vpop.permute.xlu0 %2436
      %2438 = vrot.lane.b32.xlu0 %v2238, 16
      %v2439 = vpop.permute.xlu0 %2438
      %2440 = vrot.lane.b32.xlu0 %v2239, 16
      %v2441 = vpop.permute.xlu0 %2440
      %2442 = vrot.lane.b32.xlu0 %v2240, 16
      %v2443 = vpop.permute.xlu0 %2442
      %2444 = vrot.lane.b32.xlu0 %v2241, 16
      %v2445 = vpop.permute.xlu0 %2444
      %2446 = vrot.lane.b32.xlu0 %v2242, 16
      %v2447 = vpop.permute.xlu0 %2446
      %2448 = vrot.lane.b32.xlu0 %v2243, 16
      %v2449 = vpop.permute.xlu0 %2448
      %2450 = vrot.lane.b32.xlu0 %v2244, 16
      %v2451 = vpop.permute.xlu0 %2450
      %2452 = vrot.lane.b32.xlu0 %v2245, 16
      %v2453 = vpop.permute.xlu0 %2452
      %2454 = vrot.lane.b32.xlu0 %v2246, 16
      %v2455 = vpop.permute.xlu0 %2454
      %2456 = vrot.lane.b32.xlu0 %v2247, 16
      %v2457 = vpop.permute.xlu0 %2456
      %2586 = vrot.lane.b32.xlu0 %v2121, 32
      %v2587 = vpop.permute.xlu0 %2586
      %2588 = vrot.lane.b32.xlu0 %v2122, 32
      %v2589 = vpop.permute.xlu0 %2588
      %2590 = vrot.lane.b32.xlu0 %v2123, 32
      %v2591 = vpop.permute.xlu0 %2590
      %2592 = vrot.lane.b32.xlu0 %v2124, 32
      %v2593 = vpop.permute.xlu0 %2592
      %2594 = vrot.lane.b32.xlu0 %v2125, 32
      %v2595 = vpop.permute.xlu0 %2594
      %2596 = vrot.lane.b32.xlu0 %v2126, 32
      %v2597 = vpop.permute.xlu0 %2596
      %2598 = vrot.lane.b32.xlu0 %v2127, 32
      %v2599 = vpop.permute.xlu0 %2598
      %2600 = vrot.lane.b32.xlu0 %v2128, 32
      %v2601 = vpop.permute.xlu0 %2600
      %2602 = vrot.lane.b32.xlu0 %v2129, 32
      %v2603 = vpop.permute.xlu0 %2602
      %2604 = vrot.lane.b32.xlu0 %v2130, 32
      %v2605 = vpop.permute.xlu0 %2604
      %2606 = vrot.lane.b32.xlu0 %v2131, 32
      %v2607 = vpop.permute.xlu0 %2606
      %2608 = vrot.lane.b32.xlu0 %v2132, 32
      %v2609 = vpop.permute.xlu0 %2608
      %2610 = vrot.lane.b32.xlu0 %v2133, 32
      %v2611 = vpop.permute.xlu0 %2610
      %2612 = vrot.lane.b32.xlu0 %v2134, 32
      %v2613 = vpop.permute.xlu0 %2612
      %2614 = vrot.lane.b32.xlu0 %v2135, 32
      %v2615 = vpop.permute.xlu0 %2614
      %2616 = vrot.lane.b32.xlu0 %v2136, 32
      %v2617 = vpop.permute.xlu0 %2616
      %2618 = vrot.lane.b32.xlu0 %v2137, 32
      %v2619 = vpop.permute.xlu0 %2618
      %2620 = vrot.lane.b32.xlu0 %v2138, 32
      %v2621 = vpop.permute.xlu0 %2620
      %2622 = vrot.lane.b32.xlu0 %v2139, 32
      %v2623 = vpop.permute.xlu0 %2622
      %2624 = vrot.lane.b32.xlu0 %v2140, 32
      %v2625 = vpop.permute.xlu0 %2624
      %2626 = vrot.lane.b32.xlu0 %v2141, 32
      %v2627 = vpop.permute.xlu0 %2626
      %2628 = vrot.lane.b32.xlu0 %v2142, 32
      %v2629 = vpop.permute.xlu0 %2628
      %2630 = vrot.lane.b32.xlu0 %v2143, 32
      %v2631 = vpop.permute.xlu0 %2630
      %2632 = vrot.lane.b32.xlu0 %v2144, 32
      %v2633 = vpop.permute.xlu0 %2632
      %2634 = vrot.lane.b32.xlu0 %v2145, 32
      %v2635 = vpop.permute.xlu0 %2634
      %2636 = vrot.lane.b32.xlu0 %v2146, 32
      %v2637 = vpop.permute.xlu0 %2636
      %2638 = vrot.lane.b32.xlu0 %v2147, 32
      %v2639 = vpop.permute.xlu0 %2638
      %2640 = vrot.lane.b32.xlu0 %v2148, 32
      %v2641 = vpop.permute.xlu0 %2640
      %2642 = vrot.lane.b32.xlu0 %v2149, 32
      %v2643 = vpop.permute.xlu0 %2642
      %2644 = vrot.lane.b32.xlu0 %v2150, 32
      %v2645 = vpop.permute.xlu0 %2644
      %2646 = vrot.lane.b32.xlu0 %v2151, 32
      %v2647 = vpop.permute.xlu0 %2646
      %2648 = vrot.lane.b32.xlu0 %v2152, 32
      %v2649 = vpop.permute.xlu0 %2648
      %2650 = vrot.lane.b32.xlu0 %v2153, 32
      %v2651 = vpop.permute.xlu0 %2650
      %2652 = vrot.lane.b32.xlu0 %v2154, 32
      %v2653 = vpop.permute.xlu0 %2652
      %2654 = vrot.lane.b32.xlu0 %v2155, 32
      %v2655 = vpop.permute.xlu0 %2654
      %2656 = vrot.lane.b32.xlu0 %v2156, 32
      %v2657 = vpop.permute.xlu0 %2656
      %2658 = vrot.lane.b32.xlu0 %v2157, 32
      %v2659 = vpop.permute.xlu0 %2658
      %2660 = vrot.lane.b32.xlu0 %v2158, 32
      %v2661 = vpop.permute.xlu0 %2660
      %2662 = vrot.lane.b32.xlu0 %v2159, 32
      %v2663 = vpop.permute.xlu0 %2662
      %2664 = vrot.lane.b32.xlu0 %v2160, 32
      %v2665 = vpop.permute.xlu0 %2664
      %2666 = vrot.lane.b32.xlu0 %v2161, 32
      %v2667 = vpop.permute.xlu0 %2666
      %2668 = vrot.lane.b32.xlu0 %v2162, 32
      %v2669 = vpop.permute.xlu0 %2668
      %2670 = vrot.lane.b32.xlu0 %v2163, 32
      %v2671 = vpop.permute.xlu0 %2670
      %2672 = vrot.lane.b32.xlu0 %v2164, 32
      %v2673 = vpop.permute.xlu0 %2672
      %2674 = vrot.lane.b32.xlu0 %v2165, 32
      %v2675 = vpop.permute.xlu0 %2674
      %2676 = vrot.lane.b32.xlu0 %v2166, 32
      %v2677 = vpop.permute.xlu0 %2676
      %2678 = vrot.lane.b32.xlu0 %v2167, 32
      %v2679 = vpop.permute.xlu0 %2678
      %2680 = vrot.lane.b32.xlu0 %v2168, 32
      %v2681 = vpop.permute.xlu0 %2680
      %2682 = vrot.lane.b32.xlu0 %v2169, 32
      %v2683 = vpop.permute.xlu0 %2682
      %2684 = vrot.lane.b32.xlu0 %v2170, 32
      %v2685 = vpop.permute.xlu0 %2684
      %2686 = vrot.lane.b32.xlu0 %v2171, 32
      %v2687 = vpop.permute.xlu0 %2686
      %2688 = vrot.lane.b32.xlu0 %v2172, 32
      %v2689 = vpop.permute.xlu0 %2688
      %2690 = vrot.lane.b32.xlu0 %v2173, 32
      %v2691 = vpop.permute.xlu0 %2690
      %2692 = vrot.lane.b32.xlu0 %v2174, 32
      %v2693 = vpop.permute.xlu0 %2692
      %2694 = vrot.lane.b32.xlu0 %v2175, 32
      %v2695 = vpop.permute.xlu0 %2694
      %2696 = vrot.lane.b32.xlu0 %v2176, 32
      %v2697 = vpop.permute.xlu0 %2696
      %2698 = vrot.lane.b32.xlu0 %v2177, 32
      %v2699 = vpop.permute.xlu0 %2698
      %2700 = vrot.lane.b32.xlu0 %v2178, 32
      %v2701 = vpop.permute.xlu0 %2700
      %2702 = vrot.lane.b32.xlu0 %v2179, 32
      %v2703 = vpop.permute.xlu0 %2702
      %2704 = vrot.lane.b32.xlu0 %v2180, 32
      %v2705 = vpop.permute.xlu0 %2704
      %2706 = vrot.lane.b32.xlu0 %v2181, 32
      %v2707 = vpop.permute.xlu0 %2706
      %2708 = vrot.lane.b32.xlu0 %v2182, 32
      %v2709 = vpop.permute.xlu0 %2708
      %2710 = vrot.lane.b32.xlu0 %v2183, 32
      %v2711 = vpop.permute.xlu0 %2710
      %2712 = vrot.lane.b32.xlu0 %v2248, 32
      %v2713 = vpop.permute.xlu0 %2712
      %2779 = vrot.lane.b32.xlu0 %v2185, 48
      %v2780 = vpop.permute.xlu0 %2779
      %2781 = vrot.lane.b32.xlu0 %v2186, 48
      %v2782 = vpop.permute.xlu0 %2781
      %2783 = vrot.lane.b32.xlu0 %v2187, 48
      %v2784 = vpop.permute.xlu0 %2783
      %2785 = vrot.lane.b32.xlu0 %v2188, 48
      %v2786 = vpop.permute.xlu0 %2785
      %2787 = vrot.lane.b32.xlu0 %v2189, 48
      %v2788 = vpop.permute.xlu0 %2787
      %2789 = vrot.lane.b32.xlu0 %v2190, 48
      %v2790 = vpop.permute.xlu0 %2789
      %2791 = vrot.lane.b32.xlu0 %v2191, 48
      %v2792 = vpop.permute.xlu0 %2791
      %2793 = vrot.lane.b32.xlu0 %v2192, 48
      %v2794 = vpop.permute.xlu0 %2793
      %2795 = vrot.lane.b32.xlu0 %v2193, 48
      %v2796 = vpop.permute.xlu0 %2795
      %2797 = vrot.lane.b32.xlu0 %v2194, 48
      %v2798 = vpop.permute.xlu0 %2797
      %2799 = vrot.lane.b32.xlu0 %v2195, 48
      %v2800 = vpop.permute.xlu0 %2799
      %2801 = vrot.lane.b32.xlu0 %v2196, 48
      %v2802 = vpop.permute.xlu0 %2801
      %2803 = vrot.lane.b32.xlu0 %v2197, 48
      %v2804 = vpop.permute.xlu0 %2803
      %2805 = vrot.lane.b32.xlu0 %v2198, 48
      %v2806 = vpop.permute.xlu0 %2805
      %2807 = vrot.lane.b32.xlu0 %v2199, 48
      %v2808 = vpop.permute.xlu0 %2807
      %2809 = vrot.lane.b32.xlu0 %v2200, 48
      %v2810 = vpop.permute.xlu0 %2809
      %2811 = vrot.lane.b32.xlu0 %v2201, 48
      %v2812 = vpop.permute.xlu0 %2811
      %2813 = vrot.lane.b32.xlu0 %v2202, 48
      %v2814 = vpop.permute.xlu0 %2813
      %2815 = vrot.lane.b32.xlu0 %v2203, 48
      %v2816 = vpop.permute.xlu0 %2815
      %2817 = vrot.lane.b32.xlu0 %v2204, 48
      %v2818 = vpop.permute.xlu0 %2817
      %2819 = vrot.lane.b32.xlu0 %v2205, 48
      %v2820 = vpop.permute.xlu0 %2819
      %2821 = vrot.lane.b32.xlu0 %v2206, 48
      %v2822 = vpop.permute.xlu0 %2821
      %2823 = vrot.lane.b32.xlu0 %v2207, 48
      %v2824 = vpop.permute.xlu0 %2823
      %2825 = vrot.lane.b32.xlu0 %v2208, 48
      %v2826 = vpop.permute.xlu0 %2825
      %2827 = vrot.lane.b32.xlu0 %v2209, 48
      %v2828 = vpop.permute.xlu0 %2827
      %2829 = vrot.lane.b32.xlu0 %v2210, 48
      %v2830 = vpop.permute.xlu0 %2829
      %2831 = vrot.lane.b32.xlu0 %v2211, 48
      %v2832 = vpop.permute.xlu0 %2831
      %2833 = vrot.lane.b32.xlu0 %v2212, 48
      %v2834 = vpop.permute.xlu0 %2833
      %2835 = vrot.lane.b32.xlu0 %v2213, 48
      %v2836 = vpop.permute.xlu0 %2835
      %2837 = vrot.lane.b32.xlu0 %v2214, 48
      %v2838 = vpop.permute.xlu0 %2837
      %2839 = vrot.lane.b32.xlu0 %v2215, 48
      %v2840 = vpop.permute.xlu0 %2839
      %2841 = vrot.lane.b32.xlu0 %v2216, 48
      %v2842 = vpop.permute.xlu0 %2841
      %2843 = vrot.lane.b32.xlu0 %v2217, 48
      %v2844 = vpop.permute.xlu0 %2843
      %2845 = vrot.lane.b32.xlu0 %v2218, 48
      %v2846 = vpop.permute.xlu0 %2845
      %2847 = vrot.lane.b32.xlu0 %v2219, 48
      %v2848 = vpop.permute.xlu0 %2847
      %2849 = vrot.lane.b32.xlu0 %v2220, 48
      %v2850 = vpop.permute.xlu0 %2849
      %2851 = vrot.lane.b32.xlu0 %v2221, 48
      %v2852 = vpop.permute.xlu0 %2851
      %2853 = vrot.lane.b32.xlu0 %v2222, 48
      %v2854 = vpop.permute.xlu0 %2853
      %2855 = vrot.lane.b32.xlu0 %v2223, 48
      %v2856 = vpop.permute.xlu0 %2855
      %2857 = vrot.lane.b32.xlu0 %v2224, 48
      %v2858 = vpop.permute.xlu0 %2857
      %2859 = vrot.lane.b32.xlu0 %v2225, 48
      %v2860 = vpop.permute.xlu0 %2859
      %2861 = vrot.lane.b32.xlu0 %v2226, 48
      %v2862 = vpop.permute.xlu0 %2861
      %2863 = vrot.lane.b32.xlu0 %v2227, 48
      %v2864 = vpop.permute.xlu0 %2863
      %2865 = vrot.lane.b32.xlu0 %v2228, 48
      %v2866 = vpop.permute.xlu0 %2865
      %2867 = vrot.lane.b32.xlu0 %v2229, 48
      %v2868 = vpop.permute.xlu0 %2867
      %2869 = vrot.lane.b32.xlu0 %v2230, 48
      %v2870 = vpop.permute.xlu0 %2869
      %2871 = vrot.lane.b32.xlu0 %v2231, 48
      %v2872 = vpop.permute.xlu0 %2871
      %2873 = vrot.lane.b32.xlu0 %v2232, 48
      %v2874 = vpop.permute.xlu0 %2873
      %2875 = vrot.lane.b32.xlu0 %v2233, 48
      %v2876 = vpop.permute.xlu0 %2875
      %2877 = vrot.lane.b32.xlu0 %v2234, 48
      %v2878 = vpop.permute.xlu0 %2877
      %2879 = vrot.lane.b32.xlu0 %v2235, 48
      %v2880 = vpop.permute.xlu0 %2879
      %2881 = vrot.lane.b32.xlu0 %v2236, 48
      %v2882 = vpop.permute.xlu0 %2881
      %2883 = vrot.lane.b32.xlu0 %v2237, 48
      %v2884 = vpop.permute.xlu0 %2883
      %2885 = vrot.lane.b32.xlu0 %v2238, 48
      %v2886 = vpop.permute.xlu0 %2885
      %2887 = vrot.lane.b32.xlu0 %v2239, 48
      %v2888 = vpop.permute.xlu0 %2887
      %2889 = vrot.lane.b32.xlu0 %v2240, 48
      %v2890 = vpop.permute.xlu0 %2889
      %2891 = vrot.lane.b32.xlu0 %v2241, 48
      %v2892 = vpop.permute.xlu0 %2891
      %2893 = vrot.lane.b32.xlu0 %v2242, 48
      %v2894 = vpop.permute.xlu0 %2893
      %2895 = vrot.lane.b32.xlu0 %v2243, 48
      %v2896 = vpop.permute.xlu0 %2895
      %2897 = vrot.lane.b32.xlu0 %v2244, 48
      %v2898 = vpop.permute.xlu0 %2897
      %2899 = vrot.lane.b32.xlu0 %v2245, 48
      %v2900 = vpop.permute.xlu0 %2899
      %2901 = vrot.lane.b32.xlu0 %v2246, 48
      %v2902 = vpop.permute.xlu0 %2901
      %2903 = vrot.lane.b32.xlu0 %v2247, 48
      %v2904 = vpop.permute.xlu0 %2903
      %2905 = vrot.lane.b32.xlu0 %v2249, 48
      %v2906 = vpop.permute.xlu0 %2905
      %2978 = vrot.lane.b32.xlu0 %v2128, 64
      %v2979 = vpop.permute.xlu0 %2978
      %2980 = vrot.lane.b32.xlu0 %v2129, 64
      %v2981 = vpop.permute.xlu0 %2980
      %2982 = vrot.lane.b32.xlu0 %v2130, 64
      %v2983 = vpop.permute.xlu0 %2982
      %2984 = vrot.lane.b32.xlu0 %v2131, 64
      %v2985 = vpop.permute.xlu0 %2984
      %2986 = vrot.lane.b32.xlu0 %v2132, 64
      %v2987 = vpop.permute.xlu0 %2986
      %2988 = vrot.lane.b32.xlu0 %v2133, 64
      %v2989 = vpop.permute.xlu0 %2988
      %2990 = vrot.lane.b32.xlu0 %v2134, 64
      %v2991 = vpop.permute.xlu0 %2990
      %2992 = vrot.lane.b32.xlu0 %v2135, 64
      %v2993 = vpop.permute.xlu0 %2992
      %2994 = vrot.lane.b32.xlu0 %v2136, 64
      %v2995 = vpop.permute.xlu0 %2994
      %2996 = vrot.lane.b32.xlu0 %v2137, 64
      %v2997 = vpop.permute.xlu0 %2996
      %2998 = vrot.lane.b32.xlu0 %v2138, 64
      %v2999 = vpop.permute.xlu0 %2998
      %3000 = vrot.lane.b32.xlu0 %v2139, 64
      %v3001 = vpop.permute.xlu0 %3000
      %3002 = vrot.lane.b32.xlu0 %v2140, 64
      %v3003 = vpop.permute.xlu0 %3002
      %3004 = vrot.lane.b32.xlu0 %v2141, 64
      %v3005 = vpop.permute.xlu0 %3004
      %3006 = vrot.lane.b32.xlu0 %v2142, 64
      %v3007 = vpop.permute.xlu0 %3006
      %3008 = vrot.lane.b32.xlu0 %v2143, 64
      %v3009 = vpop.permute.xlu0 %3008
      %3010 = vrot.lane.b32.xlu0 %v2144, 64
      %v3011 = vpop.permute.xlu0 %3010
      %3012 = vrot.lane.b32.xlu0 %v2145, 64
      %v3013 = vpop.permute.xlu0 %3012
      %3014 = vrot.lane.b32.xlu0 %v2146, 64
      %v3015 = vpop.permute.xlu0 %3014
      %3016 = vrot.lane.b32.xlu0 %v2147, 64
      %v3017 = vpop.permute.xlu0 %3016
      %3018 = vrot.lane.b32.xlu0 %v2148, 64
      %v3019 = vpop.permute.xlu0 %3018
      %3020 = vrot.lane.b32.xlu0 %v2149, 64
      %v3021 = vpop.permute.xlu0 %3020
      %3022 = vrot.lane.b32.xlu0 %v2150, 64
      %v3023 = vpop.permute.xlu0 %3022
      %3024 = vrot.lane.b32.xlu0 %v2151, 64
      %v3025 = vpop.permute.xlu0 %3024
      %3026 = vrot.lane.b32.xlu0 %v2152, 64
      %v3027 = vpop.permute.xlu0 %3026
      %3028 = vrot.lane.b32.xlu0 %v2153, 64
      %v3029 = vpop.permute.xlu0 %3028
      %3030 = vrot.lane.b32.xlu0 %v2154, 64
      %v3031 = vpop.permute.xlu0 %3030
      %3032 = vrot.lane.b32.xlu0 %v2155, 64
      %v3033 = vpop.permute.xlu0 %3032
      %3034 = vrot.lane.b32.xlu0 %v2156, 64
      %v3035 = vpop.permute.xlu0 %3034
      %3036 = vrot.lane.b32.xlu0 %v2157, 64
      %v3037 = vpop.permute.xlu0 %3036
      %3038 = vrot.lane.b32.xlu0 %v2158, 64
      %v3039 = vpop.permute.xlu0 %3038
      %3040 = vrot.lane.b32.xlu0 %v2159, 64
      %v3041 = vpop.permute.xlu0 %3040
      %3042 = vrot.lane.b32.xlu0 %v2160, 64
      %v3043 = vpop.permute.xlu0 %3042
      %3044 = vrot.lane.b32.xlu0 %v2161, 64
      %v3045 = vpop.permute.xlu0 %3044
      %3046 = vrot.lane.b32.xlu0 %v2162, 64
      %v3047 = vpop.permute.xlu0 %3046
      %3048 = vrot.lane.b32.xlu0 %v2163, 64
      %v3049 = vpop.permute.xlu0 %3048
      %3050 = vrot.lane.b32.xlu0 %v2164, 64
      %v3051 = vpop.permute.xlu0 %3050
      %3052 = vrot.lane.b32.xlu0 %v2165, 64
      %v3053 = vpop.permute.xlu0 %3052
      %3054 = vrot.lane.b32.xlu0 %v2166, 64
      %v3055 = vpop.permute.xlu0 %3054
      %3056 = vrot.lane.b32.xlu0 %v2167, 64
      %v3057 = vpop.permute.xlu0 %3056
      %3058 = vrot.lane.b32.xlu0 %v2168, 64
      %v3059 = vpop.permute.xlu0 %3058
      %3060 = vrot.lane.b32.xlu0 %v2169, 64
      %v3061 = vpop.permute.xlu0 %3060
      %3062 = vrot.lane.b32.xlu0 %v2170, 64
      %v3063 = vpop.permute.xlu0 %3062
      %3064 = vrot.lane.b32.xlu0 %v2171, 64
      %v3065 = vpop.permute.xlu0 %3064
      %3066 = vrot.lane.b32.xlu0 %v2172, 64
      %v3067 = vpop.permute.xlu0 %3066
      %3068 = vrot.lane.b32.xlu0 %v2173, 64
      %v3069 = vpop.permute.xlu0 %3068
      %3070 = vrot.lane.b32.xlu0 %v2174, 64
      %v3071 = vpop.permute.xlu0 %3070
      %3072 = vrot.lane.b32.xlu0 %v2175, 64
      %v3073 = vpop.permute.xlu0 %3072
      %3074 = vrot.lane.b32.xlu0 %v2176, 64
      %v3075 = vpop.permute.xlu0 %3074
      %3076 = vrot.lane.b32.xlu0 %v2177, 64
      %v3077 = vpop.permute.xlu0 %3076
      %3078 = vrot.lane.b32.xlu0 %v2178, 64
      %v3079 = vpop.permute.xlu0 %3078
      %3080 = vrot.lane.b32.xlu0 %v2179, 64
      %v3081 = vpop.permute.xlu0 %3080
      %3082 = vrot.lane.b32.xlu0 %v2180, 64
      %v3083 = vpop.permute.xlu0 %3082
      %3084 = vrot.lane.b32.xlu0 %v2181, 64
      %v3085 = vpop.permute.xlu0 %3084
      %3086 = vrot.lane.b32.xlu0 %v2182, 64
      %v3087 = vpop.permute.xlu0 %3086
      %3088 = vrot.lane.b32.xlu0 %v2183, 64
      %v3089 = vpop.permute.xlu0 %3088
      %3090 = vrot.lane.b32.xlu0 %v2248, 64
      %v3091 = vpop.permute.xlu0 %3090
      %3092 = vrot.lane.b32.xlu0 %v2250, 64
      %v3093 = vpop.permute.xlu0 %3092
      %3094 = vrot.lane.b32.xlu0 %v2251, 64
      %v3095 = vpop.permute.xlu0 %3094
      %3096 = vrot.lane.b32.xlu0 %v2252, 64
      %v3097 = vpop.permute.xlu0 %3096
      %3098 = vrot.lane.b32.xlu0 %v2253, 64
      %v3099 = vpop.permute.xlu0 %3098
      %3100 = vrot.lane.b32.xlu0 %v2254, 64
      %v3101 = vpop.permute.xlu0 %3100
      %3102 = vrot.lane.b32.xlu0 %v2255, 64
      %v3103 = vpop.permute.xlu0 %3102
      %3104 = vrot.lane.b32.xlu0 %v2256, 64
      %v3105 = vpop.permute.xlu0 %3104
      %3177 = vrot.lane.b32.xlu0 %v2192, 80
      %v3178 = vpop.permute.xlu0 %3177
      %3179 = vrot.lane.b32.xlu0 %v2193, 80
      %v3180 = vpop.permute.xlu0 %3179
      %3181 = vrot.lane.b32.xlu0 %v2194, 80
      %v3182 = vpop.permute.xlu0 %3181
      %3183 = vrot.lane.b32.xlu0 %v2195, 80
      %v3184 = vpop.permute.xlu0 %3183
      %3185 = vrot.lane.b32.xlu0 %v2196, 80
      %v3186 = vpop.permute.xlu0 %3185
      %3187 = vrot.lane.b32.xlu0 %v2197, 80
      %v3188 = vpop.permute.xlu0 %3187
      %3189 = vrot.lane.b32.xlu0 %v2198, 80
      %v3190 = vpop.permute.xlu0 %3189
      %3191 = vrot.lane.b32.xlu0 %v2199, 80
      %v3192 = vpop.permute.xlu0 %3191
      %3193 = vrot.lane.b32.xlu0 %v2200, 80
      %v3194 = vpop.permute.xlu0 %3193
      %3195 = vrot.lane.b32.xlu0 %v2201, 80
      %v3196 = vpop.permute.xlu0 %3195
      %3197 = vrot.lane.b32.xlu0 %v2202, 80
      %v3198 = vpop.permute.xlu0 %3197
      %3199 = vrot.lane.b32.xlu0 %v2203, 80
      %v3200 = vpop.permute.xlu0 %3199
      %3201 = vrot.lane.b32.xlu0 %v2204, 80
      %v3202 = vpop.permute.xlu0 %3201
      %3203 = vrot.lane.b32.xlu0 %v2205, 80
      %v3204 = vpop.permute.xlu0 %3203
      %3205 = vrot.lane.b32.xlu0 %v2206, 80
      %v3206 = vpop.permute.xlu0 %3205
      %3207 = vrot.lane.b32.xlu0 %v2207, 80
      %v3208 = vpop.permute.xlu0 %3207
      %3209 = vrot.lane.b32.xlu0 %v2208, 80
      %v3210 = vpop.permute.xlu0 %3209
      %3211 = vrot.lane.b32.xlu0 %v2209, 80
      %v3212 = vpop.permute.xlu0 %3211
      %3213 = vrot.lane.b32.xlu0 %v2210, 80
      %v3214 = vpop.permute.xlu0 %3213
      %3215 = vrot.lane.b32.xlu0 %v2211, 80
      %v3216 = vpop.permute.xlu0 %3215
      %3217 = vrot.lane.b32.xlu0 %v2212, 80
      %v3218 = vpop.permute.xlu0 %3217
      %3219 = vrot.lane.b32.xlu0 %v2213, 80
      %v3220 = vpop.permute.xlu0 %3219
      %3221 = vrot.lane.b32.xlu0 %v2214, 80
      %v3222 = vpop.permute.xlu0 %3221
      %3223 = vrot.lane.b32.xlu0 %v2215, 80
      %v3224 = vpop.permute.xlu0 %3223
      %3225 = vrot.lane.b32.xlu0 %v2216, 80
      %v3226 = vpop.permute.xlu0 %3225
      %3227 = vrot.lane.b32.xlu0 %v2217, 80
      %v3228 = vpop.permute.xlu0 %3227
      %3229 = vrot.lane.b32.xlu0 %v2218, 80
      %v3230 = vpop.permute.xlu0 %3229
      %3231 = vrot.lane.b32.xlu0 %v2219, 80
      %v3232 = vpop.permute.xlu0 %3231
      %3233 = vrot.lane.b32.xlu0 %v2220, 80
      %v3234 = vpop.permute.xlu0 %3233
      %3235 = vrot.lane.b32.xlu0 %v2221, 80
      %v3236 = vpop.permute.xlu0 %3235
      %3237 = vrot.lane.b32.xlu0 %v2222, 80
      %v3238 = vpop.permute.xlu0 %3237
      %3239 = vrot.lane.b32.xlu0 %v2223, 80
      %v3240 = vpop.permute.xlu0 %3239
      %3241 = vrot.lane.b32.xlu0 %v2224, 80
      %v3242 = vpop.permute.xlu0 %3241
      %3243 = vrot.lane.b32.xlu0 %v2225, 80
      %v3244 = vpop.permute.xlu0 %3243
      %3245 = vrot.lane.b32.xlu0 %v2226, 80
      %v3246 = vpop.permute.xlu0 %3245
      %3247 = vrot.lane.b32.xlu0 %v2227, 80
      %v3248 = vpop.permute.xlu0 %3247
      %3249 = vrot.lane.b32.xlu0 %v2228, 80
      %v3250 = vpop.permute.xlu0 %3249
      %3251 = vrot.lane.b32.xlu0 %v2229, 80
      %v3252 = vpop.permute.xlu0 %3251
      %3253 = vrot.lane.b32.xlu0 %v2230, 80
      %v3254 = vpop.permute.xlu0 %3253
      %3255 = vrot.lane.b32.xlu0 %v2231, 80
      %v3256 = vpop.permute.xlu0 %3255
      %3257 = vrot.lane.b32.xlu0 %v2232, 80
      %v3258 = vpop.permute.xlu0 %3257
      %3259 = vrot.lane.b32.xlu0 %v2233, 80
      %v3260 = vpop.permute.xlu0 %3259
      %3261 = vrot.lane.b32.xlu0 %v2234, 80
      %v3262 = vpop.permute.xlu0 %3261
      %3263 = vrot.lane.b32.xlu0 %v2235, 80
      %v3264 = vpop.permute.xlu0 %3263
      %3265 = vrot.lane.b32.xlu0 %v2236, 80
      %v3266 = vpop.permute.xlu0 %3265
      %3267 = vrot.lane.b32.xlu0 %v2237, 80
      %v3268 = vpop.permute.xlu0 %3267
      %3269 = vrot.lane.b32.xlu0 %v2238, 80
      %v3270 = vpop.permute.xlu0 %3269
      %3271 = vrot.lane.b32.xlu0 %v2239, 80
      %v3272 = vpop.permute.xlu0 %3271
      %3273 = vrot.lane.b32.xlu0 %v2240, 80
      %v3274 = vpop.permute.xlu0 %3273
      %3275 = vrot.lane.b32.xlu0 %v2241, 80
      %v3276 = vpop.permute.xlu0 %3275
      %3277 = vrot.lane.b32.xlu0 %v2242, 80
      %v3278 = vpop.permute.xlu0 %3277
      %3279 = vrot.lane.b32.xlu0 %v2243, 80
      %v3280 = vpop.permute.xlu0 %3279
      %3281 = vrot.lane.b32.xlu0 %v2244, 80
      %v3282 = vpop.permute.xlu0 %3281
      %3283 = vrot.lane.b32.xlu0 %v2245, 80
      %v3284 = vpop.permute.xlu0 %3283
      %3285 = vrot.lane.b32.xlu0 %v2246, 80
      %v3286 = vpop.permute.xlu0 %3285
      %3287 = vrot.lane.b32.xlu0 %v2247, 80
      %v3288 = vpop.permute.xlu0 %3287
      %3289 = vrot.lane.b32.xlu0 %v2249, 80
      %v3290 = vpop.permute.xlu0 %3289
      %3291 = vrot.lane.b32.xlu0 %v2257, 80
      %v3292 = vpop.permute.xlu0 %3291
      %3293 = vrot.lane.b32.xlu0 %v2258, 80
      %v3294 = vpop.permute.xlu0 %3293
      %3295 = vrot.lane.b32.xlu0 %v2259, 80
      %v3296 = vpop.permute.xlu0 %3295
      %3297 = vrot.lane.b32.xlu0 %v2260, 80
      %v3298 = vpop.permute.xlu0 %3297
      %3299 = vrot.lane.b32.xlu0 %v2261, 80
      %v3300 = vpop.permute.xlu0 %3299
      %3301 = vrot.lane.b32.xlu0 %v2262, 80
      %v3302 = vpop.permute.xlu0 %3301
      %3303 = vrot.lane.b32.xlu0 %v2263, 80
      %v3304 = vpop.permute.xlu0 %3303
      %3370 = vrot.lane.b32.xlu0 %v2129, 96
      %v3371 = vpop.permute.xlu0 %3370
      %3372 = vrot.lane.b32.xlu0 %v2130, 96
      %v3373 = vpop.permute.xlu0 %3372
      %3374 = vrot.lane.b32.xlu0 %v2131, 96
      %v3375 = vpop.permute.xlu0 %3374
      %3376 = vrot.lane.b32.xlu0 %v2132, 96
      %v3377 = vpop.permute.xlu0 %3376
      %3378 = vrot.lane.b32.xlu0 %v2133, 96
      %v3379 = vpop.permute.xlu0 %3378
      %3380 = vrot.lane.b32.xlu0 %v2134, 96
      %v3381 = vpop.permute.xlu0 %3380
      %3382 = vrot.lane.b32.xlu0 %v2135, 96
      %v3383 = vpop.permute.xlu0 %3382
      %3384 = vrot.lane.b32.xlu0 %v2136, 96
      %v3385 = vpop.permute.xlu0 %3384
      %3386 = vrot.lane.b32.xlu0 %v2137, 96
      %v3387 = vpop.permute.xlu0 %3386
      %3388 = vrot.lane.b32.xlu0 %v2138, 96
      %v3389 = vpop.permute.xlu0 %3388
      %3390 = vrot.lane.b32.xlu0 %v2139, 96
      %v3391 = vpop.permute.xlu0 %3390
      %3392 = vrot.lane.b32.xlu0 %v2140, 96
      %v3393 = vpop.permute.xlu0 %3392
      %3394 = vrot.lane.b32.xlu0 %v2141, 96
      %v3395 = vpop.permute.xlu0 %3394
      %3396 = vrot.lane.b32.xlu0 %v2142, 96
      %v3397 = vpop.permute.xlu0 %3396
      %3398 = vrot.lane.b32.xlu0 %v2143, 96
      %v3399 = vpop.permute.xlu0 %3398
      %3400 = vrot.lane.b32.xlu0 %v2144, 96
      %v3401 = vpop.permute.xlu0 %3400
      %3402 = vrot.lane.b32.xlu0 %v2145, 96
      %v3403 = vpop.permute.xlu0 %3402
      %3404 = vrot.lane.b32.xlu0 %v2146, 96
      %v3405 = vpop.permute.xlu0 %3404
      %3406 = vrot.lane.b32.xlu0 %v2147, 96
      %v3407 = vpop.permute.xlu0 %3406
      %3408 = vrot.lane.b32.xlu0 %v2148, 96
      %v3409 = vpop.permute.xlu0 %3408
      %3410 = vrot.lane.b32.xlu0 %v2149, 96
      %v3411 = vpop.permute.xlu0 %3410
      %3412 = vrot.lane.b32.xlu0 %v2150, 96
      %v3413 = vpop.permute.xlu0 %3412
      %3414 = vrot.lane.b32.xlu0 %v2151, 96
      %v3415 = vpop.permute.xlu0 %3414
      %3416 = vrot.lane.b32.xlu0 %v2152, 96
      %v3417 = vpop.permute.xlu0 %3416
      %3418 = vrot.lane.b32.xlu0 %v2153, 96
      %v3419 = vpop.permute.xlu0 %3418
      %3420 = vrot.lane.b32.xlu0 %v2154, 96
      %v3421 = vpop.permute.xlu0 %3420
      %3422 = vrot.lane.b32.xlu0 %v2155, 96
      %v3423 = vpop.permute.xlu0 %3422
      %3424 = vrot.lane.b32.xlu0 %v2156, 96
      %v3425 = vpop.permute.xlu0 %3424
      %3426 = vrot.lane.b32.xlu0 %v2157, 96
      %v3427 = vpop.permute.xlu0 %3426
      %3428 = vrot.lane.b32.xlu0 %v2158, 96
      %v3429 = vpop.permute.xlu0 %3428
      %3430 = vrot.lane.b32.xlu0 %v2159, 96
      %v3431 = vpop.permute.xlu0 %3430
      %3432 = vrot.lane.b32.xlu0 %v2160, 96
      %v3433 = vpop.permute.xlu0 %3432
      %3434 = vrot.lane.b32.xlu0 %v2161, 96
      %v3435 = vpop.permute.xlu0 %3434
      %3436 = vrot.lane.b32.xlu0 %v2162, 96
      %v3437 = vpop.permute.xlu0 %3436
      %3438 = vrot.lane.b32.xlu0 %v2163, 96
      %v3439 = vpop.permute.xlu0 %3438
      %3440 = vrot.lane.b32.xlu0 %v2164, 96
      %v3441 = vpop.permute.xlu0 %3440
      %3442 = vrot.lane.b32.xlu0 %v2165, 96
      %v3443 = vpop.permute.xlu0 %3442
      %3444 = vrot.lane.b32.xlu0 %v2166, 96
      %v3445 = vpop.permute.xlu0 %3444
      %3446 = vrot.lane.b32.xlu0 %v2167, 96
      %v3447 = vpop.permute.xlu0 %3446
      %3448 = vrot.lane.b32.xlu0 %v2168, 96
      %v3449 = vpop.permute.xlu0 %3448
      %3450 = vrot.lane.b32.xlu0 %v2169, 96
      %v3451 = vpop.permute.xlu0 %3450
      %3452 = vrot.lane.b32.xlu0 %v2170, 96
      %v3453 = vpop.permute.xlu0 %3452
      %3454 = vrot.lane.b32.xlu0 %v2171, 96
      %v3455 = vpop.permute.xlu0 %3454
      %3456 = vrot.lane.b32.xlu0 %v2172, 96
      %v3457 = vpop.permute.xlu0 %3456
      %3458 = vrot.lane.b32.xlu0 %v2173, 96
      %v3459 = vpop.permute.xlu0 %3458
      %3460 = vrot.lane.b32.xlu0 %v2174, 96
      %v3461 = vpop.permute.xlu0 %3460
      %3462 = vrot.lane.b32.xlu0 %v2175, 96
      %v3463 = vpop.permute.xlu0 %3462
      %3464 = vrot.lane.b32.xlu0 %v2176, 96
      %v3465 = vpop.permute.xlu0 %3464
      %3466 = vrot.lane.b32.xlu0 %v2177, 96
      %v3467 = vpop.permute.xlu0 %3466
      %3468 = vrot.lane.b32.xlu0 %v2178, 96
      %v3469 = vpop.permute.xlu0 %3468
      %3470 = vrot.lane.b32.xlu0 %v2179, 96
      %v3471 = vpop.permute.xlu0 %3470
      %3472 = vrot.lane.b32.xlu0 %v2180, 96
      %v3473 = vpop.permute.xlu0 %3472
      %3474 = vrot.lane.b32.xlu0 %v2181, 96
      %v3475 = vpop.permute.xlu0 %3474
      %3476 = vrot.lane.b32.xlu0 %v2182, 96
      %v3477 = vpop.permute.xlu0 %3476
      %3478 = vrot.lane.b32.xlu0 %v2183, 96
      %v3479 = vpop.permute.xlu0 %3478
      %3480 = vrot.lane.b32.xlu0 %v2248, 96
      %v3481 = vpop.permute.xlu0 %3480
      %3482 = vrot.lane.b32.xlu0 %v2250, 96
      %v3483 = vpop.permute.xlu0 %3482
      %3484 = vrot.lane.b32.xlu0 %v2251, 96
      %v3485 = vpop.permute.xlu0 %3484
      %3486 = vrot.lane.b32.xlu0 %v2252, 96
      %v3487 = vpop.permute.xlu0 %3486
      %3488 = vrot.lane.b32.xlu0 %v2253, 96
      %v3489 = vpop.permute.xlu0 %3488
      %3490 = vrot.lane.b32.xlu0 %v2254, 96
      %v3491 = vpop.permute.xlu0 %3490
      %3492 = vrot.lane.b32.xlu0 %v2255, 96
      %v3493 = vpop.permute.xlu0 %3492
      %3494 = vrot.lane.b32.xlu0 %v2256, 96
      %v3495 = vpop.permute.xlu0 %3494
      %3496 = vrot.lane.b32.xlu0 %v2264, 96
      %v3497 = vpop.permute.xlu0 %3496
      %3563 = vrot.lane.b32.xlu0 %v2193, 112
      %v3564 = vpop.permute.xlu0 %3563
      %3565 = vrot.lane.b32.xlu0 %v2194, 112
      %v3566 = vpop.permute.xlu0 %3565
      %3567 = vrot.lane.b32.xlu0 %v2195, 112
      %v3568 = vpop.permute.xlu0 %3567
      %3569 = vrot.lane.b32.xlu0 %v2196, 112
      %v3570 = vpop.permute.xlu0 %3569
      %3571 = vrot.lane.b32.xlu0 %v2197, 112
      %v3572 = vpop.permute.xlu0 %3571
      %3573 = vrot.lane.b32.xlu0 %v2198, 112
      %v3574 = vpop.permute.xlu0 %3573
      %3575 = vrot.lane.b32.xlu0 %v2199, 112
      %v3576 = vpop.permute.xlu0 %3575
      %3577 = vrot.lane.b32.xlu0 %v2200, 112
      %v3578 = vpop.permute.xlu0 %3577
      %3579 = vrot.lane.b32.xlu0 %v2201, 112
      %v3580 = vpop.permute.xlu0 %3579
      %3581 = vrot.lane.b32.xlu0 %v2202, 112
      %v3582 = vpop.permute.xlu0 %3581
      %3583 = vrot.lane.b32.xlu0 %v2203, 112
      %v3584 = vpop.permute.xlu0 %3583
      %3585 = vrot.lane.b32.xlu0 %v2204, 112
      %v3586 = vpop.permute.xlu0 %3585
      %3587 = vrot.lane.b32.xlu0 %v2205, 112
      %v3588 = vpop.permute.xlu0 %3587
      %3589 = vrot.lane.b32.xlu0 %v2206, 112
      %v3590 = vpop.permute.xlu0 %3589
      %3591 = vrot.lane.b32.xlu0 %v2207, 112
      %v3592 = vpop.permute.xlu0 %3591
      %3593 = vrot.lane.b32.xlu0 %v2208, 112
      %v3594 = vpop.permute.xlu0 %3593
      %3595 = vrot.lane.b32.xlu0 %v2209, 112
      %v3596 = vpop.permute.xlu0 %3595
      %3597 = vrot.lane.b32.xlu0 %v2210, 112
      %v3598 = vpop.permute.xlu0 %3597
      %3599 = vrot.lane.b32.xlu0 %v2211, 112
      %v3600 = vpop.permute.xlu0 %3599
      %3601 = vrot.lane.b32.xlu0 %v2212, 112
      %v3602 = vpop.permute.xlu0 %3601
      %3603 = vrot.lane.b32.xlu0 %v2213, 112
      %v3604 = vpop.permute.xlu0 %3603
      %3605 = vrot.lane.b32.xlu0 %v2214, 112
      %v3606 = vpop.permute.xlu0 %3605
      %3607 = vrot.lane.b32.xlu0 %v2215, 112
      %v3608 = vpop.permute.xlu0 %3607
      %3609 = vrot.lane.b32.xlu0 %v2216, 112
      %v3610 = vpop.permute.xlu0 %3609
      %3611 = vrot.lane.b32.xlu0 %v2217, 112
      %v3612 = vpop.permute.xlu0 %3611
      %3613 = vrot.lane.b32.xlu0 %v2218, 112
      %v3614 = vpop.permute.xlu0 %3613
      %3615 = vrot.lane.b32.xlu0 %v2219, 112
      %v3616 = vpop.permute.xlu0 %3615
      %3617 = vrot.lane.b32.xlu0 %v2220, 112
      %v3618 = vpop.permute.xlu0 %3617
      %3619 = vrot.lane.b32.xlu0 %v2221, 112
      %v3620 = vpop.permute.xlu0 %3619
      %3621 = vrot.lane.b32.xlu0 %v2222, 112
      %v3622 = vpop.permute.xlu0 %3621
      %3623 = vrot.lane.b32.xlu0 %v2223, 112
      %v3624 = vpop.permute.xlu0 %3623
      %3625 = vrot.lane.b32.xlu0 %v2224, 112
      %v3626 = vpop.permute.xlu0 %3625
      %3627 = vrot.lane.b32.xlu0 %v2225, 112
      %v3628 = vpop.permute.xlu0 %3627
      %3629 = vrot.lane.b32.xlu0 %v2226, 112
      %v3630 = vpop.permute.xlu0 %3629
      %3631 = vrot.lane.b32.xlu0 %v2227, 112
      %v3632 = vpop.permute.xlu0 %3631
      %3633 = vrot.lane.b32.xlu0 %v2228, 112
      %v3634 = vpop.permute.xlu0 %3633
      %3635 = vrot.lane.b32.xlu0 %v2229, 112
      %v3636 = vpop.permute.xlu0 %3635
      %3637 = vrot.lane.b32.xlu0 %v2230, 112
      %v3638 = vpop.permute.xlu0 %3637
      %3639 = vrot.lane.b32.xlu0 %v2231, 112
      %v3640 = vpop.permute.xlu0 %3639
      %3641 = vrot.lane.b32.xlu0 %v2232, 112
      %v3642 = vpop.permute.xlu0 %3641
      %3643 = vrot.lane.b32.xlu0 %v2233, 112
      %v3644 = vpop.permute.xlu0 %3643
      %3645 = vrot.lane.b32.xlu0 %v2234, 112
      %v3646 = vpop.permute.xlu0 %3645
      %3647 = vrot.lane.b32.xlu0 %v2235, 112
      %v3648 = vpop.permute.xlu0 %3647
      %3649 = vrot.lane.b32.xlu0 %v2236, 112
      %v3650 = vpop.permute.xlu0 %3649
      %3651 = vrot.lane.b32.xlu0 %v2237, 112
      %v3652 = vpop.permute.xlu0 %3651
      %3653 = vrot.lane.b32.xlu0 %v2238, 112
      %v3654 = vpop.permute.xlu0 %3653
      %3655 = vrot.lane.b32.xlu0 %v2239, 112
      %v3656 = vpop.permute.xlu0 %3655
      %3657 = vrot.lane.b32.xlu0 %v2240, 112
      %v3658 = vpop.permute.xlu0 %3657
      %3659 = vrot.lane.b32.xlu0 %v2241, 112
      %v3660 = vpop.permute.xlu0 %3659
      %3661 = vrot.lane.b32.xlu0 %v2242, 112
      %v3662 = vpop.permute.xlu0 %3661
      %3663 = vrot.lane.b32.xlu0 %v2243, 112
      %v3664 = vpop.permute.xlu0 %3663
      %3665 = vrot.lane.b32.xlu0 %v2244, 112
      %v3666 = vpop.permute.xlu0 %3665
      %3667 = vrot.lane.b32.xlu0 %v2245, 112
      %v3668 = vpop.permute.xlu0 %3667
      %3669 = vrot.lane.b32.xlu0 %v2246, 112
      %v3670 = vpop.permute.xlu0 %3669
      %3671 = vrot.lane.b32.xlu0 %v2247, 112
      %v3672 = vpop.permute.xlu0 %3671
      %3673 = vrot.lane.b32.xlu0 %v2249, 112
      %v3674 = vpop.permute.xlu0 %3673
      %3675 = vrot.lane.b32.xlu0 %v2257, 112
      %v3676 = vpop.permute.xlu0 %3675
      %3677 = vrot.lane.b32.xlu0 %v2258, 112
      %v3678 = vpop.permute.xlu0 %3677
      %3679 = vrot.lane.b32.xlu0 %v2259, 112
      %v3680 = vpop.permute.xlu0 %3679
      %3681 = vrot.lane.b32.xlu0 %v2260, 112
      %v3682 = vpop.permute.xlu0 %3681
      %3683 = vrot.lane.b32.xlu0 %v2261, 112
      %v3684 = vpop.permute.xlu0 %3683
      %3685 = vrot.lane.b32.xlu0 %v2262, 112
      %v3686 = vpop.permute.xlu0 %3685
      %3687 = vrot.lane.b32.xlu0 %v2263, 112
      %v3688 = vpop.permute.xlu0 %3687
      %3689 = vrot.lane.b32.xlu0 %v2265, 112
      %v3690 = vpop.permute.xlu0 %3689
      %v3755 = vsel %vm1223, %v2120, %v2331
      %v3756 = vsel %vm1223, %v2121, %v2333
      %v3757 = vsel %vm1223, %v2122, %v2335
      %v3758 = vsel %vm1223, %v2123, %v2337
      %v3759 = vsel %vm1223, %v2124, %v2339
      %v3760 = vsel %vm1223, %v2125, %v2341
      %v3761 = vsel %vm1223, %v2126, %v2343
      %v3762 = vsel %vm1223, %v2127, %v2345
      %v3763 = vsel %vm1223, %v2128, %v2347
      %v3764 = vsel %vm1223, %v2129, %v2349
      %v3765 = vsel %vm1223, %v2130, %v2351
      %v3766 = vsel %vm1223, %v2131, %v2353
      %v3767 = vsel %vm1223, %v2132, %v2355
      %v3768 = vsel %vm1223, %v2133, %v2357
      %v3769 = vsel %vm1223, %v2134, %v2359
      %v3770 = vsel %vm1223, %v2135, %v2361
      %v3771 = vsel %vm1223, %v2136, %v2363
      %v3772 = vsel %vm1223, %v2137, %v2365
      %v3773 = vsel %vm1223, %v2138, %v2367
      %v3774 = vsel %vm1223, %v2139, %v2369
      %v3775 = vsel %vm1223, %v2140, %v2371
      %v3776 = vsel %vm1223, %v2141, %v2373
      %v3777 = vsel %vm1223, %v2142, %v2375
      %v3778 = vsel %vm1223, %v2143, %v2377
      %v3779 = vsel %vm1223, %v2144, %v2379
      %v3780 = vsel %vm1223, %v2145, %v2381
      %v3781 = vsel %vm1223, %v2146, %v2383
      %v3782 = vsel %vm1223, %v2147, %v2385
      %v3783 = vsel %vm1223, %v2148, %v2387
      %v3784 = vsel %vm1223, %v2149, %v2389
      %v3785 = vsel %vm1223, %v2150, %v2391
      %v3786 = vsel %vm1223, %v2151, %v2393
      %v3787 = vsel %vm1223, %v2152, %v2395
      %v3788 = vsel %vm1223, %v2153, %v2397
      %v3789 = vsel %vm1223, %v2154, %v2399
      %v3790 = vsel %vm1223, %v2155, %v2401
      %v3791 = vsel %vm1223, %v2156, %v2403
      %v3792 = vsel %vm1223, %v2157, %v2405
      %v3793 = vsel %vm1223, %v2158, %v2407
      %v3794 = vsel %vm1223, %v2159, %v2409
      %v3795 = vsel %vm1223, %v2160, %v2411
      %v3796 = vsel %vm1223, %v2161, %v2413
      %v3797 = vsel %vm1223, %v2162, %v2415
      %v3798 = vsel %vm1223, %v2163, %v2417
      %v3799 = vsel %vm1223, %v2164, %v2419
      %v3800 = vsel %vm1223, %v2165, %v2421
      %v3801 = vsel %vm1223, %v2166, %v2423
      %v3802 = vsel %vm1223, %v2167, %v2425
      %v3803 = vsel %vm1223, %v2168, %v2427
      %v3804 = vsel %vm1223, %v2169, %v2429
      %v3805 = vsel %vm1223, %v2170, %v2431
      %v3806 = vsel %vm1223, %v2171, %v2433
      %v3807 = vsel %vm1223, %v2172, %v2435
      %v3808 = vsel %vm1223, %v2173, %v2437
      %v3809 = vsel %vm1223, %v2174, %v2439
      %v3810 = vsel %vm1223, %v2175, %v2441
      %v3811 = vsel %vm1223, %v2176, %v2443
      %v3812 = vsel %vm1223, %v2177, %v2445
      %v3813 = vsel %vm1223, %v2178, %v2447
      %v3814 = vsel %vm1223, %v2179, %v2449
      %v3815 = vsel %vm1223, %v2180, %v2451
      %v3816 = vsel %vm1223, %v2181, %v2453
      %v3817 = vsel %vm1223, %v2182, %v2455
      %v3818 = vsel %vm1223, %v2183, %v2457
      %vm3819 = vcmask 261120
      %v3820 = vsel %vm3819, %v3755, %v2587
      %v3821 = vsel %vm3819, %v3756, %v2589
      %v3822 = vsel %vm3819, %v3757, %v2591
      %v3823 = vsel %vm3819, %v3758, %v2593
      %v3824 = vsel %vm3819, %v3759, %v2595
      %v3825 = vsel %vm3819, %v3760, %v2597
      %v3826 = vsel %vm3819, %v3761, %v2599
      %v3827 = vsel %vm3819, %v3762, %v2601
      %v3828 = vsel %vm3819, %v3763, %v2603
      %v3829 = vsel %vm3819, %v3764, %v2605
      %v3830 = vsel %vm3819, %v3765, %v2607
      %v3831 = vsel %vm3819, %v3766, %v2609
      %v3832 = vsel %vm3819, %v3767, %v2611
      %v3833 = vsel %vm3819, %v3768, %v2613
      %v3834 = vsel %vm3819, %v3769, %v2615
      %v3835 = vsel %vm3819, %v3770, %v2617
      %v3836 = vsel %vm3819, %v3771, %v2619
      %v3837 = vsel %vm3819, %v3772, %v2621
      %v3838 = vsel %vm3819, %v3773, %v2623
      %v3839 = vsel %vm3819, %v3774, %v2625
      %v3840 = vsel %vm3819, %v3775, %v2627
      %v3841 = vsel %vm3819, %v3776, %v2629
      %v3842 = vsel %vm3819, %v3777, %v2631
      %v3843 = vsel %vm3819, %v3778, %v2633
      %v3844 = vsel %vm3819, %v3779, %v2635
      %v3845 = vsel %vm3819, %v3780, %v2637
      %v3846 = vsel %vm3819, %v3781, %v2639
      %v3847 = vsel %vm3819, %v3782, %v2641
      %v3848 = vsel %vm3819, %v3783, %v2643
      %v3849 = vsel %vm3819, %v3784, %v2645
      %v3850 = vsel %vm3819, %v3785, %v2647
      %v3851 = vsel %vm3819, %v3786, %v2649
      %v3852 = vsel %vm3819, %v3787, %v2651
      %v3853 = vsel %vm3819, %v3788, %v2653
      %v3854 = vsel %vm3819, %v3789, %v2655
      %v3855 = vsel %vm3819, %v3790, %v2657
      %v3856 = vsel %vm3819, %v3791, %v2659
      %v3857 = vsel %vm3819, %v3792, %v2661
      %v3858 = vsel %vm3819, %v3793, %v2663
      %v3859 = vsel %vm3819, %v3794, %v2665
      %v3860 = vsel %vm3819, %v3795, %v2667
      %v3861 = vsel %vm3819, %v3796, %v2669
      %v3862 = vsel %vm3819, %v3797, %v2671
      %v3863 = vsel %vm3819, %v3798, %v2673
      %v3864 = vsel %vm3819, %v3799, %v2675
      %v3865 = vsel %vm3819, %v3800, %v2677
      %v3866 = vsel %vm3819, %v3801, %v2679
      %v3867 = vsel %vm3819, %v3802, %v2681
      %v3868 = vsel %vm3819, %v3803, %v2683
      %v3869 = vsel %vm3819, %v3804, %v2685
      %v3870 = vsel %vm3819, %v3805, %v2687
      %v3871 = vsel %vm3819, %v3806, %v2689
      %v3872 = vsel %vm3819, %v3807, %v2691
      %v3873 = vsel %vm3819, %v3808, %v2693
      %v3874 = vsel %vm3819, %v3809, %v2695
      %v3875 = vsel %vm3819, %v3810, %v2697
      %v3876 = vsel %vm3819, %v3811, %v2699
      %v3877 = vsel %vm3819, %v3812, %v2701
      %v3878 = vsel %vm3819, %v3813, %v2703
      %v3879 = vsel %vm3819, %v3814, %v2705
      %v3880 = vsel %vm3819, %v3815, %v2707
      %v3881 = vsel %vm3819, %v3816, %v2709
      %v3882 = vsel %vm3819, %v3817, %v2711
      %v3883 = vsel %vm3819, %v3818, %v2713
      %vm3884 = vcmask 392192
      %v3885 = vsel %vm3884, %v3820, %v2780
      %v3886 = vsel %vm3884, %v3821, %v2782
      %v3887 = vsel %vm3884, %v3822, %v2784
      %v3888 = vsel %vm3884, %v3823, %v2786
      %v3889 = vsel %vm3884, %v3824, %v2788
      %v3890 = vsel %vm3884, %v3825, %v2790
      %v3891 = vsel %vm3884, %v3826, %v2792
      %v3892 = vsel %vm3884, %v3827, %v2794
      %v3893 = vsel %vm3884, %v3828, %v2796
      %v3894 = vsel %vm3884, %v3829, %v2798
      %v3895 = vsel %vm3884, %v3830, %v2800
      %v3896 = vsel %vm3884, %v3831, %v2802
      %v3897 = vsel %vm3884, %v3832, %v2804
      %v3898 = vsel %vm3884, %v3833, %v2806
      %v3899 = vsel %vm3884, %v3834, %v2808
      %v3900 = vsel %vm3884, %v3835, %v2810
      %v3901 = vsel %vm3884, %v3836, %v2812
      %v3902 = vsel %vm3884, %v3837, %v2814
      %v3903 = vsel %vm3884, %v3838, %v2816
      %v3904 = vsel %vm3884, %v3839, %v2818
      %v3905 = vsel %vm3884, %v3840, %v2820
      %v3906 = vsel %vm3884, %v3841, %v2822
      %v3907 = vsel %vm3884, %v3842, %v2824
      %v3908 = vsel %vm3884, %v3843, %v2826
      %v3909 = vsel %vm3884, %v3844, %v2828
      %v3910 = vsel %vm3884, %v3845, %v2830
      %v3911 = vsel %vm3884, %v3846, %v2832
      %v3912 = vsel %vm3884, %v3847, %v2834
      %v3913 = vsel %vm3884, %v3848, %v2836
      %v3914 = vsel %vm3884, %v3849, %v2838
      %v3915 = vsel %vm3884, %v3850, %v2840
      %v3916 = vsel %vm3884, %v3851, %v2842
      %v3917 = vsel %vm3884, %v3852, %v2844
      %v3918 = vsel %vm3884, %v3853, %v2846
      %v3919 = vsel %vm3884, %v3854, %v2848
      %v3920 = vsel %vm3884, %v3855, %v2850
      %v3921 = vsel %vm3884, %v3856, %v2852
      %v3922 = vsel %vm3884, %v3857, %v2854
      %v3923 = vsel %vm3884, %v3858, %v2856
      %v3924 = vsel %vm3884, %v3859, %v2858
      %v3925 = vsel %vm3884, %v3860, %v2860
      %v3926 = vsel %vm3884, %v3861, %v2862
      %v3927 = vsel %vm3884, %v3862, %v2864
      %v3928 = vsel %vm3884, %v3863, %v2866
      %v3929 = vsel %vm3884, %v3864, %v2868
      %v3930 = vsel %vm3884, %v3865, %v2870
      %v3931 = vsel %vm3884, %v3866, %v2872
      %v3932 = vsel %vm3884, %v3867, %v2874
      %v3933 = vsel %vm3884, %v3868, %v2876
      %v3934 = vsel %vm3884, %v3869, %v2878
      %v3935 = vsel %vm3884, %v3870, %v2880
      %v3936 = vsel %vm3884, %v3871, %v2882
      %v3937 = vsel %vm3884, %v3872, %v2884
      %v3938 = vsel %vm3884, %v3873, %v2886
      %v3939 = vsel %vm3884, %v3874, %v2888
      %v3940 = vsel %vm3884, %v3875, %v2890
      %v3941 = vsel %vm3884, %v3876, %v2892
      %v3942 = vsel %vm3884, %v3877, %v2894
      %v3943 = vsel %vm3884, %v3878, %v2896
      %v3944 = vsel %vm3884, %v3879, %v2898
      %v3945 = vsel %vm3884, %v3880, %v2900
      %v3946 = vsel %vm3884, %v3881, %v2902
      %v3947 = vsel %vm3884, %v3882, %v2904
      %v3948 = vsel %vm3884, %v3883, %v2906
      %vm3949 = vcmask 523264
      %v3950 = vsel %vm3949, %v3885, %v2979
      %v3951 = vsel %vm3949, %v3886, %v2981
      %v3952 = vsel %vm3949, %v3887, %v2983
      %v3953 = vsel %vm3949, %v3888, %v2985
      %v3954 = vsel %vm3949, %v3889, %v2987
      %v3955 = vsel %vm3949, %v3890, %v2989
      %v3956 = vsel %vm3949, %v3891, %v2991
      %v3957 = vsel %vm3949, %v3892, %v2993
      %v3958 = vsel %vm3949, %v3893, %v2995
      %v3959 = vsel %vm3949, %v3894, %v2997
      %v3960 = vsel %vm3949, %v3895, %v2999
      %v3961 = vsel %vm3949, %v3896, %v3001
      %v3962 = vsel %vm3949, %v3897, %v3003
      %v3963 = vsel %vm3949, %v3898, %v3005
      %v3964 = vsel %vm3949, %v3899, %v3007
      %v3965 = vsel %vm3949, %v3900, %v3009
      %v3966 = vsel %vm3949, %v3901, %v3011
      %v3967 = vsel %vm3949, %v3902, %v3013
      %v3968 = vsel %vm3949, %v3903, %v3015
      %v3969 = vsel %vm3949, %v3904, %v3017
      %v3970 = vsel %vm3949, %v3905, %v3019
      %v3971 = vsel %vm3949, %v3906, %v3021
      %v3972 = vsel %vm3949, %v3907, %v3023
      %v3973 = vsel %vm3949, %v3908, %v3025
      %v3974 = vsel %vm3949, %v3909, %v3027
      %v3975 = vsel %vm3949, %v3910, %v3029
      %v3976 = vsel %vm3949, %v3911, %v3031
      %v3977 = vsel %vm3949, %v3912, %v3033
      %v3978 = vsel %vm3949, %v3913, %v3035
      %v3979 = vsel %vm3949, %v3914, %v3037
      %v3980 = vsel %vm3949, %v3915, %v3039
      %v3981 = vsel %vm3949, %v3916, %v3041
      %v3982 = vsel %vm3949, %v3917, %v3043
      %v3983 = vsel %vm3949, %v3918, %v3045
      %v3984 = vsel %vm3949, %v3919, %v3047
      %v3985 = vsel %vm3949, %v3920, %v3049
      %v3986 = vsel %vm3949, %v3921, %v3051
      %v3987 = vsel %vm3949, %v3922, %v3053
      %v3988 = vsel %vm3949, %v3923, %v3055
      %v3989 = vsel %vm3949, %v3924, %v3057
      %v3990 = vsel %vm3949, %v3925, %v3059
      %v3991 = vsel %vm3949, %v3926, %v3061
      %v3992 = vsel %vm3949, %v3927, %v3063
      %v3993 = vsel %vm3949, %v3928, %v3065
      %v3994 = vsel %vm3949, %v3929, %v3067
      %v3995 = vsel %vm3949, %v3930, %v3069
      %v3996 = vsel %vm3949, %v3931, %v3071
      %v3997 = vsel %vm3949, %v3932, %v3073
      %v3998 = vsel %vm3949, %v3933, %v3075
      %v3999 = vsel %vm3949, %v3934, %v3077
      %v4000 = vsel %vm3949, %v3935, %v3079
      %v4001 = vsel %vm3949, %v3936, %v3081
      %v4002 = vsel %vm3949, %v3937, %v3083
      %v4003 = vsel %vm3949, %v3938, %v3085
      %v4004 = vsel %vm3949, %v3939, %v3087
      %v4005 = vsel %vm3949, %v3940, %v3089
      %v4006 = vsel %vm3949, %v3941, %v3091
      %v4007 = vsel %vm3949, %v3942, %v3093
      %v4008 = vsel %vm3949, %v3943, %v3095
      %v4009 = vsel %vm3949, %v3944, %v3097
      %v4010 = vsel %vm3949, %v3945, %v3099
      %v4011 = vsel %vm3949, %v3946, %v3101
      %v4012 = vsel %vm3949, %v3947, %v3103
      %v4013 = vsel %vm3949, %v3948, %v3105
      %vm4014 = vcmask 654336
      %v4015 = vsel %vm4014, %v3950, %v3178
      %v4016 = vsel %vm4014, %v3951, %v3180
      %v4017 = vsel %vm4014, %v3952, %v3182
      %v4018 = vsel %vm4014, %v3953, %v3184
      %v4019 = vsel %vm4014, %v3954, %v3186
      %v4020 = vsel %vm4014, %v3955, %v3188
      %v4021 = vsel %vm4014, %v3956, %v3190
      %v4022 = vsel %vm4014, %v3957, %v3192
      %v4023 = vsel %vm4014, %v3958, %v3194
      %v4024 = vsel %vm4014, %v3959, %v3196
      %v4025 = vsel %vm4014, %v3960, %v3198
      %v4026 = vsel %vm4014, %v3961, %v3200
      %v4027 = vsel %vm4014, %v3962, %v3202
      %v4028 = vsel %vm4014, %v3963, %v3204
      %v4029 = vsel %vm4014, %v3964, %v3206
      %v4030 = vsel %vm4014, %v3965, %v3208
      %v4031 = vsel %vm4014, %v3966, %v3210
      %v4032 = vsel %vm4014, %v3967, %v3212
      %v4033 = vsel %vm4014, %v3968, %v3214
      %v4034 = vsel %vm4014, %v3969, %v3216
      %v4035 = vsel %vm4014, %v3970, %v3218
      %v4036 = vsel %vm4014, %v3971, %v3220
      %v4037 = vsel %vm4014, %v3972, %v3222
      %v4038 = vsel %vm4014, %v3973, %v3224
      %v4039 = vsel %vm4014, %v3974, %v3226
      %v4040 = vsel %vm4014, %v3975, %v3228
      %v4041 = vsel %vm4014, %v3976, %v3230
      %v4042 = vsel %vm4014, %v3977, %v3232
      %v4043 = vsel %vm4014, %v3978, %v3234
      %v4044 = vsel %vm4014, %v3979, %v3236
      %v4045 = vsel %vm4014, %v3980, %v3238
      %v4046 = vsel %vm4014, %v3981, %v3240
      %v4047 = vsel %vm4014, %v3982, %v3242
      %v4048 = vsel %vm4014, %v3983, %v3244
      %v4049 = vsel %vm4014, %v3984, %v3246
      %v4050 = vsel %vm4014, %v3985, %v3248
      %v4051 = vsel %vm4014, %v3986, %v3250
      %v4052 = vsel %vm4014, %v3987, %v3252
      %v4053 = vsel %vm4014, %v3988, %v3254
      %v4054 = vsel %vm4014, %v3989, %v3256
      %v4055 = vsel %vm4014, %v3990, %v3258
      %v4056 = vsel %vm4014, %v3991, %v3260
      %v4057 = vsel %vm4014, %v3992, %v3262
      %v4058 = vsel %vm4014, %v3993, %v3264
      %v4059 = vsel %vm4014, %v3994, %v3266
      %v4060 = vsel %vm4014, %v3995, %v3268
      %v4061 = vsel %vm4014, %v3996, %v3270
      %v4062 = vsel %vm4014, %v3997, %v3272
      %v4063 = vsel %vm4014, %v3998, %v3274
      %v4064 = vsel %vm4014, %v3999, %v3276
      %v4065 = vsel %vm4014, %v4000, %v3278
      %v4066 = vsel %vm4014, %v4001, %v3280
      %v4067 = vsel %vm4014, %v4002, %v3282
      %v4068 = vsel %vm4014, %v4003, %v3284
      %v4069 = vsel %vm4014, %v4004, %v3286
      %v4070 = vsel %vm4014, %v4005, %v3288
      %v4071 = vsel %vm4014, %v4006, %v3290
      %v4072 = vsel %vm4014, %v4007, %v3292
      %v4073 = vsel %vm4014, %v4008, %v3294
      %v4074 = vsel %vm4014, %v4009, %v3296
      %v4075 = vsel %vm4014, %v4010, %v3298
      %v4076 = vsel %vm4014, %v4011, %v3300
      %v4077 = vsel %vm4014, %v4012, %v3302
      %v4078 = vsel %vm4014, %v4013, %v3304
      %vm4079 = vcmask 785408
      %v4080 = vsel %vm4079, %v4015, %v3371
      %v4081 = vsel %vm4079, %v4016, %v3373
      %v4082 = vsel %vm4079, %v4017, %v3375
      %v4083 = vsel %vm4079, %v4018, %v3377
      %v4084 = vsel %vm4079, %v4019, %v3379
      %v4085 = vsel %vm4079, %v4020, %v3381
      %v4086 = vsel %vm4079, %v4021, %v3383
      %v4087 = vsel %vm4079, %v4022, %v3385
      %v4088 = vsel %vm4079, %v4023, %v3387
      %v4089 = vsel %vm4079, %v4024, %v3389
      %v4090 = vsel %vm4079, %v4025, %v3391
      %v4091 = vsel %vm4079, %v4026, %v3393
      %v4092 = vsel %vm4079, %v4027, %v3395
      %v4093 = vsel %vm4079, %v4028, %v3397
      %v4094 = vsel %vm4079, %v4029, %v3399
      %v4095 = vsel %vm4079, %v4030, %v3401
      %v4096 = vsel %vm4079, %v4031, %v3403
      %v4097 = vsel %vm4079, %v4032, %v3405
      %v4098 = vsel %vm4079, %v4033, %v3407
      %v4099 = vsel %vm4079, %v4034, %v3409
      %v4100 = vsel %vm4079, %v4035, %v3411
      %v4101 = vsel %vm4079, %v4036, %v3413
      %v4102 = vsel %vm4079, %v4037, %v3415
      %v4103 = vsel %vm4079, %v4038, %v3417
      %v4104 = vsel %vm4079, %v4039, %v3419
      %v4105 = vsel %vm4079, %v4040, %v3421
      %v4106 = vsel %vm4079, %v4041, %v3423
      %v4107 = vsel %vm4079, %v4042, %v3425
      %v4108 = vsel %vm4079, %v4043, %v3427
      %v4109 = vsel %vm4079, %v4044, %v3429
      %v4110 = vsel %vm4079, %v4045, %v3431
      %v4111 = vsel %vm4079, %v4046, %v3433
      %v4112 = vsel %vm4079, %v4047, %v3435
      %v4113 = vsel %vm4079, %v4048, %v3437
      %v4114 = vsel %vm4079, %v4049, %v3439
      %v4115 = vsel %vm4079, %v4050, %v3441
      %v4116 = vsel %vm4079, %v4051, %v3443
      %v4117 = vsel %vm4079, %v4052, %v3445
      %v4118 = vsel %vm4079, %v4053, %v3447
      %v4119 = vsel %vm4079, %v4054, %v3449
      %v4120 = vsel %vm4079, %v4055, %v3451
      %v4121 = vsel %vm4079, %v4056, %v3453
      %v4122 = vsel %vm4079, %v4057, %v3455
      %v4123 = vsel %vm4079, %v4058, %v3457
      %v4124 = vsel %vm4079, %v4059, %v3459
      %v4125 = vsel %vm4079, %v4060, %v3461
      %v4126 = vsel %vm4079, %v4061, %v3463
      %v4127 = vsel %vm4079, %v4062, %v3465
      %v4128 = vsel %vm4079, %v4063, %v3467
      %v4129 = vsel %vm4079, %v4064, %v3469
      %v4130 = vsel %vm4079, %v4065, %v3471
      %v4131 = vsel %vm4079, %v4066, %v3473
      %v4132 = vsel %vm4079, %v4067, %v3475
      %v4133 = vsel %vm4079, %v4068, %v3477
      %v4134 = vsel %vm4079, %v4069, %v3479
      %v4135 = vsel %vm4079, %v4070, %v3481
      %v4136 = vsel %vm4079, %v4071, %v3483
      %v4137 = vsel %vm4079, %v4072, %v3485
      %v4138 = vsel %vm4079, %v4073, %v3487
      %v4139 = vsel %vm4079, %v4074, %v3489
      %v4140 = vsel %vm4079, %v4075, %v3491
      %v4141 = vsel %vm4079, %v4076, %v3493
      %v4142 = vsel %vm4079, %v4077, %v3495
      %v4143 = vsel %vm4079, %v4078, %v3497
      %vm4144 = vcmask 916480
      %v4145 = vsel %vm4144, %v4080, %v3564
      %v4146 = vsel %vm4144, %v4081, %v3566
      %v4147 = vsel %vm4144, %v4082, %v3568
      %v4148 = vsel %vm4144, %v4083, %v3570
      %v4149 = vsel %vm4144, %v4084, %v3572
      %v4150 = vsel %vm4144, %v4085, %v3574
      %v4151 = vsel %vm4144, %v4086, %v3576
      %v4152 = vsel %vm4144, %v4087, %v3578
      %v4153 = vsel %vm4144, %v4088, %v3580
      %v4154 = vsel %vm4144, %v4089, %v3582
      %v4155 = vsel %vm4144, %v4090, %v3584
      %v4156 = vsel %vm4144, %v4091, %v3586
      %v4157 = vsel %vm4144, %v4092, %v3588
      %v4158 = vsel %vm4144, %v4093, %v3590
      %v4159 = vsel %vm4144, %v4094, %v3592
      %v4160 = vsel %vm4144, %v4095, %v3594
      %v4161 = vsel %vm4144, %v4096, %v3596
      %v4162 = vsel %vm4144, %v4097, %v3598
      %v4163 = vsel %vm4144, %v4098, %v3600
      %v4164 = vsel %vm4144, %v4099, %v3602
      %v4165 = vsel %vm4144, %v4100, %v3604
      %v4166 = vsel %vm4144, %v4101, %v3606
      %v4167 = vsel %vm4144, %v4102, %v3608
      %v4168 = vsel %vm4144, %v4103, %v3610
      %v4169 = vsel %vm4144, %v4104, %v3612
      %v4170 = vsel %vm4144, %v4105, %v3614
      %v4171 = vsel %vm4144, %v4106, %v3616
      %v4172 = vsel %vm4144, %v4107, %v3618
      %v4173 = vsel %vm4144, %v4108, %v3620
      %v4174 = vsel %vm4144, %v4109, %v3622
      %v4175 = vsel %vm4144, %v4110, %v3624
      %v4176 = vsel %vm4144, %v4111, %v3626
      %v4177 = vsel %vm4144, %v4112, %v3628
      %v4178 = vsel %vm4144, %v4113, %v3630
      %v4179 = vsel %vm4144, %v4114, %v3632
      %v4180 = vsel %vm4144, %v4115, %v3634
      %v4181 = vsel %vm4144, %v4116, %v3636
      %v4182 = vsel %vm4144, %v4117, %v3638
      %v4183 = vsel %vm4144, %v4118, %v3640
      %v4184 = vsel %vm4144, %v4119, %v3642
      %v4185 = vsel %vm4144, %v4120, %v3644
      %v4186 = vsel %vm4144, %v4121, %v3646
      %v4187 = vsel %vm4144, %v4122, %v3648
      %v4188 = vsel %vm4144, %v4123, %v3650
      %v4189 = vsel %vm4144, %v4124, %v3652
      %v4190 = vsel %vm4144, %v4125, %v3654
      %v4191 = vsel %vm4144, %v4126, %v3656
      %v4192 = vsel %vm4144, %v4127, %v3658
      %v4193 = vsel %vm4144, %v4128, %v3660
      %v4194 = vsel %vm4144, %v4129, %v3662
      %v4195 = vsel %vm4144, %v4130, %v3664
      %v4196 = vsel %vm4144, %v4131, %v3666
      %v4197 = vsel %vm4144, %v4132, %v3668
      %v4198 = vsel %vm4144, %v4133, %v3670
      %v4199 = vsel %vm4144, %v4134, %v3672
      %v4200 = vsel %vm4144, %v4135, %v3674
      %v4201 = vsel %vm4144, %v4136, %v3676
      %v4202 = vsel %vm4144, %v4137, %v3678
      %v4203 = vsel %vm4144, %v4138, %v3680
      %v4204 = vsel %vm4144, %v4139, %v3682
      %v4205 = vsel %vm4144, %v4140, %v3684
      %v4206 = vsel %vm4144, %v4141, %v3686
      %v4207 = vsel %vm4144, %v4142, %v3688
      %v4208 = vsel %vm4144, %v4143, %v3690
      %v4209 = vld [vmem:[%s7] sm:$0xff]
      %v4210 = vld [vmem:[%s7 + $0x8] sm:$0xff]
      %v4211 = vld [vmem:[%s7 + $0x10] sm:$0xff]
      %v4212 = vld [vmem:[%s7 + $0x18] sm:$0xff]
      %v4213 = vld [vmem:[%s7 + $0x20] sm:$0xff]
      %v4214 = vld [vmem:[%s7 + $0x28] sm:$0xff]
      %v4215 = vld [vmem:[%s7 + $0x30] sm:$0xff]
      %v4216 = vld [vmem:[%s7 + $0x38] sm:$0xff]
      %v4217 = vld [vmem:[%s7 + $0x40] sm:$0xff]
      %v4218 = vld [vmem:[%s7 + $0x48] sm:$0xff]
      %v4219 = vld [vmem:[%s7 + $0x50] sm:$0xff]
      %v4220 = vld [vmem:[%s7 + $0x58] sm:$0xff]
      %v4221 = vld [vmem:[%s7 + $0x60] sm:$0xff]
      %v4222 = vld [vmem:[%s7 + $0x68] sm:$0xff]
      %v4223 = vld [vmem:[%s7 + $0x70] sm:$0xff]
      %v4224 = vld [vmem:[%s7 + $0x78] sm:$0xff]
      %v4225 = vld [vmem:[%s7 + $0x80] sm:$0xff]
      %v4226 = vld [vmem:[%s7 + $0x88] sm:$0xff]
      %v4227 = vld [vmem:[%s7 + $0x90] sm:$0xff]
      %v4228 = vld [vmem:[%s7 + $0x98] sm:$0xff]
      %v4229 = vld [vmem:[%s7 + $0xa0] sm:$0xff]
      %v4230 = vld [vmem:[%s7 + $0xa8] sm:$0xff]
      %v4231 = vld [vmem:[%s7 + $0xb0] sm:$0xff]
      %v4232 = vld [vmem:[%s7 + $0xb8] sm:$0xff]
      %v4233 = vld [vmem:[%s7 + $0xc0] sm:$0xff]
      %v4234 = vld [vmem:[%s7 + $0xc8] sm:$0xff]
      %v4235 = vld [vmem:[%s7 + $0xd0] sm:$0xff]
      %v4236 = vld [vmem:[%s7 + $0xd8] sm:$0xff]
      %v4237 = vld [vmem:[%s7 + $0xe0] sm:$0xff]
      %v4238 = vld [vmem:[%s7 + $0xe8] sm:$0xff]
      %v4239 = vld [vmem:[%s7 + $0xf0] sm:$0xff]
      %v4240 = vld [vmem:[%s7 + $0xf8] sm:$0xff]
      %v4241 = vld [vmem:[%s7 + $0x100] sm:$0xff]
      %v4242 = vld [vmem:[%s7 + $0x108] sm:$0xff]
      %v4243 = vld [vmem:[%s7 + $0x110] sm:$0xff]
      %v4244 = vld [vmem:[%s7 + $0x118] sm:$0xff]
      %v4245 = vld [vmem:[%s7 + $0x120] sm:$0xff]
      %v4246 = vld [vmem:[%s7 + $0x128] sm:$0xff]
      %v4247 = vld [vmem:[%s7 + $0x130] sm:$0xff]
      %v4248 = vld [vmem:[%s7 + $0x138] sm:$0xff]
      %v4249 = vld [vmem:[%s7 + $0x140] sm:$0xff]
      %v4250 = vld [vmem:[%s7 + $0x148] sm:$0xff]
      %v4251 = vld [vmem:[%s7 + $0x150] sm:$0xff]
      %v4252 = vld [vmem:[%s7 + $0x158] sm:$0xff]
      %v4253 = vld [vmem:[%s7 + $0x160] sm:$0xff]
      %v4254 = vld [vmem:[%s7 + $0x168] sm:$0xff]
      %v4255 = vld [vmem:[%s7 + $0x170] sm:$0xff]
      %v4256 = vld [vmem:[%s7 + $0x178] sm:$0xff]
      %v4257 = vld [vmem:[%s7 + $0x180] sm:$0xff]
      %v4258 = vld [vmem:[%s7 + $0x188] sm:$0xff]
      %v4259 = vld [vmem:[%s7 + $0x190] sm:$0xff]
      %v4260 = vld [vmem:[%s7 + $0x198] sm:$0xff]
      %v4261 = vld [vmem:[%s7 + $0x1a0] sm:$0xff]
      %v4262 = vld [vmem:[%s7 + $0x1a8] sm:$0xff]
      %v4263 = vld [vmem:[%s7 + $0x1b0] sm:$0xff]
      %v4264 = vld [vmem:[%s7 + $0x1b8] sm:$0xff]
      %v4265 = vld [vmem:[%s7 + $0x1c0] sm:$0xff]
      %v4266 = vld [vmem:[%s7 + $0x1c8] sm:$0xff]
      %v4267 = vld [vmem:[%s7 + $0x1d0] sm:$0xff]
      %v4268 = vld [vmem:[%s7 + $0x1d8] sm:$0xff]
      %v4269 = vld [vmem:[%s7 + $0x1e0] sm:$0xff]
      %v4270 = vld [vmem:[%s7 + $0x1e8] sm:$0xff]
      %v4271 = vld [vmem:[%s7 + $0x1f0] sm:$0xff]
      %v4272 = vld [vmem:[%s7 + $0x1f8] sm:$0xff]
      %vm4273 = vcmp.ne.f32.partialorder %v4209, 0.0
      %vm4274 = vcmp.ne.f32.partialorder %v4210, 0.0
      %vm4275 = vcmp.ne.f32.partialorder %v4211, 0.0
      %vm4276 = vcmp.ne.f32.partialorder %v4212, 0.0
      %vm4277 = vcmp.ne.f32.partialorder %v4213, 0.0
      %vm4278 = vcmp.ne.f32.partialorder %v4214, 0.0
      %vm4279 = vcmp.ne.f32.partialorder %v4215, 0.0
      %vm4280 = vcmp.ne.f32.partialorder %v4216, 0.0
      %vm4281 = vcmp.ne.f32.partialorder %v4217, 0.0
      %vm4282 = vcmp.ne.f32.partialorder %v4218, 0.0
      %vm4283 = vcmp.ne.f32.partialorder %v4219, 0.0
      %vm4284 = vcmp.ne.f32.partialorder %v4220, 0.0
      %vm4285 = vcmp.ne.f32.partialorder %v4221, 0.0
      %vm4286 = vcmp.ne.f32.partialorder %v4222, 0.0
      %vm4287 = vcmp.ne.f32.partialorder %v4223, 0.0
      %vm4288 = vcmp.ne.f32.partialorder %v4224, 0.0
      %vm4289 = vcmp.ne.f32.partialorder %v4225, 0.0
      %vm4290 = vcmp.ne.f32.partialorder %v4226, 0.0
      %vm4291 = vcmp.ne.f32.partialorder %v4227, 0.0
      %vm4292 = vcmp.ne.f32.partialorder %v4228, 0.0
      %vm4293 = vcmp.ne.f32.partialorder %v4229, 0.0
      %vm4294 = vcmp.ne.f32.partialorder %v4230, 0.0
      %vm4295 = vcmp.ne.f32.partialorder %v4231, 0.0
      %vm4296 = vcmp.ne.f32.partialorder %v4232, 0.0
      %vm4297 = vcmp.ne.f32.partialorder %v4233, 0.0
      %vm4298 = vcmp.ne.f32.partialorder %v4234, 0.0
      %vm4299 = vcmp.ne.f32.partialorder %v4235, 0.0
      %vm4300 = vcmp.ne.f32.partialorder %v4236, 0.0
      %vm4301 = vcmp.ne.f32.partialorder %v4237, 0.0
      %vm4302 = vcmp.ne.f32.partialorder %v4238, 0.0
      %vm4303 = vcmp.ne.f32.partialorder %v4239, 0.0
      %vm4304 = vcmp.ne.f32.partialorder %v4240, 0.0
      %vm4305 = vcmp.ne.f32.partialorder %v4241, 0.0
      %vm4306 = vcmp.ne.f32.partialorder %v4242, 0.0
      %vm4307 = vcmp.ne.f32.partialorder %v4243, 0.0
      %vm4308 = vcmp.ne.f32.partialorder %v4244, 0.0
      %vm4309 = vcmp.ne.f32.partialorder %v4245, 0.0
      %vm4310 = vcmp.ne.f32.partialorder %v4246, 0.0
      %vm4311 = vcmp.ne.f32.partialorder %v4247, 0.0
      %vm4312 = vcmp.ne.f32.partialorder %v4248, 0.0
      %vm4313 = vcmp.ne.f32.partialorder %v4249, 0.0
      %vm4314 = vcmp.ne.f32.partialorder %v4250, 0.0
      %vm4315 = vcmp.ne.f32.partialorder %v4251, 0.0
      %vm4316 = vcmp.ne.f32.partialorder %v4252, 0.0
      %vm4317 = vcmp.ne.f32.partialorder %v4253, 0.0
      %vm4318 = vcmp.ne.f32.partialorder %v4254, 0.0
      %vm4319 = vcmp.ne.f32.partialorder %v4255, 0.0
      %vm4320 = vcmp.ne.f32.partialorder %v4256, 0.0
      %vm4321 = vcmp.ne.f32.partialorder %v4257, 0.0
      %vm4322 = vcmp.ne.f32.partialorder %v4258, 0.0
      %vm4323 = vcmp.ne.f32.partialorder %v4259, 0.0
      %vm4324 = vcmp.ne.f32.partialorder %v4260, 0.0
      %vm4325 = vcmp.ne.f32.partialorder %v4261, 0.0
      %vm4326 = vcmp.ne.f32.partialorder %v4262, 0.0
      %vm4327 = vcmp.ne.f32.partialorder %v4263, 0.0
      %vm4328 = vcmp.ne.f32.partialorder %v4264, 0.0
      %vm4329 = vcmp.ne.f32.partialorder %v4265, 0.0
      %vm4330 = vcmp.ne.f32.partialorder %v4266, 0.0
      %vm4331 = vcmp.ne.f32.partialorder %v4267, 0.0
      %vm4332 = vcmp.ne.f32.partialorder %v4268, 0.0
      %vm4333 = vcmp.ne.f32.partialorder %v4269, 0.0
      %vm4334 = vcmp.ne.f32.partialorder %v4270, 0.0
      %vm4335 = vcmp.ne.f32.partialorder %v4271, 0.0
      %vm4336 = vcmp.ne.f32.partialorder %v4272, 0.0
      %v4337 = vsel %vm4273, %v4145, 0.0
      %v4338 = vsel %vm4274, %v4146, 0.0
      %v4339 = vsel %vm4275, %v4147, 0.0
      %v4340 = vsel %vm4276, %v4148, 0.0
      %v4341 = vsel %vm4277, %v4149, 0.0
      %v4342 = vsel %vm4278, %v4150, 0.0
      %v4343 = vsel %vm4279, %v4151, 0.0
      %v4344 = vsel %vm4280, %v4152, 0.0
      %v4345 = vsel %vm4281, %v4153, 0.0
      %v4346 = vsel %vm4282, %v4154, 0.0
      %v4347 = vsel %vm4283, %v4155, 0.0
      %v4348 = vsel %vm4284, %v4156, 0.0
      %v4349 = vsel %vm4285, %v4157, 0.0
      %v4350 = vsel %vm4286, %v4158, 0.0
      %v4351 = vsel %vm4287, %v4159, 0.0
      %v4352 = vsel %vm4288, %v4160, 0.0
      %v4353 = vsel %vm4289, %v4161, 0.0
      %v4354 = vsel %vm4290, %v4162, 0.0
      %v4355 = vsel %vm4291, %v4163, 0.0
      %v4356 = vsel %vm4292, %v4164, 0.0
      %v4357 = vsel %vm4293, %v4165, 0.0
      %v4358 = vsel %vm4294, %v4166, 0.0
      %v4359 = vsel %vm4295, %v4167, 0.0
      %v4360 = vsel %vm4296, %v4168, 0.0
      %v4361 = vsel %vm4297, %v4169, 0.0
      %v4362 = vsel %vm4298, %v4170, 0.0
      %v4363 = vsel %vm4299, %v4171, 0.0
      %v4364 = vsel %vm4300, %v4172, 0.0
      %v4365 = vsel %vm4301, %v4173, 0.0
      %v4366 = vsel %vm4302, %v4174, 0.0
      %v4367 = vsel %vm4303, %v4175, 0.0
      %v4368 = vsel %vm4304, %v4176, 0.0
      %v4369 = vsel %vm4305, %v4177, 0.0
      %v4370 = vsel %vm4306, %v4178, 0.0
      %v4371 = vsel %vm4307, %v4179, 0.0
      %v4372 = vsel %vm4308, %v4180, 0.0
      %v4373 = vsel %vm4309, %v4181, 0.0
      %v4374 = vsel %vm4310, %v4182, 0.0
      %v4375 = vsel %vm4311, %v4183, 0.0
      %v4376 = vsel %vm4312, %v4184, 0.0
      %v4377 = vsel %vm4313, %v4185, 0.0
      %v4378 = vsel %vm4314, %v4186, 0.0
      %v4379 = vsel %vm4315, %v4187, 0.0
      %v4380 = vsel %vm4316, %v4188, 0.0
      %v4381 = vsel %vm4317, %v4189, 0.0
      %v4382 = vsel %vm4318, %v4190, 0.0
      %v4383 = vsel %vm4319, %v4191, 0.0
      %v4384 = vsel %vm4320, %v4192, 0.0
      %v4385 = vsel %vm4321, %v4193, 0.0
      %v4386 = vsel %vm4322, %v4194, 0.0
      %v4387 = vsel %vm4323, %v4195, 0.0
      %v4388 = vsel %vm4324, %v4196, 0.0
      %v4389 = vsel %vm4325, %v4197, 0.0
      %v4390 = vsel %vm4326, %v4198, 0.0
      %v4391 = vsel %vm4327, %v4199, 0.0
      %v4392 = vsel %vm4328, %v4200, 0.0
      %v4393 = vsel %vm4329, %v4201, 0.0
      %v4394 = vsel %vm4330, %v4202, 0.0
      %v4395 = vsel %vm4331, %v4203, 0.0
      %v4396 = vsel %vm4332, %v4204, 0.0
      %v4397 = vsel %vm4333, %v4205, 0.0
      %v4398 = vsel %vm4334, %v4206, 0.0
      %v4399 = vsel %vm4335, %v4207, 0.0
      %v4400 = vsel %vm4336, %v4208, 0.0
      %v4401 = vpack.c.bf16 %v4338, %v4337
      %v4402 = vpack.c.bf16 %v4340, %v4339
      %v4403 = vpack.c.bf16 %v4342, %v4341
      %v4404 = vpack.c.bf16 %v4344, %v4343
      %v4405 = vpack.c.bf16 %v4346, %v4345
      %v4406 = vpack.c.bf16 %v4348, %v4347
      %v4407 = vpack.c.bf16 %v4350, %v4349
      %v4408 = vpack.c.bf16 %v4352, %v4351
      %v4409 = vpack.c.bf16 %v4354, %v4353
      %v4410 = vpack.c.bf16 %v4356, %v4355
      %v4411 = vpack.c.bf16 %v4358, %v4357
      %v4412 = vpack.c.bf16 %v4360, %v4359
      %v4413 = vpack.c.bf16 %v4362, %v4361
      %v4414 = vpack.c.bf16 %v4364, %v4363
      %v4415 = vpack.c.bf16 %v4366, %v4365
      %v4416 = vpack.c.bf16 %v4368, %v4367
      %v4417 = vpack.c.bf16 %v4370, %v4369
      %v4418 = vpack.c.bf16 %v4372, %v4371
      %v4419 = vpack.c.bf16 %v4374, %v4373
      %v4420 = vpack.c.bf16 %v4376, %v4375
      %v4421 = vpack.c.bf16 %v4378, %v4377
      %v4422 = vpack.c.bf16 %v4380, %v4379
      %v4423 = vpack.c.bf16 %v4382, %v4381
      %v4424 = vpack.c.bf16 %v4384, %v4383
      %v4425 = vpack.c.bf16 %v4386, %v4385
      %v4426 = vpack.c.bf16 %v4388, %v4387
      %v4427 = vpack.c.bf16 %v4390, %v4389
      %v4428 = vpack.c.bf16 %v4392, %v4391
      %v4429 = vpack.c.bf16 %v4394, %v4393
      %v4430 = vpack.c.bf16 %v4396, %v4395
      %v4431 = vpack.c.bf16 %v4398, %v4397
      %v4432 = vpack.c.bf16 %v4400, %v4399
      %v4433 = vld [vmem:[%s8] sm:$0xf]
      %v4434 = vld [vmem:[%s8 + $0x4] sm:$0xf]
      %v4435 = vld [vmem:[%s8 + $0x8] sm:$0xf]
      %v4436 = vld [vmem:[%s8 + $0xc] sm:$0xf]
      %v4437 = vld [vmem:[%s8 + $0x10] sm:$0xf]
      %v4438 = vld [vmem:[%s8 + $0x14] sm:$0xf]
      %v4439 = vld [vmem:[%s8 + $0x18] sm:$0xf]
      %v4440 = vld [vmem:[%s8 + $0x1c] sm:$0xf]
      %v4441 = vld [vmem:[%s8 + $0x20] sm:$0xf]
      %v4442 = vld [vmem:[%s8 + $0x24] sm:$0xf]
      %v4443 = vld [vmem:[%s8 + $0x28] sm:$0xf]
      %v4444 = vld [vmem:[%s8 + $0x2c] sm:$0xf]
      %v4445 = vld [vmem:[%s8 + $0x30] sm:$0xf]
      %v4446 = vld [vmem:[%s8 + $0x34] sm:$0xf]
      %v4447 = vld [vmem:[%s8 + $0x38] sm:$0xf]
      %v4448 = vld [vmem:[%s8 + $0x3c] sm:$0xf]
      %v4449 = vld [vmem:[%s9] sm:$0x1]
      %v4451 = vlaneseq
      %v4452 = vshrl.u32 %v4451, 7
      %v4453 = vsub.s32 0, %v4452
      %v4454 = vrot.slane %v4449, %v4453
      %v4472 = vunpack.c.l.b16 %v4433
      %v4473 = vunpack.c.l.b16 %v4434
      %v4474 = vunpack.c.l.b16 %v4435
      %v4475 = vunpack.c.l.b16 %v4436
      %v4476 = vunpack.c.l.b16 %v4437
      %v4477 = vunpack.c.l.b16 %v4438
      %v4478 = vunpack.c.l.b16 %v4439
      %v4479 = vunpack.c.l.b16 %v4440
      %v4480 = vunpack.c.l.b16 %v4441
      %v4481 = vunpack.c.l.b16 %v4442
      %v4482 = vunpack.c.l.b16 %v4443
      %v4483 = vunpack.c.l.b16 %v4444
      %v4484 = vunpack.c.l.b16 %v4445
      %v4485 = vunpack.c.l.b16 %v4446
      %v4486 = vunpack.c.l.b16 %v4447
      %v4487 = vunpack.c.l.b16 %v4448
      %v4488 = vpack.c.b16 %v4473, %v4472
      %v4489 = vpack.c.b16 %v4475, %v4474
      %v4490 = vpack.c.b16 %v4477, %v4476
      %v4491 = vpack.c.b16 %v4479, %v4478
      %v4492 = vpack.c.b16 %v4481, %v4480
      %v4493 = vpack.c.b16 %v4483, %v4482
      %v4494 = vpack.c.b16 %v4485, %v4484
      %v4495 = vpack.c.b16 %v4487, %v4486
      %4504 = vmatprep.subr.bf16.mxu0 0
      %4505 = vmatpush1.bf16.msra.mxu0 %v4488
      %4506 = vmatprep.subr.bf16.mxu0 0
      %4507 = vmatpush1.bf16.msra.mxu0 %v4489
      %4508 = vmatprep.subr.bf16.mxu0 0
      %4509 = vmatpush1.bf16.msra.mxu0 %v4490
      %4510 = vmatprep.subr.bf16.mxu0 0
      %4511 = vmatpush1.bf16.msra.mxu0 %v4491
      %4512 = vmatprep.subr.bf16.mxu0 0
      %4513 = vmatpush1.bf16.msra.mxu0 %v4492
      %4514 = vmatprep.subr.bf16.mxu0 0
      %4515 = vmatpush1.bf16.msra.mxu0 %v4493
      %4516 = vmatprep.subr.bf16.mxu0 0
      %4517 = vmatpush1.bf16.msra.mxu0 %v4494
      %4518 = vmatprep.subr.bf16.mxu0 0
      %4519 = vmatpush1.bf16.msra.mxu0 %v4495
      %4520 = vmatprep.subr.bf16.mxu0 0
      %4521 = vmatpush1.bf16.msra.mxu0 0
      %4522 = vmatprep.subr.bf16.mxu0 0
      %4523 = vmatpush1.bf16.msra.mxu0 0
      %4524 = vmatprep.subr.bf16.mxu0 0
      %4525 = vmatpush1.bf16.msra.mxu0 0
      %4526 = vmatprep.subr.bf16.mxu0 0
      %4527 = vmatpush1.bf16.msra.mxu0 0
      %4528 = vmatprep.subr.bf16.mxu0 0
      %4529 = vmatpush1.bf16.msra.mxu0 0
      %4530 = vmatprep.subr.bf16.mxu0 0
      %4531 = vmatpush1.bf16.msra.mxu0 0
      %4532 = vmatprep.subr.bf16.mxu0 0
      %4533 = vmatpush1.bf16.msra.mxu0 0
      %4534 = vmatprep.subr.bf16.mxu0 0
      %4535 = vmatpush1.bf16.msra.mxu0 0
      %4536 = vmatprep.mubr.bf16.mxu0 0
      %4537 = vmatmul.mubr.bf16.gmra.mrb[0].mxu0 %v4401
      %v4538 = vpop.f32.mrb[0].mxu0
      %v4539 = vadd.f32 %v4454, %v4538
      %v4540 = vpop.f32.mrb[0].mxu0
      %v4541 = vpop.f32.mrb[0].mxu0
      %v4542 = vadd.f32 %v4454, %v4541
      %v4543 = vpop.f32.mrb[0].mxu0
      %4544 = vmatprep.mubr.bf16.mxu0 0
      %4545 = vmatmul.mubr.bf16.gmra.mrb[0].mxu0 %v4402
      %v4546 = vpop.f32.mrb[0].mxu0
      %v4547 = vadd.f32 %v4454, %v4546
      %v4548 = vpop.f32.mrb[0].mxu0
      %v4549 = vpop.f32.mrb[0].mxu0
      %v4550 = vadd.f32 %v4454, %v4549
      %v4551 = vpop.f32.mrb[0].mxu0
      %4552 = vmatprep.mubr.bf16.mxu0 0
      %4553 = vmatmul.mubr.bf16.gmra.mrb[0].mxu0 %v4403
      %v4554 = vpop.f32.mrb[0].mxu0
      %v4555 = vadd.f32 %v4454, %v4554
      %v4556 = vpop.f32.mrb[0].mxu0
      %v4557 = vpop.f32.mrb[0].mxu0
      %v4558 = vadd.f32 %v4454, %v4557
      %v4559 = vpop.f32.mrb[0].mxu0
      %4560 = vmatprep.mubr.bf16.mxu0 0
      %4561 = vmatmul.mubr.bf16.gmra.mrb[0].mxu0 %v4404
      %v4562 = vpop.f32.mrb[0].mxu0
      %v4563 = vadd.f32 %v4454, %v4562
      %v4564 = vpop.f32.mrb[0].mxu0
      %v4565 = vpop.f32.mrb[0].mxu0
      %v4566 = vadd.f32 %v4454, %v4565
      %v4567 = vpop.f32.mrb[0].mxu0
      %4568 = vmatprep.mubr.bf16.mxu0 0
      %4569 = vmatmul.mubr.bf16.gmra.mrb[0].mxu0 %v4405
      %v4570 = vpop.f32.mrb[0].mxu0
      %v4571 = vadd.f32 %v4454, %v4570
      %v4572 = vpop.f32.mrb[0].mxu0
      %v4573 = vpop.f32.mrb[0].mxu0
      %v4574 = vadd.f32 %v4454, %v4573
      %v4575 = vpop.f32.mrb[0].mxu0
      %4576 = vmatprep.mubr.bf16.mxu0 0
      %4577 = vmatmul.mubr.bf16.gmra.mrb[0].mxu0 %v4406
      %v4578 = vpop.f32.mrb[0].mxu0
      %v4579 = vadd.f32 %v4454, %v4578
      %v4580 = vpop.f32.mrb[0].mxu0
      %v4581 = vpop.f32.mrb[0].mxu0
      %v4582 = vadd.f32 %v4454, %v4581
      %v4583 = vpop.f32.mrb[0].mxu0
      %4584 = vmatprep.mubr.bf16.mxu0 0
      %4585 = vmatmul.mubr.bf16.gmra.mrb[0].mxu0 %v4407
      %v4586 = vpop.f32.mrb[0].mxu0
      %v4587 = vadd.f32 %v4454, %v4586
      %v4588 = vpop.f32.mrb[0].mxu0
      %v4589 = vpop.f32.mrb[0].mxu0
      %v4590 = vadd.f32 %v4454, %v4589
      %v4591 = vpop.f32.mrb[0].mxu0
      %4592 = vmatprep.mubr.bf16.mxu0 0
      %4593 = vmatmul.mubr.bf16.gmra.mrb[0].mxu0 %v4408
      %v4594 = vpop.f32.mrb[0].mxu0
      %v4595 = vadd.f32 %v4454, %v4594
      %v4596 = vpop.f32.mrb[0].mxu0
      %v4597 = vpop.f32.mrb[0].mxu0
      %v4598 = vadd.f32 %v4454, %v4597
      %v4599 = vpop.f32.mrb[0].mxu0
      %4600 = vmatprep.mubr.bf16.mxu0 0
      %4601 = vmatmul.mubr.bf16.gmra.mrb[0].mxu0 %v4409
      %v4602 = vpop.f32.mrb[0].mxu0
      %v4603 = vadd.f32 %v4454, %v4602
      %v4604 = vpop.f32.mrb[0].mxu0
      %v4605 = vpop.f32.mrb[0].mxu0
      %v4606 = vadd.f32 %v4454, %v4605
      %v4607 = vpop.f32.mrb[0].mxu0
      %4608 = vmatprep.mubr.bf16.mxu0 0
      %4609 = vmatmul.mubr.bf16.gmra.mrb[0].mxu0 %v4410
      %v4610 = vpop.f32.mrb[0].mxu0
      %v4611 = vadd.f32 %v4454, %v4610
      %v4612 = vpop.f32.mrb[0].mxu0
      %v4613 = vpop.f32.mrb[0].mxu0
      %v4614 = vadd.f32 %v4454, %v4613
      %v4615 = vpop.f32.mrb[0].mxu0
      %4616 = vmatprep.mubr.bf16.mxu0 0
      %4617 = vmatmul.mubr.bf16.gmra.mrb[0].mxu0 %v4411
      %v4618 = vpop.f32.mrb[0].mxu0
      %v4619 = vadd.f32 %v4454, %v4618
      %v4620 = vpop.f32.mrb[0].mxu0
      %v4621 = vpop.f32.mrb[0].mxu0
      %v4622 = vadd.f32 %v4454, %v4621
      %v4623 = vpop.f32.mrb[0].mxu0
      %4624 = vmatprep.mubr.bf16.mxu0 0
      %4625 = vmatmul.mubr.bf16.gmra.mrb[0].mxu0 %v4412
      %v4626 = vpop.f32.mrb[0].mxu0
      %v4627 = vadd.f32 %v4454, %v4626
      %v4628 = vpop.f32.mrb[0].mxu0
      %v4629 = vpop.f32.mrb[0].mxu0
      %v4630 = vadd.f32 %v4454, %v4629
      %v4631 = vpop.f32.mrb[0].mxu0
      %4632 = vmatprep.mubr.bf16.mxu0 0
      %4633 = vmatmul.mubr.bf16.gmra.mrb[0].mxu0 %v4413
      %v4634 = vpop.f32.mrb[0].mxu0
      %v4635 = vadd.f32 %v4454, %v4634
      %v4636 = vpop.f32.mrb[0].mxu0
      %v4637 = vpop.f32.mrb[0].mxu0
      %v4638 = vadd.f32 %v4454, %v4637
      %v4639 = vpop.f32.mrb[0].mxu0
      %4640 = vmatprep.mubr.bf16.mxu0 0
      %4641 = vmatmul.mubr.bf16.gmra.mrb[0].mxu0 %v4414
      %v4642 = vpop.f32.mrb[0].mxu0
      %v4643 = vadd.f32 %v4454, %v4642
      %v4644 = vpop.f32.mrb[0].mxu0
      %v4645 = vpop.f32.mrb[0].mxu0
      %v4646 = vadd.f32 %v4454, %v4645
      %v4647 = vpop.f32.mrb[0].mxu0
      %4648 = vmatprep.mubr.bf16.mxu0 0
      %4649 = vmatmul.mubr.bf16.gmra.mrb[0].mxu0 %v4415
      %v4650 = vpop.f32.mrb[0].mxu0
      %v4651 = vadd.f32 %v4454, %v4650
      %v4652 = vpop.f32.mrb[0].mxu0
      %v4653 = vpop.f32.mrb[0].mxu0
      %v4654 = vadd.f32 %v4454, %v4653
      %v4655 = vpop.f32.mrb[0].mxu0
      %4656 = vmatprep.mubr.bf16.mxu0 0
      %4657 = vmatmul.mubr.bf16.gmra.mrb[0].mxu0 %v4416
      %v4658 = vpop.f32.mrb[0].mxu0
      %v4659 = vadd.f32 %v4454, %v4658
      %v4660 = vpop.f32.mrb[0].mxu0
      %v4661 = vpop.f32.mrb[0].mxu0
      %v4662 = vadd.f32 %v4454, %v4661
      %v4663 = vpop.f32.mrb[0].mxu0
      %4664 = vmatprep.mubr.bf16.mxu0 0
      %4665 = vmatmul.mubr.bf16.gmra.mrb[0].mxu0 %v4417
      %v4666 = vpop.f32.mrb[0].mxu0
      %v4667 = vadd.f32 %v4454, %v4666
      %v4668 = vpop.f32.mrb[0].mxu0
      %v4669 = vpop.f32.mrb[0].mxu0
      %v4670 = vadd.f32 %v4454, %v4669
      %v4671 = vpop.f32.mrb[0].mxu0
      %4672 = vmatprep.mubr.bf16.mxu0 0
      %4673 = vmatmul.mubr.bf16.gmra.mrb[0].mxu0 %v4418
      %v4674 = vpop.f32.mrb[0].mxu0
      %v4675 = vadd.f32 %v4454, %v4674
      %v4676 = vpop.f32.mrb[0].mxu0
      %v4677 = vpop.f32.mrb[0].mxu0
      %v4678 = vadd.f32 %v4454, %v4677
      %v4679 = vpop.f32.mrb[0].mxu0
      %4680 = vmatprep.mubr.bf16.mxu0 0
      %4681 = vmatmul.mubr.bf16.gmra.mrb[0].mxu0 %v4419
      %v4682 = vpop.f32.mrb[0].mxu0
      %v4683 = vadd.f32 %v4454, %v4682
      %v4684 = vpop.f32.mrb[0].mxu0
      %v4685 = vpop.f32.mrb[0].mxu0
      %v4686 = vadd.f32 %v4454, %v4685
      %v4687 = vpop.f32.mrb[0].mxu0
      %4688 = vmatprep.mubr.bf16.mxu0 0
      %4689 = vmatmul.mubr.bf16.gmra.mrb[0].mxu0 %v4420
      %v4690 = vpop.f32.mrb[0].mxu0
      %v4691 = vadd.f32 %v4454, %v4690
      %v4692 = vpop.f32.mrb[0].mxu0
      %v4693 = vpop.f32.mrb[0].mxu0
      %v4694 = vadd.f32 %v4454, %v4693
      %v4695 = vpop.f32.mrb[0].mxu0
      %4696 = vmatprep.mubr.bf16.mxu0 0
      %4697 = vmatmul.mubr.bf16.gmra.mrb[0].mxu0 %v4421
      %v4698 = vpop.f32.mrb[0].mxu0
      %v4699 = vadd.f32 %v4454, %v4698
      %v4700 = vpop.f32.mrb[0].mxu0
      %v4701 = vpop.f32.mrb[0].mxu0
      %v4702 = vadd.f32 %v4454, %v4701
      %v4703 = vpop.f32.mrb[0].mxu0
      %4704 = vmatprep.mubr.bf16.mxu0 0
      %4705 = vmatmul.mubr.bf16.gmra.mrb[0].mxu0 %v4422
      %v4706 = vpop.f32.mrb[0].mxu0
      %v4707 = vadd.f32 %v4454, %v4706
      %v4708 = vpop.f32.mrb[0].mxu0
      %v4709 = vpop.f32.mrb[0].mxu0
      %v4710 = vadd.f32 %v4454, %v4709
      %v4711 = vpop.f32.mrb[0].mxu0
      %4712 = vmatprep.mubr.bf16.mxu0 0
      %4713 = vmatmul.mubr.bf16.gmra.mrb[0].mxu0 %v4423
      %v4714 = vpop.f32.mrb[0].mxu0
      %v4715 = vadd.f32 %v4454, %v4714
      %v4716 = vpop.f32.mrb[0].mxu0
      %v4717 = vpop.f32.mrb[0].mxu0
      %v4718 = vadd.f32 %v4454, %v4717
      %v4719 = vpop.f32.mrb[0].mxu0
      %4720 = vmatprep.mubr.bf16.mxu0 0
      %4721 = vmatmul.mubr.bf16.gmra.mrb[0].mxu0 %v4424
      %v4722 = vpop.f32.mrb[0].mxu0
      %v4723 = vadd.f32 %v4454, %v4722
      %v4724 = vpop.f32.mrb[0].mxu0
      %v4725 = vpop.f32.mrb[0].mxu0
      %v4726 = vadd.f32 %v4454, %v4725
      %v4727 = vpop.f32.mrb[0].mxu0
      %4728 = vmatprep.mubr.bf16.mxu0 0
      %4729 = vmatmul.mubr.bf16.gmra.mrb[0].mxu0 %v4425
      %v4730 = vpop.f32.mrb[0].mxu0
      %v4731 = vadd.f32 %v4454, %v4730
      %v4732 = vpop.f32.mrb[0].mxu0
      %v4733 = vpop.f32.mrb[0].mxu0
      %v4734 = vadd.f32 %v4454, %v4733
      %v4735 = vpop.f32.mrb[0].mxu0
      %4736 = vmatprep.mubr.bf16.mxu0 0
      %4737 = vmatmul.mubr.bf16.gmra.mrb[0].mxu0 %v4426
      %v4738 = vpop.f32.mrb[0].mxu0
      %v4739 = vadd.f32 %v4454, %v4738
      %v4740 = vpop.f32.mrb[0].mxu0
      %v4741 = vpop.f32.mrb[0].mxu0
      %v4742 = vadd.f32 %v4454, %v4741
      %v4743 = vpop.f32.mrb[0].mxu0
      %4744 = vmatprep.mubr.bf16.mxu0 0
      %4745 = vmatmul.mubr.bf16.gmra.mrb[0].mxu0 %v4427
      %v4746 = vpop.f32.mrb[0].mxu0
      %v4747 = vadd.f32 %v4454, %v4746
      %v4748 = vpop.f32.mrb[0].mxu0
      %v4749 = vpop.f32.mrb[0].mxu0
      %v4750 = vadd.f32 %v4454, %v4749
      %v4751 = vpop.f32.mrb[0].mxu0
      %4752 = vmatprep.mubr.bf16.mxu0 0
      %4753 = vmatmul.mubr.bf16.gmra.mrb[0].mxu0 %v4428
      %v4754 = vpop.f32.mrb[0].mxu0
      %v4755 = vadd.f32 %v4454, %v4754
      %v4756 = vpop.f32.mrb[0].mxu0
      %v4757 = vpop.f32.mrb[0].mxu0
      %v4758 = vadd.f32 %v4454, %v4757
      %v4759 = vpop.f32.mrb[0].mxu0
      %4760 = vmatprep.mubr.bf16.mxu0 0
      %4761 = vmatmul.mubr.bf16.gmra.mrb[0].mxu0 %v4429
      %v4762 = vpop.f32.mrb[0].mxu0
      %v4763 = vadd.f32 %v4454, %v4762
      %v4764 = vpop.f32.mrb[0].mxu0
      %v4765 = vpop.f32.mrb[0].mxu0
      %v4766 = vadd.f32 %v4454, %v4765
      %v4767 = vpop.f32.mrb[0].mxu0
      %4768 = vmatprep.mubr.bf16.mxu0 0
      %4769 = vmatmul.mubr.bf16.gmra.mrb[0].mxu0 %v4430
      %v4770 = vpop.f32.mrb[0].mxu0
      %v4771 = vadd.f32 %v4454, %v4770
      %v4772 = vpop.f32.mrb[0].mxu0
      %v4773 = vpop.f32.mrb[0].mxu0
      %v4774 = vadd.f32 %v4454, %v4773
      %v4775 = vpop.f32.mrb[0].mxu0
      %4776 = vmatprep.mubr.bf16.mxu0 0
      %4777 = vmatmul.mubr.bf16.gmra.mrb[0].mxu0 %v4431
      %v4778 = vpop.f32.mrb[0].mxu0
      %v4779 = vadd.f32 %v4454, %v4778
      %v4780 = vpop.f32.mrb[0].mxu0
      %v4781 = vpop.f32.mrb[0].mxu0
      %v4782 = vadd.f32 %v4454, %v4781
      %v4783 = vpop.f32.mrb[0].mxu0
      %4784 = vmatprep.mubr.bf16.mxu0 0
      %4785 = vmatmul.mubr.bf16.gmra.mrb[0].mxu0 %v4432
      %v4786 = vpop.f32.mrb[0].mxu0
      %v4787 = vadd.f32 %v4454, %v4786
      %v4788 = vpop.f32.mrb[0].mxu0
      %v4789 = vpop.f32.mrb[0].mxu0
      %v4790 = vadd.f32 %v4454, %v4789
      %v4791 = vpop.f32.mrb[0].mxu0
      %4792 = vdwg.mxu0
      %4793 = vst.msk [vmem:[%s379] sm:$0xff] %vm3949, %v4539
      %4794 = vst.msk [vmem:[%s379 + $0x8] sm:$0xff] %vm3949, %v4542
      %4795 = vst.msk [vmem:[%s379 + $0x10] sm:$0xff] %vm3949, %v4547
      %4796 = vst.msk [vmem:[%s379 + $0x18] sm:$0xff] %vm3949, %v4550
      %4797 = vst.msk [vmem:[%s379 + $0x20] sm:$0xff] %vm3949, %v4555
      %4798 = vst.msk [vmem:[%s379 + $0x28] sm:$0xff] %vm3949, %v4558
      %4799 = vst.msk [vmem:[%s379 + $0x30] sm:$0xff] %vm3949, %v4563
      %4800 = vst.msk [vmem:[%s379 + $0x38] sm:$0xff] %vm3949, %v4566
      %4801 = vst.msk [vmem:[%s379 + $0x40] sm:$0xff] %vm3949, %v4571
      %4802 = vst.msk [vmem:[%s379 + $0x48] sm:$0xff] %vm3949, %v4574
      %4803 = vst.msk [vmem:[%s379 + $0x50] sm:$0xff] %vm3949, %v4579
      %4804 = vst.msk [vmem:[%s379 + $0x58] sm:$0xff] %vm3949, %v4582
      %4805 = vst.msk [vmem:[%s379 + $0x60] sm:$0xff] %vm3949, %v4587
      %4806 = vst.msk [vmem:[%s379 + $0x68] sm:$0xff] %vm3949, %v4590
      %4807 = vst.msk [vmem:[%s379 + $0x70] sm:$0xff] %vm3949, %v4595
      %4808 = vst.msk [vmem:[%s379 + $0x78] sm:$0xff] %vm3949, %v4598
      %4809 = vst.msk [vmem:[%s379 + $0x80] sm:$0xff] %vm3949, %v4603
      %4810 = vst.msk [vmem:[%s379 + $0x88] sm:$0xff] %vm3949, %v4606
      %4811 = vst.msk [vmem:[%s379 + $0x90] sm:$0xff] %vm3949, %v4611
      %4812 = vst.msk [vmem:[%s379 + $0x98] sm:$0xff] %vm3949, %v4614
      %4813 = vst.msk [vmem:[%s379 + $0xa0] sm:$0xff] %vm3949, %v4619
      %4814 = vst.msk [vmem:[%s379 + $0xa8] sm:$0xff] %vm3949, %v4622
      %4815 = vst.msk [vmem:[%s379 + $0xb0] sm:$0xff] %vm3949, %v4627
      %4816 = vst.msk [vmem:[%s379 + $0xb8] sm:$0xff] %vm3949, %v4630
      %4817 = vst.msk [vmem:[%s379 + $0xc0] sm:$0xff] %vm3949, %v4635
      %4818 = vst.msk [vmem:[%s379 + $0xc8] sm:$0xff] %vm3949, %v4638
      %4819 = vst.msk [vmem:[%s379 + $0xd0] sm:$0xff] %vm3949, %v4643
      %4820 = vst.msk [vmem:[%s379 + $0xd8] sm:$0xff] %vm3949, %v4646
      %4821 = vst.msk [vmem:[%s379 + $0xe0] sm:$0xff] %vm3949, %v4651
      %4822 = vst.msk [vmem:[%s379 + $0xe8] sm:$0xff] %vm3949, %v4654
      %4823 = vst.msk [vmem:[%s379 + $0xf0] sm:$0xff] %vm3949, %v4659
      %4824 = vst.msk [vmem:[%s379 + $0xf8] sm:$0xff] %vm3949, %v4662
      %4825 = vst.msk [vmem:[%s379 + $0x100] sm:$0xff] %vm3949, %v4667
      %4826 = vst.msk [vmem:[%s379 + $0x108] sm:$0xff] %vm3949, %v4670
      %4827 = vst.msk [vmem:[%s379 + $0x110] sm:$0xff] %vm3949, %v4675
      %4828 = vst.msk [vmem:[%s379 + $0x118] sm:$0xff] %vm3949, %v4678
      %4829 = vst.msk [vmem:[%s379 + $0x120] sm:$0xff] %vm3949, %v4683
      %4830 = vst.msk [vmem:[%s379 + $0x128] sm:$0xff] %vm3949, %v4686
      %4831 = vst.msk [vmem:[%s379 + $0x130] sm:$0xff] %vm3949, %v4691
      %4832 = vst.msk [vmem:[%s379 + $0x138] sm:$0xff] %vm3949, %v4694
      %4833 = vst.msk [vmem:[%s379 + $0x140] sm:$0xff] %vm3949, %v4699
      %4834 = vst.msk [vmem:[%s379 + $0x148] sm:$0xff] %vm3949, %v4702
      %4835 = vst.msk [vmem:[%s379 + $0x150] sm:$0xff] %vm3949, %v4707
      %4836 = vst.msk [vmem:[%s379 + $0x158] sm:$0xff] %vm3949, %v4710
      %4837 = vst.msk [vmem:[%s379 + $0x160] sm:$0xff] %vm3949, %v4715
      %4838 = vst.msk [vmem:[%s379 + $0x168] sm:$0xff] %vm3949, %v4718
      %4839 = vst.msk [vmem:[%s379 + $0x170] sm:$0xff] %vm3949, %v4723
      %4840 = vst.msk [vmem:[%s379 + $0x178] sm:$0xff] %vm3949, %v4726
      %4841 = vst.msk [vmem:[%s379 + $0x180] sm:$0xff] %vm3949, %v4731
      %4842 = vst.msk [vmem:[%s379 + $0x188] sm:$0xff] %vm3949, %v4734
      %4843 = vst.msk [vmem:[%s379 + $0x190] sm:$0xff] %vm3949, %v4739
      %4844 = vst.msk [vmem:[%s379 + $0x198] sm:$0xff] %vm3949, %v4742
      %4845 = vst.msk [vmem:[%s379 + $0x1a0] sm:$0xff] %vm3949, %v4747
      %4846 = vst.msk [vmem:[%s379 + $0x1a8] sm:$0xff] %vm3949, %v4750
      %4847 = vst.msk [vmem:[%s379 + $0x1b0] sm:$0xff] %vm3949, %v4755
      %4848 = vst.msk [vmem:[%s379 + $0x1b8] sm:$0xff] %vm3949, %v4758
      %4849 = vst.msk [vmem:[%s379 + $0x1c0] sm:$0xff] %vm3949, %v4763
      %4850 = vst.msk [vmem:[%s379 + $0x1c8] sm:$0xff] %vm3949, %v4766
      %4851 = vst.msk [vmem:[%s379 + $0x1d0] sm:$0xff] %vm3949, %v4771
      %4852 = vst.msk [vmem:[%s379 + $0x1d8] sm:$0xff] %vm3949, %v4774
      %4853 = vst.msk [vmem:[%s379 + $0x1e0] sm:$0xff] %vm3949, %v4779
      %4854 = vst.msk [vmem:[%s379 + $0x1e8] sm:$0xff] %vm3949, %v4782
      %4855 = vst.msk [vmem:[%s379 + $0x1f0] sm:$0xff] %vm3949, %v4787
      %4856 = vst.msk [vmem:[%s379 + $0x1f8] sm:$0xff] %vm3949, %v4790
      %p4857 = scmp.lt.s32.totalorder %s21, 1
      %s4858 = scalar_select %p4857, %s21, 1
      %s4859 = smul.addr %s4858, 64
      %s4860 = smul.addr %s4859, 8
      %s4861 = scalar_lea.vmem %s10, %s4860
      // Predicated region
      $region61: #{tpu_custom_call.1} parent=59 // pred_check
        %p4862 = pneg %p259
      $region62: #{tpu_custom_call.1} parent=59 // pred_check_branch
        %4864 = sbr.rel (%p4862) target = $region64
      $region63: #{tpu_custom_call.1} parent=59 // pred_region
        _
      $region64: #{tpu_custom_call.1} parent=59 // pred_fallthru
        _
    $region60: #{tpu_custom_call.1} parent=5 // pred_fallthru
      _
    %p4865 = scmp.le.s32.totalorder 2, %s16
    // Predicated region
    $region65: #{tpu_custom_call.1} parent=5 // pred_check
      %p4866 = pneg %p4865
    $region66: #{tpu_custom_call.1} parent=5 // pred_check_branch
      %4868 = sbr.rel (%p4866) target = $region68
    $region67: #{tpu_custom_call.1} parent=5 // pred_region
      %s4869 = ssub.s32 %s16, 2
      // Predicated region
      $region69: #{tpu_custom_call.1} parent=67 // pred_check
        %p4870 = pneg %p265
      $region70: #{tpu_custom_call.1} parent=67 // pred_check_branch
        %4872 = sbr.rel (%p4870) target = $region72
      $region71: #{tpu_custom_call.1} parent=67 // pred_region
        %p4873 = scmp.lt.s32.totalorder %s22, 1
        %s4874 = scalar_select %p4873, %s22, 1
        %s4875 = smul.addr %s4874, 64
        %s4876 = smul.addr %s4875, 8
        %s4877 = scalar_lea.vmem %s10, %s4876
      $region72: #{tpu_custom_call.1} parent=67 // pred_fallthru
        _
    $region68: #{tpu_custom_call.1} parent=5 // pred_fallthru
      _
  $region6: #{tpu_custom_call.1} parent=0 // loop_footer
    %s20 = sadd.s32 1, %s16
  $region7: #{tpu_custom_call.1} parent=0 // loop_footer_branch
    %15 = sbr.rel target = $region3
  $region8: #{tpu_custom_call.1} parent=0 // loop_exit
    _

</llo_original>
